<compile_context>
chip_gen: v5e
topology: v5e:2x2
jax: 0.10.0
libtpu: 0.0.40
codegen_flags: <defaults>
</compile_context>

<pallas_src>
import functools

import jax
import jax.numpy as jnp
from jax.experimental import pallas as pl
from jax.experimental.pallas import tpu as pltpu


# --------------------------------------------------------------------------- #
# Fused VAE forward kernel: one grid step = B_TILE batch elements
# --------------------------------------------------------------------------- #
def _vae_kernel(*refs, R, WL, training):
    """R = B_TILE*(H+2) stacked rows; WL = W*latent; K = lane width."""
    if training:
        (x_ref, eps_ref, mask_ref, w_ref, b_ref,
         ml_ref, recon_ref, pad_ref) = refs
    else:
        (x_ref, mask_ref, w_ref, b_ref,
         ml_ref, recon_ref, pad_ref) = refs
        eps_ref = None

    K = pad_ref.shape[1]
    mask = mask_ref[...]                       # (R, 1): 1.0 real row, 0.0 pad row

    # Boundary rows of the tall padded scratch are never overwritten -> zero
    # them every step (each core has its own scratch under megacore sharding).
    pad_ref[0:1, :] = jnp.zeros((1, K), jnp.float32)
    pad_ref[R + 1:R + 2, :] = jnp.zeros((1, K), jnp.float32)

    def conv3x3(act, idx, relu):
        """Same-padded 3x3 conv of the whole image stack as 3 banded matmuls.

        act: (R, K) f32.  w_ref[idx]: (3, K, K) bf16 band; b_ref[idx]: (1, K) f32.
        Per-image padding rows of `act` are zeroed (via `mask`) before landing
        in the scratch so they act as height zero-padding; output rows at those
        positions are garbage and are masked / discarded downstream.
        """
        pad_ref[1:R + 1, :] = act * mask
        acc = jnp.dot(pad_ref[0:R, :].astype(jnp.bfloat16), w_ref[idx, 0],
                      preferred_element_type=jnp.float32) + b_ref[idx]
        acc = acc + jnp.dot(pad_ref[1:R + 1, :].astype(jnp.bfloat16), w_ref[idx, 1],
                            preferred_element_type=jnp.float32)
        acc = acc + jnp.dot(pad_ref[2:R + 2, :].astype(jnp.bfloat16), w_ref[idx, 2],
                            preferred_element_type=jnp.float32)
        if relu:
            acc = jnp.maximum(acc, 0.0)
        return acc

    # ---- encoder ----
    x = x_ref[0]
    h = conv3x3(x, 0, True)
    h = h + conv3x3(h, 1, True)                # residual: h = h + relu(conv(h))
    # Fused head: lanes [0, WL) = mean, [WL, 2*WL) = logvar; pad rows zeroed.
    ml = conv3x3(h, 2, False) * mask
    ml_ref[0] = ml                             # one unmasked 128-lane store

    # ---- reparameterization (exp on the EUP; no lane extraction needed) ----
    lane = jax.lax.broadcasted_iota(jnp.int32, (R, K), 1)
    is_mean = lane < WL
    mean_only = jnp.where(is_mean, ml, 0.0)
    if training:
        # std = exp(0.5*logvar) in the logvar lanes, 1 elsewhere; eps is
        # host-packed into the logvar lanes (zero elsewhere), so
        # z = [mean | eps*std] and dec conv1's row-duplicated band computes
        # band @ (mean + eps*std) in a single MXU pass.
        std = jnp.exp(0.5 * jnp.where(is_mean, 0.0, ml))
        z = mean_only + eps_ref[0] * std
    else:
        z = mean_only

    # ---- decoder ----
    d = conv3x3(z, 3, True)
    d = d + conv3x3(d, 4, True)                # residual block
    recon_ref[0] = conv3x3(d, 5, False)        # lanes [0, W*Cin) hold recon


# --------------------------------------------------------------------------- #
# Host-side weight / layout preparation (tiny, runs under jit once per call)
# --------------------------------------------------------------------------- #
def _conv_band(w_oihw, W):
    """(Cout, Cin, 3, 3) conv weight -> (3, W*Cin, W*Cout) banded matmul weight.

    band[dy, wi*Cin+ci, wo*Cout+co] = w[co, ci, dy, wi-wo+1] if 0 <= wi-wo+1 < 3
    else 0, so that  out[r] = sum_dy padded_rows[r+dy] @ band[dy]  implements a
    same-padded 3x3 conv on the lane-dense (rows, W*C) layout.
    """
    Cout, Cin, KH, KW = w_oihw.shape
    wk = jnp.transpose(w_oihw, (2, 3, 1, 0))                 # (dy, dx, Cin, Cout)
    wi = jnp.arange(W)[:, None]
    wo = jnp.arange(W)[None, :]
    dx = wi - wo + 1
    valid = (dx >= 0) & (dx < KW)
    band = wk[:, jnp.clip(dx, 0, KW - 1)]                    # (dy, wi, wo, Cin, Cout)
    band = band * valid[None, :, :, None, None].astype(band.dtype)
    band = jnp.transpose(band, (0, 1, 3, 2, 4))              # (dy, wi, Cin, wo, Cout)
    return band.reshape(KH, W * Cin, W * Cout)


def _bias_row(b, W):
    """(Cout,) -> (1, W*Cout) with bias_row[0, wo*Cout+co] = b[co]."""
    return jnp.tile(b, W).reshape(1, W * b.shape[0]).astype(jnp.float32)


def _pad_band(band, K):
    return jnp.pad(band, ((0, 0), (0, K - band.shape[1]), (0, K - band.shape[2])))


def _pad_bias(bias, K):
    return jnp.pad(bias, ((0, 0), (0, K - bias.shape[1])))


def _to_tall(t_nhc, b_tile, K):
    """(N, H, C) -> (N//b_tile, b_tile*(H+2), K) with zero pad rows / lanes."""
    N, H, C = t_nhc.shape
    t = jnp.pad(t_nhc, ((0, 0), (1, 1), (0, K - C)))
    return t.reshape(N // b_tile, b_tile * (H + 2), K)


def _from_tall(t_tall, N, H, C):
    """Inverse of _to_tall: drop pad rows / lanes -> (N, H, C)."""
    G, R, K = t_tall.shape
    return t_tall.reshape(N, H + 2, K)[:, 1:H + 1, :C]


def _pick_b_tile(N, H):
    """Batch-fold so each conv matmul has M ~ B_TILE*(H+2) rows (fills an MXU
    pass), while keeping >= 2 grid steps when N > 1 so both v7x TensorCores
    get work under dimension_semantics=("parallel",)."""
    divs = [d for d in range(1, N + 1) if N % d == 0]
    fits = [d for d in divs if d * (H + 2) <= 256] or [1]
    bt = max(fits)
    if N > 1 and N // bt < 2:
        two_steps = [d for d in fits if N // d >= 2]
        if two_steps:
            bt = max(two_steps)
    return bt


# --------------------------------------------------------------------------- #
# Model: parameters + forward
# --------------------------------------------------------------------------- #
def init_params(key, cin=4, hidden=8, latent=4):
    ks = jax.random.split(key, 12)

    def conv_w(k, cout, cin_):
        fan_in = cin_ * 9
        return jax.random.normal(k, (cout, cin_, 3, 3), jnp.float32) / jnp.sqrt(fan_in)

    def conv_b(k, cout):
        return jax.random.normal(k, (cout,), jnp.float32) * 0.01

    return {
        "enc_w1": conv_w(ks[0], hidden, cin), "enc_b1": conv_b(ks[1], hidden),
        "enc_w2": conv_w(ks[2], hidden, hidden), "enc_b2": conv_b(ks[3], hidden),
        "enc_w3": conv_w(ks[4], 2 * latent, hidden), "enc_b3": conv_b(ks[5], 2 * latent),
        "dec_w1": conv_w(ks[6], hidden, latent), "dec_b1": conv_b(ks[7], hidden),
        "dec_w2": conv_w(ks[8], hidden, hidden), "dec_b2": conv_b(ks[9], hidden),
        "dec_w3": conv_w(ks[10], cin, hidden), "dec_b3": conv_b(ks[11], cin),
    }


def vae_forward(params, x_nchw, *, training, eps_key=None, b_tile=None):
    """Mirrors VariationalAutoEncoder.forward -> (recon, x_mean, x_variance),
    all NCHW (x_variance is the log-variance, as in the reference usage)."""
    N, Cin, H, W = x_nchw.shape
    hidden = params["enc_w1"].shape[0]
    latent = params["dec_w1"].shape[1]
    WL = W * latent
    K = W * max(Cin, hidden, 2 * latent)       # uniform lane width (128 here)

    if b_tile is None:
        b_tile = _pick_b_tile(N, H)
    assert N % b_tile == 0, (N, b_tile)
    G = N // b_tile
    R = b_tile * (H + 2)

    # NCHW -> lane-dense (N, H, W*Cin) -> tall stacked layout (G, R, K).
    x2d = jnp.transpose(x_nchw, (0, 2, 3, 1)).reshape(N, H, W * Cin)
    x_tall = _to_tall(x2d, b_tile, K)

    # Row mask: 1.0 on real image rows, 0.0 on per-image padding rows.
    r = jnp.arange(R) % (H + 2)
    row_mask = ((r != 0) & (r != H + 1)).astype(jnp.float32).reshape(R, 1)

    # --- banded matmul weights, padded to a uniform (3, K, K) bf16 slab ---
    w3, b3 = params["enc_w3"], params["enc_b3"]
    head_band = jnp.concatenate(
        [_conv_band(w3[:latent], W), _conv_band(w3[latent:], W)], axis=2)
    head_bias = jnp.concatenate(
        [_bias_row(b3[:latent], W), _bias_row(b3[latent:], W)], axis=1)
    d1_band = _conv_band(params["dec_w1"], W)
    d1_band = jnp.concatenate([d1_band, d1_band], axis=1)    # rows: mean + eps*std

    bands = [
        _conv_band(params["enc_w1"], W),
        _conv_band(params["enc_w2"], W),
        head_band,
        d1_band,
        _conv_band(params["dec_w2"], W),
        _conv_band(params["dec_w3"], W),
    ]
    biases = [
        _bias_row(params["enc_b1"], W),
        _bias_row(params["enc_b2"], W),
        head_bias,
        _bias_row(params["dec_b1"], W),
        _bias_row(params["dec_b2"], W),
        _bias_row(params["dec_b3"], W),
    ]
    w_slab = jnp.stack([_pad_band(b, K) for b in bands]).astype(jnp.bfloat16)
    b_slab = jnp.stack([_pad_bias(b, K) for b in biases])    # (6, 1, K) f32

    args = [x_tall]
    in_specs = [pl.BlockSpec((1, R, K), lambda g: (g, 0, 0))]
    if training:
        # eps = randn_like(std); torch RNG replaced by deterministic JAX RNG.
        eps2d = jax.random.normal(eps_key, (N, H, WL), jnp.float32)
        eps2d = jnp.pad(eps2d, ((0, 0), (0, 0), (WL, 0)))    # into the logvar lanes
        args.append(_to_tall(eps2d, b_tile, K))
        in_specs.append(pl.BlockSpec((1, R, K), lambda g: (g, 0, 0)))
    args += [row_mask, w_slab, b_slab]
    in_specs += [
        pl.BlockSpec((R, 1), lambda g: (0, 0)),
        pl.BlockSpec(w_slab.shape, lambda g: (0, 0, 0, 0)),   # resident weights
        pl.BlockSpec(b_slab.shape, lambda g: (0, 0, 0)),      # resident biases
    ]

    out_shapes = (jax.ShapeDtypeStruct((G, R, K), jnp.float32),
                  jax.ShapeDtypeStruct((G, R, K), jnp.float32))
    out_specs = [pl.BlockSpec((1, R, K), lambda g: (g, 0, 0)),
                 pl.BlockSpec((1, R, K), lambda g: (g, 0, 0))]

    kernel = functools.partial(_vae_kernel, R=R, WL=WL, training=training)
    ml_tall, recon_tall = pl.pallas_call(
        kernel,
        out_shape=out_shapes,
        grid_spec=pltpu.PrefetchScalarGridSpec(
            num_scalar_prefetch=0,
            grid=(G,),
            in_specs=in_specs,
            out_specs=out_specs,
            scratch_shapes=[pltpu.VMEM((R + 2, K), jnp.float32)],
        ),
        compiler_params=pltpu.CompilerParams(
            dimension_semantics=("parallel",)),
    )(*args)

    ml2d = _from_tall(ml_tall, N, H, 2 * WL)
    recon2d = _from_tall(recon_tall, N, H, W * Cin)

    def to_nchw(t, C):
        return jnp.transpose(t.reshape(N, H, W, C), (0, 3, 1, 2))

    recon = to_nchw(recon2d, Cin)
    x_mean = to_nchw(ml2d[..., :WL], latent)
    x_logvar = to_nchw(ml2d[..., WL:], latent)
    return recon, x_mean, x_logvar


# --------------------------------------------------------------------------- #
# Pure-JAX f32 reference (tolerance check for the bf16-MXU kernel)
# --------------------------------------------------------------------------- #
def _ref_forward(params, x, eps_nchw, training):
    def conv(t, w, b):
        y = jax.lax.conv_general_dilated(
            t, w, window_strides=(1, 1), padding="SAME",
            dimension_numbers=("NCHW", "OIHW", "NCHW"))
        return y + b[None, :, None, None]

    latent = params["dec_w1"].shape[1]
    h = jnp.maximum(conv(x, params["enc_w1"], params["enc_b1"]), 0.0)
    h = h + jnp.maximum(conv(h, params["enc_w2"], params["enc_b2"]), 0.0)
    ml = conv(h, params["enc_w3"], params["enc_b3"])
    mean, logvar = ml[:, :latent], ml[:, latent:]
    z = mean + eps_nchw * jnp.exp(0.5 * logvar) if training else mean
    d = jnp.maximum(conv(z, params["dec_w1"], params["dec_b1"]), 0.0)
    d = d + jnp.maximum(conv(d, params["dec_w2"], params["dec_b2"]), 0.0)
    recon = conv(d, params["dec_w3"], params["dec_b3"])
    return recon, mean, logvar


if __name__ == "__main__":
    key = jax.random.PRNGKey(0)
    pkey, xkey, ekey = jax.random.split(key, 3)

    CIN, HIDDEN, LATENT = 4, 8, 4
    N, H, W = 8, 16, 16
    params = init_params(pkey, cin=CIN, hidden=HIDDEN, latent=LATENT)
    x = jax.random.normal(xkey, (N, CIN, H, W), jnp.float32)   # NCHW like PyTorch

    # ---- training mode ----
    fwd = jax.jit(lambda p, xx, k: vae_forward(p, xx, training=True, eps_key=k))
    recon, x_mean, x_logvar = jax.block_until_ready(fwd(params, x, ekey))

    assert recon.shape == (N, CIN, H, W)
    assert x_mean.shape == (N, LATENT, H, W)
    assert x_logvar.shape == (N, LATENT, H, W)
    assert jnp.all(jnp.isfinite(recon))
    assert jnp.all(jnp.isfinite(x_mean)) and jnp.all(jnp.isfinite(x_logvar))

    # Same eps as inside the kernel wrapper (same key / shape / packing).
    eps2d = jax.random.normal(ekey, (N, H, W * LATENT), jnp.float32)
    eps_nchw = jnp.transpose(eps2d.reshape(N, H, W, LATENT), (0, 3, 1, 2))
    r_recon, r_mean, r_logvar = _ref_forward(params, x, eps_nchw, True)
    for got, ref in ((x_mean, r_mean), (x_logvar, r_logvar), (recon, r_recon)):
        assert jnp.allclose(got, ref, atol=1e-1, rtol=1e-1), \
            float(jnp.max(jnp.abs(got - ref)))

    # ---- eval mode ----
    fwd_eval = jax.jit(lambda p, xx: vae_forward(p, xx, training=False))
    recon_e, mean_e, logvar_e = jax.block_until_ready(fwd_eval(params, x))
    er_recon, er_mean, er_logvar = _ref_forward(params, x, None, False)
    assert jnp.allclose(recon_e, er_recon, atol=1e-1, rtol=1e-1)
    assert jnp.allclose(mean_e, er_mean, atol=1e-1, rtol=1e-1)

    print("KERNEL_OK")
</pallas_src>

<mosaic_0001>
module attributes {stable_mosaic.version = 11 : i64} {
  func.func @_vae_kernel(%arg0: i32, %arg1: memref<1x72x128xf32, #tpu.memory_space<vmem>>, %arg2: memref<1x72x128xf32, #tpu.memory_space<vmem>>, %arg3: memref<72x1xf32, #tpu.memory_space<vmem>>, %arg4: memref<6x3x128x128xbf16, #tpu.memory_space<vmem>>, %arg5: memref<6x1x128xf32, #tpu.memory_space<vmem>>, %arg6: memref<1x72x128xf32, #tpu.memory_space<vmem>>, %arg7: memref<1x72x128xf32, #tpu.memory_space<vmem>>, %arg8: memref<74x128xf32, #tpu.memory_space<vmem>>) attributes {dimension_semantics = [#tpu.dimension_semantics<parallel>], iteration_bounds = array<i64: 2>, scalar_prefetch = 0 : i64, scratch_operands = 1 : i64, tpu.core_type = #tpu.core_type<tc>, window_params = [{transform_indices = @transform_0, window_bounds = array<i64: 1, 72, 128>}, {transform_indices = @transform_1, window_bounds = array<i64: 1, 72, 128>}, {pipeline_mode = #tpu.pipeline_mode<synchronous>, transform_indices = @transform_2, window_bounds = array<i64: 72, 1>}, {pipeline_mode = #tpu.pipeline_mode<synchronous>, transform_indices = @transform_3, window_bounds = array<i64: 6, 3, 128, 128>}, {pipeline_mode = #tpu.pipeline_mode<synchronous>, transform_indices = @transform_4, window_bounds = array<i64: 6, 1, 128>}, {transform_indices = @transform_5, window_bounds = array<i64: 1, 72, 128>}, {transform_indices = @transform_6, window_bounds = array<i64: 1, 72, 128>}]} {
    %c0 = arith.constant 0 : index
    %c0_0 = arith.constant 0 : index
    %0 = vector.load %arg3[%c0, %c0_0] : memref<72x1xf32, #tpu.memory_space<vmem>>, vector<72x1xf32>
    %cst = arith.constant 0.000000e+00 : f32
    %1 = vector.broadcast %cst : f32 to vector<1x128xf32>
    %c0_1 = arith.constant 0 : index
    %c0_2 = arith.constant 0 : index
    %2 = vector.load %arg8[%c0_1, %c0_2] : memref<74x128xf32, #tpu.memory_space<vmem>>, vector<1x128xf32>
    tpu.vector_store %arg8[%c0_1, %c0_2], %1 {strides = array<i32>} : memref<74x128xf32, #tpu.memory_space<vmem>>, vector<1x128xf32>,
    %cst_3 = arith.constant 0.000000e+00 : f32
    %3 = vector.broadcast %cst_3 : f32 to vector<1x128xf32>
    %c73 = arith.constant 73 : index
    %c0_4 = arith.constant 0 : index
    %4 = vector.load %arg8[%c73, %c0_4] : memref<74x128xf32, #tpu.memory_space<vmem>>, vector<1x128xf32>
    tpu.vector_store %arg8[%c73, %c0_4], %3 {strides = array<i32>} : memref<74x128xf32, #tpu.memory_space<vmem>>, vector<1x128xf32>,
    %c0_5 = arith.constant 0 : index
    %c0_6 = arith.constant 0 : index
    %c0_7 = arith.constant 0 : index
    %5 = vector.load %arg1[%c0_5, %c0_6, %c0_7] : memref<1x72x128xf32, #tpu.memory_space<vmem>>, vector<1x72x128xf32>
    %6 = vector.shape_cast %5 : vector<1x72x128xf32> to vector<72x128xf32>
    %7 = vector.broadcast %0 : vector<72x1xf32> to vector<72x128xf32>
    %8 = arith.mulf %6, %7 : vector<72x128xf32>
    %c1 = arith.constant 1 : index
    %c0_8 = arith.constant 0 : index
    %9 = vector.load %arg8[%c1, %c0_8] : memref<74x128xf32, #tpu.memory_space<vmem>>, vector<72x128xf32>
    tpu.vector_store %arg8[%c1, %c0_8], %8 {strides = array<i32>} : memref<74x128xf32, #tpu.memory_space<vmem>>, vector<72x128xf32>,
    %c0_9 = arith.constant 0 : index
    %c0_10 = arith.constant 0 : index
    %10 = vector.load %arg8[%c0_9, %c0_10] : memref<74x128xf32, #tpu.memory_space<vmem>>, vector<72x128xf32>
    %11 = arith.truncf %10 : vector<72x128xf32> to vector<72x128xbf16>
    %c0_11 = arith.constant 0 : index
    %c0_12 = arith.constant 0 : index
    %c0_13 = arith.constant 0 : index
    %c0_14 = arith.constant 0 : index
    %12 = vector.load %arg4[%c0_11, %c0_12, %c0_13, %c0_14] : memref<6x3x128x128xbf16, #tpu.memory_space<vmem>>, vector<1x1x128x128xbf16>
    %13 = vector.shape_cast %12 : vector<1x1x128x128xbf16> to vector<128x128xbf16>
    %cst_15 = arith.constant dense<0.000000e+00> : vector<72x128xf32>
    %14 = tpu.matmul %11, %13, %cst_15 {dimension_numbers = #tpu.dot_dimension_numbers<[1], [0], [0], [1], [0, 0, 1, 1], [], []>} : vector<72x128xbf16>, vector<128x128xbf16>, vector<72x128xf32> -> vector<72x128xf32>
    %c0_16 = arith.constant 0 : index
    %c0_17 = arith.constant 0 : index
    %c0_18 = arith.constant 0 : index
    %15 = vector.load %arg5[%c0_16, %c0_17, %c0_18] : memref<6x1x128xf32, #tpu.memory_space<vmem>>, vector<1x1x128xf32>
    %16 = vector.shape_cast %15 : vector<1x1x128xf32> to vector<1x128xf32>
    %17 = vector.broadcast %16 : vector<1x128xf32> to vector<72x128xf32>
    %18 = arith.addf %14, %17 : vector<72x128xf32>
    %c1_19 = arith.constant 1 : index
    %c0_20 = arith.constant 0 : index
    %19 = vector.load %arg8[%c1_19, %c0_20] : memref<74x128xf32, #tpu.memory_space<vmem>>, vector<72x128xf32>
    %20 = arith.truncf %19 : vector<72x128xf32> to vector<72x128xbf16>
    %c0_21 = arith.constant 0 : index
    %c1_22 = arith.constant 1 : index
    %c0_23 = arith.constant 0 : index
    %c0_24 = arith.constant 0 : index
    %21 = vector.load %arg4[%c0_21, %c1_22, %c0_23, %c0_24] : memref<6x3x128x128xbf16, #tpu.memory_space<vmem>>, vector<1x1x128x128xbf16>
    %22 = vector.shape_cast %21 : vector<1x1x128x128xbf16> to vector<128x128xbf16>
    %cst_25 = arith.constant dense<0.000000e+00> : vector<72x128xf32>
    %23 = tpu.matmul %20, %22, %cst_25 {dimension_numbers = #tpu.dot_dimension_numbers<[1], [0], [0], [1], [0, 0, 1, 1], [], []>} : vector<72x128xbf16>, vector<128x128xbf16>, vector<72x128xf32> -> vector<72x128xf32>
    %24 = arith.addf %18, %23 : vector<72x128xf32>
    %c2 = arith.constant 2 : index
    %c0_26 = arith.constant 0 : index
    %25 = vector.load %arg8[%c2, %c0_26] : memref<74x128xf32, #tpu.memory_space<vmem>>, vector<72x128xf32>
    %26 = arith.truncf %25 : vector<72x128xf32> to vector<72x128xbf16>
    %c0_27 = arith.constant 0 : index
    %c2_28 = arith.constant 2 : index
    %c0_29 = arith.constant 0 : index
    %c0_30 = arith.constant 0 : index
    %27 = vector.load %arg4[%c0_27, %c2_28, %c0_29, %c0_30] : memref<6x3x128x128xbf16, #tpu.memory_space<vmem>>, vector<1x1x128x128xbf16>
    %28 = vector.shape_cast %27 : vector<1x1x128x128xbf16> to vector<128x128xbf16>
    %cst_31 = arith.constant dense<0.000000e+00> : vector<72x128xf32>
    %29 = tpu.matmul %26, %28, %cst_31 {dimension_numbers = #tpu.dot_dimension_numbers<[1], [0], [0], [1], [0, 0, 1, 1], [], []>} : vector<72x128xbf16>, vector<128x128xbf16>, vector<72x128xf32> -> vector<72x128xf32>
    %30 = arith.addf %24, %29 : vector<72x128xf32>
    %cst_32 = arith.constant 0.000000e+00 : f32
    %31 = vector.broadcast %cst_32 : f32 to vector<72x128xf32>
    %32 = arith.maximumf %30, %31 : vector<72x128xf32>
    %33 = vector.broadcast %0 : vector<72x1xf32> to vector<72x128xf32>
    %34 = arith.mulf %32, %33 : vector<72x128xf32>
    %c1_33 = arith.constant 1 : index
    %c0_34 = arith.constant 0 : index
    %35 = vector.load %arg8[%c1_33, %c0_34] : memref<74x128xf32, #tpu.memory_space<vmem>>, vector<72x128xf32>
    tpu.vector_store %arg8[%c1_33, %c0_34], %34 {strides = array<i32>} : memref<74x128xf32, #tpu.memory_space<vmem>>, vector<72x128xf32>,
    %c0_35 = arith.constant 0 : index
    %c0_36 = arith.constant 0 : index
    %36 = vector.load %arg8[%c0_35, %c0_36] : memref<74x128xf32, #tpu.memory_space<vmem>>, vector<72x128xf32>
    %37 = arith.truncf %36 : vector<72x128xf32> to vector<72x128xbf16>
    %c1_37 = arith.constant 1 : index
    %c0_38 = arith.constant 0 : index
    %c0_39 = arith.constant 0 : index
    %c0_40 = arith.constant 0 : index
    %38 = vector.load %arg4[%c1_37, %c0_38, %c0_39, %c0_40] : memref<6x3x128x128xbf16, #tpu.memory_space<vmem>>, vector<1x1x128x128xbf16>
    %39 = vector.shape_cast %38 : vector<1x1x128x128xbf16> to vector<128x128xbf16>
    %cst_41 = arith.constant dense<0.000000e+00> : vector<72x128xf32>
    %40 = tpu.matmul %37, %39, %cst_41 {dimension_numbers = #tpu.dot_dimension_numbers<[1], [0], [0], [1], [0, 0, 1, 1], [], []>} : vector<72x128xbf16>, vector<128x128xbf16>, vector<72x128xf32> -> vector<72x128xf32>
    %c1_42 = arith.constant 1 : index
    %c0_43 = arith.constant 0 : index
    %c0_44 = arith.constant 0 : index
    %41 = vector.load %arg5[%c1_42, %c0_43, %c0_44] : memref<6x1x128xf32, #tpu.memory_space<vmem>>, vector<1x1x128xf32>
    %42 = vector.shape_cast %41 : vector<1x1x128xf32> to vector<1x128xf32>
    %43 = vector.broadcast %42 : vector<1x128xf32> to vector<72x128xf32>
    %44 = arith.addf %40, %43 : vector<72x128xf32>
    %c1_45 = arith.constant 1 : index
    %c0_46 = arith.constant 0 : index
    %45 = vector.load %arg8[%c1_45, %c0_46] : memref<74x128xf32, #tpu.memory_space<vmem>>, vector<72x128xf32>
    %46 = arith.truncf %45 : vector<72x128xf32> to vector<72x128xbf16>
    %c1_47 = arith.constant 1 : index
    %c1_48 = arith.constant 1 : index
    %c0_49 = arith.constant 0 : index
    %c0_50 = arith.constant 0 : index
    %47 = vector.load %arg4[%c1_47, %c1_48, %c0_49, %c0_50] : memref<6x3x128x128xbf16, #tpu.memory_space<vmem>>, vector<1x1x128x128xbf16>
    %48 = vector.shape_cast %47 : vector<1x1x128x128xbf16> to vector<128x128xbf16>
    %cst_51 = arith.constant dense<0.000000e+00> : vector<72x128xf32>
    %49 = tpu.matmul %46, %48, %cst_51 {dimension_numbers = #tpu.dot_dimension_numbers<[1], [0], [0], [1], [0, 0, 1, 1], [], []>} : vector<72x128xbf16>, vector<128x128xbf16>, vector<72x128xf32> -> vector<72x128xf32>
    %50 = arith.addf %44, %49 : vector<72x128xf32>
    %c2_52 = arith.constant 2 : index
    %c0_53 = arith.constant 0 : index
    %51 = vector.load %arg8[%c2_52, %c0_53] : memref<74x128xf32, #tpu.memory_space<vmem>>, vector<72x128xf32>
    %52 = arith.truncf %51 : vector<72x128xf32> to vector<72x128xbf16>
    %c1_54 = arith.constant 1 : index
    %c2_55 = arith.constant 2 : index
    %c0_56 = arith.constant 0 : index
    %c0_57 = arith.constant 0 : index
    %53 = vector.load %arg4[%c1_54, %c2_55, %c0_56, %c0_57] : memref<6x3x128x128xbf16, #tpu.memory_space<vmem>>, vector<1x1x128x128xbf16>
    %54 = vector.shape_cast %53 : vector<1x1x128x128xbf16> to vector<128x128xbf16>
    %cst_58 = arith.constant dense<0.000000e+00> : vector<72x128xf32>
    %55 = tpu.matmul %52, %54, %cst_58 {dimension_numbers = #tpu.dot_dimension_numbers<[1], [0], [0], [1], [0, 0, 1, 1], [], []>} : vector<72x128xbf16>, vector<128x128xbf16>, vector<72x128xf32> -> vector<72x128xf32>
    %56 = arith.addf %50, %55 : vector<72x128xf32>
    %cst_59 = arith.constant 0.000000e+00 : f32
    %57 = vector.broadcast %cst_59 : f32 to vector<72x128xf32>
    %58 = arith.maximumf %56, %57 : vector<72x128xf32>
    %59 = arith.addf %32, %58 : vector<72x128xf32>
    %60 = vector.broadcast %0 : vector<72x1xf32> to vector<72x128xf32>
    %61 = arith.mulf %59, %60 : vector<72x128xf32>
    %c1_60 = arith.constant 1 : index
    %c0_61 = arith.constant 0 : index
    %62 = vector.load %arg8[%c1_60, %c0_61] : memref<74x128xf32, #tpu.memory_space<vmem>>, vector<72x128xf32>
    tpu.vector_store %arg8[%c1_60, %c0_61], %61 {strides = array<i32>} : memref<74x128xf32, #tpu.memory_space<vmem>>, vector<72x128xf32>,
    %c0_62 = arith.constant 0 : index
    %c0_63 = arith.constant 0 : index
    %63 = vector.load %arg8[%c0_62, %c0_63] : memref<74x128xf32, #tpu.memory_space<vmem>>, vector<72x128xf32>
    %64 = arith.truncf %63 : vector<72x128xf32> to vector<72x128xbf16>
    %c2_64 = arith.constant 2 : index
    %c0_65 = arith.constant 0 : index
    %c0_66 = arith.constant 0 : index
    %c0_67 = arith.constant 0 : index
    %65 = vector.load %arg4[%c2_64, %c0_65, %c0_66, %c0_67] : memref<6x3x128x128xbf16, #tpu.memory_space<vmem>>, vector<1x1x128x128xbf16>
    %66 = vector.shape_cast %65 : vector<1x1x128x128xbf16> to vector<128x128xbf16>
    %cst_68 = arith.constant dense<0.000000e+00> : vector<72x128xf32>
    %67 = tpu.matmul %64, %66, %cst_68 {dimension_numbers = #tpu.dot_dimension_numbers<[1], [0], [0], [1], [0, 0, 1, 1], [], []>} : vector<72x128xbf16>, vector<128x128xbf16>, vector<72x128xf32> -> vector<72x128xf32>
    %c2_69 = arith.constant 2 : index
    %c0_70 = arith.constant 0 : index
    %c0_71 = arith.constant 0 : index
    %68 = vector.load %arg5[%c2_69, %c0_70, %c0_71] : memref<6x1x128xf32, #tpu.memory_space<vmem>>, vector<1x1x128xf32>
    %69 = vector.shape_cast %68 : vector<1x1x128xf32> to vector<1x128xf32>
    %70 = vector.broadcast %69 : vector<1x128xf32> to vector<72x128xf32>
    %71 = arith.addf %67, %70 : vector<72x128xf32>
    %c1_72 = arith.constant 1 : index
    %c0_73 = arith.constant 0 : index
    %72 = vector.load %arg8[%c1_72, %c0_73] : memref<74x128xf32, #tpu.memory_space<vmem>>, vector<72x128xf32>
    %73 = arith.truncf %72 : vector<72x128xf32> to vector<72x128xbf16>
    %c2_74 = arith.constant 2 : index
    %c1_75 = arith.constant 1 : index
    %c0_76 = arith.constant 0 : index
    %c0_77 = arith.constant 0 : index
    %74 = vector.load %arg4[%c2_74, %c1_75, %c0_76, %c0_77] : memref<6x3x128x128xbf16, #tpu.memory_space<vmem>>, vector<1x1x128x128xbf16>
    %75 = vector.shape_cast %74 : vector<1x1x128x128xbf16> to vector<128x128xbf16>
    %cst_78 = arith.constant dense<0.000000e+00> : vector<72x128xf32>
    %76 = tpu.matmul %73, %75, %cst_78 {dimension_numbers = #tpu.dot_dimension_numbers<[1], [0], [0], [1], [0, 0, 1, 1], [], []>} : vector<72x128xbf16>, vector<128x128xbf16>, vector<72x128xf32> -> vector<72x128xf32>
    %77 = arith.addf %71, %76 : vector<72x128xf32>
    %c2_79 = arith.constant 2 : index
    %c0_80 = arith.constant 0 : index
    %78 = vector.load %arg8[%c2_79, %c0_80] : memref<74x128xf32, #tpu.memory_space<vmem>>, vector<72x128xf32>
    %79 = arith.truncf %78 : vector<72x128xf32> to vector<72x128xbf16>
    %c2_81 = arith.constant 2 : index
    %c2_82 = arith.constant 2 : index
    %c0_83 = arith.constant 0 : index
    %c0_84 = arith.constant 0 : index
    %80 = vector.load %arg4[%c2_81, %c2_82, %c0_83, %c0_84] : memref<6x3x128x128xbf16, #tpu.memory_space<vmem>>, vector<1x1x128x128xbf16>
    %81 = vector.shape_cast %80 : vector<1x1x128x128xbf16> to vector<128x128xbf16>
    %cst_85 = arith.constant dense<0.000000e+00> : vector<72x128xf32>
    %82 = tpu.matmul %79, %81, %cst_85 {dimension_numbers = #tpu.dot_dimension_numbers<[1], [0], [0], [1], [0, 0, 1, 1], [], []>} : vector<72x128xbf16>, vector<128x128xbf16>, vector<72x128xf32> -> vector<72x128xf32>
    %83 = arith.addf %77, %82 : vector<72x128xf32>
    %84 = vector.broadcast %0 : vector<72x1xf32> to vector<72x128xf32>
    %85 = arith.mulf %83, %84 : vector<72x128xf32>
    %c0_86 = arith.constant 0 : index
    %c0_87 = arith.constant 0 : index
    %c0_88 = arith.constant 0 : index
    %86 = vector.load %arg6[%c0_86, %c0_87, %c0_88] : memref<1x72x128xf32, #tpu.memory_space<vmem>>, vector<1x72x128xf32>
    %87 = vector.shape_cast %86 : vector<1x72x128xf32> to vector<72x128xf32>
    %88 = vector.shape_cast %85 : vector<72x128xf32> to vector<1x72x128xf32>
    tpu.vector_store %arg6[%c0_86, %c0_87, %c0_88], %88 {strides = array<i32>} : memref<1x72x128xf32, #tpu.memory_space<vmem>>, vector<1x72x128xf32>,
    %89 = tpu.iota {dimensions = array<i32: 1>} : vector<72x128xi32>
    %c64_i32 = arith.constant 64 : i32
    %90 = vector.broadcast %c64_i32 : i32 to vector<72x128xi32>
    %91 = arith.cmpi slt, %89, %90 : vector<72x128xi32>
    %cst_89 = arith.constant 0.000000e+00 : f32
    %92 = vector.broadcast %cst_89 : f32 to vector<72x128xf32>
    %93 = arith.select %91, %85, %92 : vector<72x128xi1>, vector<72x128xf32>
    %cst_90 = arith.constant 0.000000e+00 : f32
    %94 = vector.broadcast %cst_90 : f32 to vector<72x128xf32>
    %95 = arith.select %91, %94, %85 : vector<72x128xi1>, vector<72x128xf32>
    %cst_91 = arith.constant 5.000000e-01 : f32
    %96 = vector.broadcast %cst_91 : f32 to vector<72x128xf32>
    %97 = arith.mulf %96, %95 : vector<72x128xf32>
    %98 = math.exp %97 : vector<72x128xf32>
    %c0_92 = arith.constant 0 : index
    %c0_93 = arith.constant 0 : index
    %c0_94 = arith.constant 0 : index
    %99 = vector.load %arg2[%c0_92, %c0_93, %c0_94] : memref<1x72x128xf32, #tpu.memory_space<vmem>>, vector<1x72x128xf32>
    %100 = vector.shape_cast %99 : vector<1x72x128xf32> to vector<72x128xf32>
    %101 = arith.mulf %100, %98 : vector<72x128xf32>
    %102 = arith.addf %93, %101 : vector<72x128xf32>
    %103 = vector.broadcast %0 : vector<72x1xf32> to vector<72x128xf32>
    %104 = arith.mulf %102, %103 : vector<72x128xf32>
    %c1_95 = arith.constant 1 : index
    %c0_96 = arith.constant 0 : index
    %105 = vector.load %arg8[%c1_95, %c0_96] : memref<74x128xf32, #tpu.memory_space<vmem>>, vector<72x128xf32>
    tpu.vector_store %arg8[%c1_95, %c0_96], %104 {strides = array<i32>} : memref<74x128xf32, #tpu.memory_space<vmem>>, vector<72x128xf32>,
    %c0_97 = arith.constant 0 : index
    %c0_98 = arith.constant 0 : index
    %106 = vector.load %arg8[%c0_97, %c0_98] : memref<74x128xf32, #tpu.memory_space<vmem>>, vector<72x128xf32>
    %107 = arith.truncf %106 : vector<72x128xf32> to vector<72x128xbf16>
    %c3 = arith.constant 3 : index
    %c0_99 = arith.constant 0 : index
    %c0_100 = arith.constant 0 : index
    %c0_101 = arith.constant 0 : index
    %108 = vector.load %arg4[%c3, %c0_99, %c0_100, %c0_101] : memref<6x3x128x128xbf16, #tpu.memory_space<vmem>>, vector<1x1x128x128xbf16>
    %109 = vector.shape_cast %108 : vector<1x1x128x128xbf16> to vector<128x128xbf16>
    %cst_102 = arith.constant dense<0.000000e+00> : vector<72x128xf32>
    %110 = tpu.matmul %107, %109, %cst_102 {dimension_numbers = #tpu.dot_dimension_numbers<[1], [0], [0], [1], [0, 0, 1, 1], [], []>} : vector<72x128xbf16>, vector<128x128xbf16>, vector<72x128xf32> -> vector<72x128xf32>
    %c3_103 = arith.constant 3 : index
    %c0_104 = arith.constant 0 : index
    %c0_105 = arith.constant 0 : index
    %111 = vector.load %arg5[%c3_103, %c0_104, %c0_105] : memref<6x1x128xf32, #tpu.memory_space<vmem>>, vector<1x1x128xf32>
    %112 = vector.shape_cast %111 : vector<1x1x128xf32> to vector<1x128xf32>
    %113 = vector.broadcast %112 : vector<1x128xf32> to vector<72x128xf32>
    %114 = arith.addf %110, %113 : vector<72x128xf32>
    %c1_106 = arith.constant 1 : index
    %c0_107 = arith.constant 0 : index
    %115 = vector.load %arg8[%c1_106, %c0_107] : memref<74x128xf32, #tpu.memory_space<vmem>>, vector<72x128xf32>
    %116 = arith.truncf %115 : vector<72x128xf32> to vector<72x128xbf16>
    %c3_108 = arith.constant 3 : index
    %c1_109 = arith.constant 1 : index
    %c0_110 = arith.constant 0 : index
    %c0_111 = arith.constant 0 : index
    %117 = vector.load %arg4[%c3_108, %c1_109, %c0_110, %c0_111] : memref<6x3x128x128xbf16, #tpu.memory_space<vmem>>, vector<1x1x128x128xbf16>
    %118 = vector.shape_cast %117 : vector<1x1x128x128xbf16> to vector<128x128xbf16>
    %cst_112 = arith.constant dense<0.000000e+00> : vector<72x128xf32>
    %119 = tpu.matmul %116, %118, %cst_112 {dimension_numbers = #tpu.dot_dimension_numbers<[1], [0], [0], [1], [0, 0, 1, 1], [], []>} : vector<72x128xbf16>, vector<128x128xbf16>, vector<72x128xf32> -> vector<72x128xf32>
    %120 = arith.addf %114, %119 : vector<72x128xf32>
    %c2_113 = arith.constant 2 : index
    %c0_114 = arith.constant 0 : index
    %121 = vector.load %arg8[%c2_113, %c0_114] : memref<74x128xf32, #tpu.memory_space<vmem>>, vector<72x128xf32>
    %122 = arith.truncf %121 : vector<72x128xf32> to vector<72x128xbf16>
    %c3_115 = arith.constant 3 : index
    %c2_116 = arith.constant 2 : index
    %c0_117 = arith.constant 0 : index
    %c0_118 = arith.constant 0 : index
    %123 = vector.load %arg4[%c3_115, %c2_116, %c0_117, %c0_118] : memref<6x3x128x128xbf16, #tpu.memory_space<vmem>>, vector<1x1x128x128xbf16>
    %124 = vector.shape_cast %123 : vector<1x1x128x128xbf16> to vector<128x128xbf16>
    %cst_119 = arith.constant dense<0.000000e+00> : vector<72x128xf32>
    %125 = tpu.matmul %122, %124, %cst_119 {dimension_numbers = #tpu.dot_dimension_numbers<[1], [0], [0], [1], [0, 0, 1, 1], [], []>} : vector<72x128xbf16>, vector<128x128xbf16>, vector<72x128xf32> -> vector<72x128xf32>
    %126 = arith.addf %120, %125 : vector<72x128xf32>
    %cst_120 = arith.constant 0.000000e+00 : f32
    %127 = vector.broadcast %cst_120 : f32 to vector<72x128xf32>
    %128 = arith.maximumf %126, %127 : vector<72x128xf32>
    %129 = vector.broadcast %0 : vector<72x1xf32> to vector<72x128xf32>
    %130 = arith.mulf %128, %129 : vector<72x128xf32>
    %c1_121 = arith.constant 1 : index
    %c0_122 = arith.constant 0 : index
    %131 = vector.load %arg8[%c1_121, %c0_122] : memref<74x128xf32, #tpu.memory_space<vmem>>, vector<72x128xf32>
    tpu.vector_store %arg8[%c1_121, %c0_122], %130 {strides = array<i32>} : memref<74x128xf32, #tpu.memory_space<vmem>>, vector<72x128xf32>,
    %c0_123 = arith.constant 0 : index
    %c0_124 = arith.constant 0 : index
    %132 = vector.load %arg8[%c0_123, %c0_124] : memref<74x128xf32, #tpu.memory_space<vmem>>, vector<72x128xf32>
    %133 = arith.truncf %132 : vector<72x128xf32> to vector<72x128xbf16>
    %c4 = arith.constant 4 : index
    %c0_125 = arith.constant 0 : index
    %c0_126 = arith.constant 0 : index
    %c0_127 = arith.constant 0 : index
    %134 = vector.load %arg4[%c4, %c0_125, %c0_126, %c0_127] : memref<6x3x128x128xbf16, #tpu.memory_space<vmem>>, vector<1x1x128x128xbf16>
    %135 = vector.shape_cast %134 : vector<1x1x128x128xbf16> to vector<128x128xbf16>
    %cst_128 = arith.constant dense<0.000000e+00> : vector<72x128xf32>
    %136 = tpu.matmul %133, %135, %cst_128 {dimension_numbers = #tpu.dot_dimension_numbers<[1], [0], [0], [1], [0, 0, 1, 1], [], []>} : vector<72x128xbf16>, vector<128x128xbf16>, vector<72x128xf32> -> vector<72x128xf32>
    %c4_129 = arith.constant 4 : index
    %c0_130 = arith.constant 0 : index
    %c0_131 = arith.constant 0 : index
    %137 = vector.load %arg5[%c4_129, %c0_130, %c0_131] : memref<6x1x128xf32, #tpu.memory_space<vmem>>, vector<1x1x128xf32>
    %138 = vector.shape_cast %137 : vector<1x1x128xf32> to vector<1x128xf32>
    %139 = vector.broadcast %138 : vector<1x128xf32> to vector<72x128xf32>
    %140 = arith.addf %136, %139 : vector<72x128xf32>
    %c1_132 = arith.constant 1 : index
    %c0_133 = arith.constant 0 : index
    %141 = vector.load %arg8[%c1_132, %c0_133] : memref<74x128xf32, #tpu.memory_space<vmem>>, vector<72x128xf32>
    %142 = arith.truncf %141 : vector<72x128xf32> to vector<72x128xbf16>
    %c4_134 = arith.constant 4 : index
    %c1_135 = arith.constant 1 : index
    %c0_136 = arith.constant 0 : index
    %c0_137 = arith.constant 0 : index
    %143 = vector.load %arg4[%c4_134, %c1_135, %c0_136, %c0_137] : memref<6x3x128x128xbf16, #tpu.memory_space<vmem>>, vector<1x1x128x128xbf16>
    %144 = vector.shape_cast %143 : vector<1x1x128x128xbf16> to vector<128x128xbf16>
    %cst_138 = arith.constant dense<0.000000e+00> : vector<72x128xf32>
    %145 = tpu.matmul %142, %144, %cst_138 {dimension_numbers = #tpu.dot_dimension_numbers<[1], [0], [0], [1], [0, 0, 1, 1], [], []>} : vector<72x128xbf16>, vector<128x128xbf16>, vector<72x128xf32> -> vector<72x128xf32>
    %146 = arith.addf %140, %145 : vector<72x128xf32>
    %c2_139 = arith.constant 2 : index
    %c0_140 = arith.constant 0 : index
    %147 = vector.load %arg8[%c2_139, %c0_140] : memref<74x128xf32, #tpu.memory_space<vmem>>, vector<72x128xf32>
    %148 = arith.truncf %147 : vector<72x128xf32> to vector<72x128xbf16>
    %c4_141 = arith.constant 4 : index
    %c2_142 = arith.constant 2 : index
    %c0_143 = arith.constant 0 : index
    %c0_144 = arith.constant 0 : index
    %149 = vector.load %arg4[%c4_141, %c2_142, %c0_143, %c0_144] : memref<6x3x128x128xbf16, #tpu.memory_space<vmem>>, vector<1x1x128x128xbf16>
    %150 = vector.shape_cast %149 : vector<1x1x128x128xbf16> to vector<128x128xbf16>
    %cst_145 = arith.constant dense<0.000000e+00> : vector<72x128xf32>
    %151 = tpu.matmul %148, %150, %cst_145 {dimension_numbers = #tpu.dot_dimension_numbers<[1], [0], [0], [1], [0, 0, 1, 1], [], []>} : vector<72x128xbf16>, vector<128x128xbf16>, vector<72x128xf32> -> vector<72x128xf32>
    %152 = arith.addf %146, %151 : vector<72x128xf32>
    %cst_146 = arith.constant 0.000000e+00 : f32
    %153 = vector.broadcast %cst_146 : f32 to vector<72x128xf32>
    %154 = arith.maximumf %152, %153 : vector<72x128xf32>
    %155 = arith.addf %128, %154 : vector<72x128xf32>
    %156 = vector.broadcast %0 : vector<72x1xf32> to vector<72x128xf32>
    %157 = arith.mulf %155, %156 : vector<72x128xf32>
    %c1_147 = arith.constant 1 : index
    %c0_148 = arith.constant 0 : index
    %158 = vector.load %arg8[%c1_147, %c0_148] : memref<74x128xf32, #tpu.memory_space<vmem>>, vector<72x128xf32>
    tpu.vector_store %arg8[%c1_147, %c0_148], %157 {strides = array<i32>} : memref<74x128xf32, #tpu.memory_space<vmem>>, vector<72x128xf32>,
    %c0_149 = arith.constant 0 : index
    %c0_150 = arith.constant 0 : index
    %159 = vector.load %arg8[%c0_149, %c0_150] : memref<74x128xf32, #tpu.memory_space<vmem>>, vector<72x128xf32>
    %160 = arith.truncf %159 : vector<72x128xf32> to vector<72x128xbf16>
    %c5 = arith.constant 5 : index
    %c0_151 = arith.constant 0 : index
    %c0_152 = arith.constant 0 : index
    %c0_153 = arith.constant 0 : index
    %161 = vector.load %arg4[%c5, %c0_151, %c0_152, %c0_153] : memref<6x3x128x128xbf16, #tpu.memory_space<vmem>>, vector<1x1x128x128xbf16>
    %162 = vector.shape_cast %161 : vector<1x1x128x128xbf16> to vector<128x128xbf16>
    %cst_154 = arith.constant dense<0.000000e+00> : vector<72x128xf32>
    %163 = tpu.matmul %160, %162, %cst_154 {dimension_numbers = #tpu.dot_dimension_numbers<[1], [0], [0], [1], [0, 0, 1, 1], [], []>} : vector<72x128xbf16>, vector<128x128xbf16>, vector<72x128xf32> -> vector<72x128xf32>
    %c5_155 = arith.constant 5 : index
    %c0_156 = arith.constant 0 : index
    %c0_157 = arith.constant 0 : index
    %164 = vector.load %arg5[%c5_155, %c0_156, %c0_157] : memref<6x1x128xf32, #tpu.memory_space<vmem>>, vector<1x1x128xf32>
    %165 = vector.shape_cast %164 : vector<1x1x128xf32> to vector<1x128xf32>
    %166 = vector.broadcast %165 : vector<1x128xf32> to vector<72x128xf32>
    %167 = arith.addf %163, %166 : vector<72x128xf32>
    %c1_158 = arith.constant 1 : index
    %c0_159 = arith.constant 0 : index
    %168 = vector.load %arg8[%c1_158, %c0_159] : memref<74x128xf32, #tpu.memory_space<vmem>>, vector<72x128xf32>
    %169 = arith.truncf %168 : vector<72x128xf32> to vector<72x128xbf16>
    %c5_160 = arith.constant 5 : index
    %c1_161 = arith.constant 1 : index
    %c0_162 = arith.constant 0 : index
    %c0_163 = arith.constant 0 : index
    %170 = vector.load %arg4[%c5_160, %c1_161, %c0_162, %c0_163] : memref<6x3x128x128xbf16, #tpu.memory_space<vmem>>, vector<1x1x128x128xbf16>
    %171 = vector.shape_cast %170 : vector<1x1x128x128xbf16> to vector<128x128xbf16>
    %cst_164 = arith.constant dense<0.000000e+00> : vector<72x128xf32>
    %172 = tpu.matmul %169, %171, %cst_164 {dimension_numbers = #tpu.dot_dimension_numbers<[1], [0], [0], [1], [0, 0, 1, 1], [], []>} : vector<72x128xbf16>, vector<128x128xbf16>, vector<72x128xf32> -> vector<72x128xf32>
    %173 = arith.addf %167, %172 : vector<72x128xf32>
    %c2_165 = arith.constant 2 : index
    %c0_166 = arith.constant 0 : index
    %174 = vector.load %arg8[%c2_165, %c0_166] : memref<74x128xf32, #tpu.memory_space<vmem>>, vector<72x128xf32>
    %175 = arith.truncf %174 : vector<72x128xf32> to vector<72x128xbf16>
    %c5_167 = arith.constant 5 : index
    %c2_168 = arith.constant 2 : index
    %c0_169 = arith.constant 0 : index
    %c0_170 = arith.constant 0 : index
    %176 = vector.load %arg4[%c5_167, %c2_168, %c0_169, %c0_170] : memref<6x3x128x128xbf16, #tpu.memory_space<vmem>>, vector<1x1x128x128xbf16>
    %177 = vector.shape_cast %176 : vector<1x1x128x128xbf16> to vector<128x128xbf16>
    %cst_171 = arith.constant dense<0.000000e+00> : vector<72x128xf32>
    %178 = tpu.matmul %175, %177, %cst_171 {dimension_numbers = #tpu.dot_dimension_numbers<[1], [0], [0], [1], [0, 0, 1, 1], [], []>} : vector<72x128xbf16>, vector<128x128xbf16>, vector<72x128xf32> -> vector<72x128xf32>
    %179 = arith.addf %173, %178 : vector<72x128xf32>
    %c0_172 = arith.constant 0 : index
    %c0_173 = arith.constant 0 : index
    %c0_174 = arith.constant 0 : index
    %180 = vector.load %arg7[%c0_172, %c0_173, %c0_174] : memref<1x72x128xf32, #tpu.memory_space<vmem>>, vector<1x72x128xf32>
    %181 = vector.shape_cast %180 : vector<1x72x128xf32> to vector<72x128xf32>
    %182 = vector.shape_cast %179 : vector<72x128xf32> to vector<1x72x128xf32>
    tpu.vector_store %arg7[%c0_172, %c0_173, %c0_174], %182 {strides = array<i32>} : memref<1x72x128xf32, #tpu.memory_space<vmem>>, vector<1x72x128xf32>,
    return
  }
  func.func @transform_0(%arg0: i32) -> (i32, i32, i32) {
    %c0_i32 = arith.constant 0 : i32
    %c0_i32_0 = arith.constant 0 : i32
    %c0_i32_1 = arith.constant 0 : i32
    return %arg0, %c0_i32, %c0_i32_0 : i32, i32, i32
  }
  func.func @transform_1(%arg0: i32) -> (i32, i32, i32) {
    %c0_i32 = arith.constant 0 : i32
    %c0_i32_0 = arith.constant 0 : i32
    %c0_i32_1 = arith.constant 0 : i32
    return %arg0, %c0_i32, %c0_i32_0 : i32, i32, i32
  }
  func.func @transform_2(%arg0: i32) -> (i32, i32) {
    %c0_i32 = arith.constant 0 : i32
    %c0_i32_0 = arith.constant 0 : i32
    %c0_i32_1 = arith.constant 0 : i32
    return %c0_i32, %c0_i32_0 : i32, i32
  }
  func.func @transform_3(%arg0: i32) -> (i32, i32, i32, i32) {
    %c0_i32 = arith.constant 0 : i32
    %c0_i32_0 = arith.constant 0 : i32
    %c0_i32_1 = arith.constant 0 : i32
    %c0_i32_2 = arith.constant 0 : i32
    %c0_i32_3 = arith.constant 0 : i32
    return %c0_i32, %c0_i32_0, %c0_i32_1, %c0_i32_2 : i32, i32, i32, i32
  }
  func.func @transform_4(%arg0: i32) -> (i32, i32, i32) {
    %c0_i32 = arith.constant 0 : i32
    %c0_i32_0 = arith.constant 0 : i32
    %c0_i32_1 = arith.constant 0 : i32
    %c0_i32_2 = arith.constant 0 : i32
    return %c0_i32, %c0_i32_0, %c0_i32_1 : i32, i32, i32
  }
  func.func @transform_5(%arg0: i32) -> (i32, i32, i32) {
    %c0_i32 = arith.constant 0 : i32
    %c0_i32_0 = arith.constant 0 : i32
    %c0_i32_1 = arith.constant 0 : i32
    return %arg0, %c0_i32, %c0_i32_0 : i32, i32, i32
  }
  func.func @transform_6(%arg0: i32) -> (i32, i32, i32) {
    %c0_i32 = arith.constant 0 : i32
    %c0_i32_0 = arith.constant 0 : i32
    %c0_i32_1 = arith.constant 0 : i32
    return %arg0, %c0_i32, %c0_i32_0 : i32, i32, i32
  }
}

</mosaic_0001>

<llo_original>
// kernel: tile.38
$region0: #{tile.38}
  #allocation0 [shape = 's32[1]{0}', space=sflag, size = 0x4, scoped, tag = 'scoped memory for tile.38']
  %s0 = inlined_call_operand.vmem [shape: f32[4], index: 0, kind: input, shape index: {}]
  %s1 = inlined_call_operand.vmem [shape: f32[16,4], index: 1, kind: output, shape index: {}]
  // Predicated region
  $region2: #{tile.38} parent=0 // pred_check
    _
  $region3: #{tile.38} parent=0 // pred_check_branch
    %3 = sbr.rel (0) target = $region5
  $region4: #{tile.38} parent=0 // pred_region
    _
  $region5: #{tile.38} parent=0 // pred_fallthru
    _
  %v4 = vld [vmem:[%s0] ss:$0 sm:$0xff]
  %5 = vst [vmem:[%s1] sm:$0xff] %v4
  %s6 = scalar_lea.vmem %s1, 8
  %7 = vst [vmem:[%s6] sm:$0xff] %v4

// kernel: tile.39
$region0: #{tile.39}
  %s0 = inlined_call_operand.vmem [shape: f32[16,4], index: 0, kind: input, shape index: {}]
  %s1 = inlined_call_operand.vmem [shape: f32[1,64], index: 1, kind: output, shape index: {}]
  $region1: #{tile.39} parent=0
    #allocation0 [shape = 'u8[4096]{0}', space=vmem, size = 0x1000, scoped, tag = 'scoped mem for output reshape']
    %v2 = vld [vmem:[%s0] sm:$0x1]
    %vm3 = vcmask 31744
    %4 = vst.msk [vmem:[#allocation0] sm:$0x1] %vm3, %v2
    %s5 = scalar_lea.vmem %s0, 15
    %v6 = vld [vmem:[%s5] sm:$0x1]
    %7 = vrot.lane.b32.xlu0 %v6, 60
    %v8 = vpop.permute.xlu0 %7
    %vm9 = vcmask 523744
    %10 = vst.msk [vmem:[#allocation0] sm:$0x1] %vm9, %v8
    %s11 = scalar_lea.vmem %s0, 14
    %v12 = vld [vmem:[%s11] sm:$0x1]
    %13 = vrot.lane.b32.xlu0 %v12, 56
    %v14 = vpop.permute.xlu0 %13
    %vm15 = vcmask 490944
    %16 = vst.msk [vmem:[#allocation0] sm:$0x1] %vm15, %v14
    %s17 = scalar_lea.vmem %s0, 13
    %v18 = vld [vmem:[%s17] sm:$0x1]
    %19 = vrot.lane.b32.xlu0 %v18, 52
    %v20 = vpop.permute.xlu0 %19
    %vm21 = vcmask 458144
    %22 = vst.msk [vmem:[#allocation0] sm:$0x1] %vm21, %v20
    %s23 = scalar_lea.vmem %s0, 12
    %v24 = vld [vmem:[%s23] sm:$0x1]
    %25 = vrot.lane.b32.xlu0 %v24, 48
    %v26 = vpop.permute.xlu0 %25
    %vm27 = vcmask 425344
    %28 = vst.msk [vmem:[#allocation0] sm:$0x1] %vm27, %v26
    %s29 = scalar_lea.vmem %s0, 11
    %v30 = vld [vmem:[%s29] sm:$0x1]
    %31 = vrot.lane.b32.xlu0 %v30, 44
    %v32 = vpop.permute.xlu0 %31
    %vm33 = vcmask 392544
    %34 = vst.msk [vmem:[#allocation0] sm:$0x1] %vm33, %v32
    %s35 = scalar_lea.vmem %s0, 10
    %v36 = vld [vmem:[%s35] sm:$0x1]
    %37 = vrot.lane.b32.xlu0 %v36, 40
    %v38 = vpop.permute.xlu0 %37
    %vm39 = vcmask 359744
    %40 = vst.msk [vmem:[#allocation0] sm:$0x1] %vm39, %v38
    %s41 = scalar_lea.vmem %s0, 9
    %v42 = vld [vmem:[%s41] sm:$0x1]
    %43 = vrot.lane.b32.xlu0 %v42, 36
    %v44 = vpop.permute.xlu0 %43
    %vm45 = vcmask 326944
    %46 = vst.msk [vmem:[#allocation0] sm:$0x1] %vm45, %v44
    %s47 = scalar_lea.vmem %s0, 8
    %v48 = vld [vmem:[%s47] sm:$0x1]
    %49 = vrot.lane.b32.xlu0 %v48, 32
    %v50 = vpop.permute.xlu0 %49
    %vm51 = vcmask 294144
    %52 = vst.msk [vmem:[#allocation0] sm:$0x1] %vm51, %v50
    %s53 = scalar_lea.vmem %s0, 7
    %v54 = vld [vmem:[%s53] sm:$0x1]
    %55 = vrot.lane.b32.xlu0 %v54, 28
    %v56 = vpop.permute.xlu0 %55
    %vm57 = vcmask 261344
    %58 = vst.msk [vmem:[#allocation0] sm:$0x1] %vm57, %v56
    %s59 = scalar_lea.vmem %s0, 6
    %v60 = vld [vmem:[%s59] sm:$0x1]
    %61 = vrot.lane.b32.xlu0 %v60, 24
    %v62 = vpop.permute.xlu0 %61
    %vm63 = vcmask 228544
    %64 = vst.msk [vmem:[#allocation0] sm:$0x1] %vm63, %v62
    %s65 = scalar_lea.vmem %s0, 5
    %v66 = vld [vmem:[%s65] sm:$0x1]
    %67 = vrot.lane.b32.xlu0 %v66, 20
    %v68 = vpop.permute.xlu0 %67
    %vm69 = vcmask 195744
    %70 = vst.msk [vmem:[#allocation0] sm:$0x1] %vm69, %v68
    %s71 = scalar_lea.vmem %s0, 4
    %v72 = vld [vmem:[%s71] sm:$0x1]
    %73 = vrot.lane.b32.xlu0 %v72, 16
    %v74 = vpop.permute.xlu0 %73
    %vm75 = vcmask 162944
    %76 = vst.msk [vmem:[#allocation0] sm:$0x1] %vm75, %v74
    %s77 = scalar_lea.vmem %s0, 3
    %v78 = vld [vmem:[%s77] sm:$0x1]
    %79 = vrot.lane.b32.xlu0 %v78, 12
    %v80 = vpop.permute.xlu0 %79
    %vm81 = vcmask 130144
    %82 = vst.msk [vmem:[#allocation0] sm:$0x1] %vm81, %v80
    %s83 = scalar_lea.vmem %s0, 2
    %v84 = vld [vmem:[%s83] sm:$0x1]
    %85 = vrot.lane.b32.xlu0 %v84, 8
    %v86 = vpop.permute.xlu0 %85
    %vm87 = vcmask 97344
    %88 = vst.msk [vmem:[#allocation0] sm:$0x1] %vm87, %v86
    %s89 = scalar_lea.vmem %s0, 1
    %v90 = vld [vmem:[%s89] sm:$0x1]
    %91 = vrot.lane.b32.xlu0 %v90, 4
    %v92 = vpop.permute.xlu0 %91
    %vm93 = vcmask 64544
    %94 = vst.msk [vmem:[#allocation0] sm:$0x1] %vm93, %v92
    %s96 = ssub.s32 2, 1
    %v97 = vld [vmem:[#allocation0] sm:%s96]
    %s99 = ssub.s32 2, 1
    %100 = vst [vmem:[%s1] sm:%s99] %v97

// kernel: tile.48
$region0: #{tile.48}
  #allocation0 [shape = 's32[1]{0}', space=sflag, size = 0x4, scoped, tag = 'scoped memory for tile.48']
  %s0 = inlined_call_operand.vmem [shape: f32[8], index: 0, kind: input, shape index: {}]
  %s1 = inlined_call_operand.vmem [shape: f32[16,8], index: 1, kind: output, shape index: {}]
  // Predicated region
  $region2: #{tile.48} parent=0 // pred_check
    _
  $region3: #{tile.48} parent=0 // pred_check_branch
    %3 = sbr.rel (0) target = $region5
  $region4: #{tile.48} parent=0 // pred_region
    _
  $region5: #{tile.48} parent=0 // pred_fallthru
    _
  %v4 = vld [vmem:[%s0] ss:$0 sm:$0xff]
  %5 = vst [vmem:[%s1] sm:$0xff] %v4
  %s6 = scalar_lea.vmem %s1, 8
  %7 = vst [vmem:[%s6] sm:$0xff] %v4

// kernel: _lambda_.1
$region0: #{_lambda_.1}
  #allocation0 [shape = 'u32[]', space=smem, size = 0x4, offset = 0x4, fixed_abs, tag = 'smem constant byte address 0x4 - core index']
  #allocation1 [shape = 'u32[72,128]{1,0:T(1,128)}', space=vmem, size = 0x9000, scoped, tag = 'internal scratch']
  #allocation2 [shape = 'f32[74,128]{1,0:T(8,128)}', space=vmem, size = 0xa000, scoped, tag = 'scratch operand']
  %s0 = inlined_call_operand.vmem [shape: f32[2,72,128], index: 0, kind: input, shape index: {}]
  %s1 = inlined_call_operand.vmem [shape: f32[2,72,128], index: 1, kind: input, shape index: {}]
  %s2 = inlined_call_operand.vmem [shape: f32[72,1], index: 2, kind: input, shape index: {}]
  %s3 = inlined_call_operand.vmem [shape: bf16[6,3,128,128], index: 3, kind: input, shape index: {}]
  %s4 = inlined_call_operand.vmem [shape: f32[6,1,128], index: 4, kind: input, shape index: {}]
  %s5 = inlined_call_operand.vmem [shape: f32[2,72,128], index: 5, kind: output, shape index: {0}]
  %s6 = inlined_call_operand.vmem [shape: f32[2,72,128], index: 6, kind: output, shape index: {1}]
  %7 = xla_tuple %s5, %s6
  %s8 = sld [smem:[#allocation0]]
  $region61: #{_lambda_.1} parent=0
    _
  %s10 = ssub.s32 1, %s8
  %s11 = scalar_select 0, %s10, %s8
  loop: start=0, step=1, limit=4
  $region2: #{_lambda_.1} parent=0 // loop_pre_header
    _
  $region3: #{_lambda_.1} parent=0 // loop_header
    %s13 = sphi 0, %s17
    %p14 = scmp.ge.s32.totalorder %s13, 4
    %s23 = sphi 0, %s25
    %s26 = sphi 0, %s23
    %s27 = sphi 0, %s26
    %s43 = sphi 0, %s27
    %s49 = sphi 0, %s51
    %s52 = sphi 0, %s49
    %s53 = sphi 0, %s52
    %s69 = sphi 0, %s53
    %s73 = sphi 0, %s73
    %s75 = sphi 0, %s73
    %s76 = sphi 0, %s75
    %s90 = sphi 0, %s76
    %s94 = sphi 0, %s94
    %s96 = sphi 0, %s94
    %s97 = sphi 0, %s96
    %s111 = sphi 0, %s97
    %s115 = sphi 0, %s115
    %s117 = sphi 0, %s115
    %s118 = sphi 0, %s117
    %s132 = sphi 0, %s118
    %s138 = sphi 0, %s140
    %s141 = sphi 0, %s138
    %s142 = sphi 0, %s141
    %s158 = sphi 0, %s142
    %s164 = sphi 0, %s166
    %s167 = sphi 0, %s164
    %s168 = sphi 0, %s167
    %s184 = sphi 0, %s168
  $region4: #{_lambda_.1} parent=0 // loop_header_branch
    %16 = sbr.rel (%p14) target = $region8
  $region5: #{_lambda_.1} parent=0 // loop_body
    %s18 = ssub.s32 %s13, 1
    %s19 = ssub.s32 %s13, 2
    %s20 = sadd.s32 %s13, 1
    %s21 = ssub.s32 %s13, %s20
    %p22 = scmp.eq.s32.totalorder %s21, 0
    %s24 = sadd.s32 %s23, 1
    %s25 = scalar_select %p22, %s23, %s24
    %p28 = pneg %p22
    %p29 = scmp.eq.s32.totalorder %s13, 1
    %p30 = por %p28, %p29
    %p31 = scmp.ne.s32.totalorder %s23, %s26
    %p32 = scmp.eq.s32.totalorder %s13, 0
    %p33 = por %p31, %p32
    %p34 = scmp.ne.s32.totalorder %s23, %s26
    %p35 = scmp.eq.s32.totalorder %s18, 1
    %p36 = por %p34, %p35
    %p37 = scmp.ne.s32.totalorder %s26, %s27
    %p38 = scmp.eq.s32.totalorder %s18, 0
    %p39 = por %p37, %p38
    %p40 = scmp.ne.s32.totalorder %s26, %s27
    %p41 = scmp.eq.s32.totalorder %s19, 1
    %p42 = por %p40, %p41
    %p44 = scmp.ne.s32.totalorder %s27, %s43
    %p45 = scmp.eq.s32.totalorder %s19, 0
    %p46 = por %p44, %p45
    %s47 = ssub.s32 %s13, %s20
    %p48 = scmp.eq.s32.totalorder %s47, 0
    %s50 = sadd.s32 %s49, 1
    %s51 = scalar_select %p48, %s49, %s50
    %p54 = pneg %p48
    %p55 = scmp.eq.s32.totalorder %s13, 1
    %p56 = por %p54, %p55
    %p57 = scmp.ne.s32.totalorder %s49, %s52
    %p58 = scmp.eq.s32.totalorder %s13, 0
    %p59 = por %p57, %p58
    %p60 = scmp.ne.s32.totalorder %s49, %s52
    %p61 = scmp.eq.s32.totalorder %s18, 1
    %p62 = por %p60, %p61
    %p63 = scmp.ne.s32.totalorder %s52, %s53
    %p64 = scmp.eq.s32.totalorder %s18, 0
    %p65 = por %p63, %p64
    %p66 = scmp.ne.s32.totalorder %s52, %s53
    %p67 = scmp.eq.s32.totalorder %s19, 1
    %p68 = por %p66, %p67
    %p70 = scmp.ne.s32.totalorder %s53, %s69
    %p71 = scmp.eq.s32.totalorder %s19, 0
    %p72 = por %p70, %p71
    %s74 = sadd.s32 %s73, 1
    %p77 = scmp.eq.s32.totalorder %s13, 1
    %p78 = scmp.ne.s32.totalorder %s73, %s75
    %p79 = scmp.eq.s32.totalorder %s13, 0
    %p80 = por %p78, %p79
    %p81 = scmp.ne.s32.totalorder %s73, %s75
    %p82 = scmp.eq.s32.totalorder %s18, 1
    %p83 = por %p81, %p82
    %p84 = scmp.ne.s32.totalorder %s75, %s76
    %p85 = scmp.eq.s32.totalorder %s18, 0
    %p86 = por %p84, %p85
    %p87 = scmp.ne.s32.totalorder %s75, %s76
    %p88 = scmp.eq.s32.totalorder %s19, 1
    %p89 = por %p87, %p88
    %p91 = scmp.ne.s32.totalorder %s76, %s90
    %p92 = scmp.eq.s32.totalorder %s19, 0
    %p93 = por %p91, %p92
    %s95 = sadd.s32 %s94, 1
    %p98 = scmp.eq.s32.totalorder %s13, 1
    %p99 = scmp.ne.s32.totalorder %s94, %s96
    %p100 = scmp.eq.s32.totalorder %s13, 0
    %p101 = por %p99, %p100
    %p102 = scmp.ne.s32.totalorder %s94, %s96
    %p103 = scmp.eq.s32.totalorder %s18, 1
    %p104 = por %p102, %p103
    %p105 = scmp.ne.s32.totalorder %s96, %s97
    %p106 = scmp.eq.s32.totalorder %s18, 0
    %p107 = por %p105, %p106
    %p108 = scmp.ne.s32.totalorder %s96, %s97
    %p109 = scmp.eq.s32.totalorder %s19, 1
    %p110 = por %p108, %p109
    %p112 = scmp.ne.s32.totalorder %s97, %s111
    %p113 = scmp.eq.s32.totalorder %s19, 0
    %p114 = por %p112, %p113
    %s116 = sadd.s32 %s115, 1
    %p119 = scmp.eq.s32.totalorder %s13, 1
    %p120 = scmp.ne.s32.totalorder %s115, %s117
    %p121 = scmp.eq.s32.totalorder %s13, 0
    %p122 = por %p120, %p121
    %p123 = scmp.ne.s32.totalorder %s115, %s117
    %p124 = scmp.eq.s32.totalorder %s18, 1
    %p125 = por %p123, %p124
    %p126 = scmp.ne.s32.totalorder %s117, %s118
    %p127 = scmp.eq.s32.totalorder %s18, 0
    %p128 = por %p126, %p127
    %p129 = scmp.ne.s32.totalorder %s117, %s118
    %p130 = scmp.eq.s32.totalorder %s19, 1
    %p131 = por %p129, %p130
    %p133 = scmp.ne.s32.totalorder %s118, %s132
    %p134 = scmp.eq.s32.totalorder %s19, 0
    %p135 = por %p133, %p134
    %s136 = ssub.s32 %s13, %s20
    %p137 = scmp.eq.s32.totalorder %s136, 0
    %s139 = sadd.s32 %s138, 1
    %s140 = scalar_select %p137, %s138, %s139
    %p143 = pneg %p137
    %p144 = scmp.eq.s32.totalorder %s13, 1
    %p145 = por %p143, %p144
    %p146 = scmp.ne.s32.totalorder %s138, %s141
    %p147 = scmp.eq.s32.totalorder %s13, 0
    %p148 = por %p146, %p147
    %p149 = scmp.ne.s32.totalorder %s138, %s141
    %p150 = scmp.eq.s32.totalorder %s18, 1
    %p151 = por %p149, %p150
    %p152 = scmp.ne.s32.totalorder %s141, %s142
    %p153 = scmp.eq.s32.totalorder %s18, 0
    %p154 = por %p152, %p153
    %p155 = scmp.ne.s32.totalorder %s141, %s142
    %p156 = scmp.eq.s32.totalorder %s19, 1
    %p157 = por %p155, %p156
    %p159 = scmp.ne.s32.totalorder %s142, %s158
    %p160 = scmp.eq.s32.totalorder %s19, 0
    %p161 = por %p159, %p160
    %s162 = ssub.s32 %s13, %s20
    %p163 = scmp.eq.s32.totalorder %s162, 0
    %s165 = sadd.s32 %s164, 1
    %s166 = scalar_select %p163, %s164, %s165
    %p169 = pneg %p163
    %p170 = scmp.eq.s32.totalorder %s13, 1
    %p171 = por %p169, %p170
    %p172 = scmp.ne.s32.totalorder %s164, %s167
    %p173 = scmp.eq.s32.totalorder %s13, 0
    %p174 = por %p172, %p173
    %p175 = scmp.ne.s32.totalorder %s164, %s167
    %p176 = scmp.eq.s32.totalorder %s18, 1
    %p177 = por %p175, %p176
    %p178 = scmp.ne.s32.totalorder %s167, %s168
    %p179 = scmp.eq.s32.totalorder %s18, 0
    %p180 = por %p178, %p179
    %p181 = scmp.ne.s32.totalorder %s167, %s168
    %p182 = scmp.eq.s32.totalorder %s19, 1
    %p183 = por %p181, %p182
    %p185 = scmp.ne.s32.totalorder %s168, %s184
    %p186 = scmp.eq.s32.totalorder %s19, 0
    %p187 = por %p185, %p186
    %p188 = scmp.le.s32.totalorder 1, %s13
    %p189 = scmp.lt.s32.totalorder %s13, 3
    %p190 = pnand %p188, %p189
    %p191 = pneg %p190
    // Predicated region
    $region9: #{_lambda_.1} parent=5 // pred_check
      _
    $region10: #{_lambda_.1} parent=5 // pred_check_branch
      %193 = sbr.rel (%p190) target = $region12
    $region11: #{_lambda_.1} parent=5 // pred_region
      %s194 = ssub.s32 %s13, 1
      // Predicated region
      $region13: #{_lambda_.1} parent=11 // pred_check
        %p195 = pneg %p86
      $region14: #{_lambda_.1} parent=11 // pred_check_branch
        %197 = sbr.rel (%p195) target = $region16
      $region15: #{_lambda_.1} parent=11 // pred_region
        _
      $region16: #{_lambda_.1} parent=11 // pred_fallthru
        _
      // Predicated region
      $region17: #{_lambda_.1} parent=11 // pred_check
        %p198 = pneg %p107
      $region18: #{_lambda_.1} parent=11 // pred_check_branch
        %200 = sbr.rel (%p198) target = $region20
      $region19: #{_lambda_.1} parent=11 // pred_region
        _
      $region20: #{_lambda_.1} parent=11 // pred_fallthru
        _
      // Predicated region
      $region21: #{_lambda_.1} parent=11 // pred_check
        %p201 = pneg %p128
      $region22: #{_lambda_.1} parent=11 // pred_check_branch
        %203 = sbr.rel (%p201) target = $region24
      $region23: #{_lambda_.1} parent=11 // pred_region
        _
      $region24: #{_lambda_.1} parent=11 // pred_fallthru
        _
    $region12: #{_lambda_.1} parent=5 // pred_fallthru
      _
    %p204 = scmp.lt.s32.totalorder %s13, 2
    // Predicated region
    $region25: #{_lambda_.1} parent=5 // pred_check
      %p205 = pneg %p204
    $region26: #{_lambda_.1} parent=5 // pred_check_branch
      %207 = sbr.rel (%p205) target = $region28
    $region27: #{_lambda_.1} parent=5 // pred_region
      // Predicated region
      $region29: #{_lambda_.1} parent=27 // pred_check
        %p208 = pneg %p33
      $region30: #{_lambda_.1} parent=27 // pred_check_branch
        %210 = sbr.rel (%p208) target = $region32
      $region31: #{_lambda_.1} parent=27 // pred_region
        %p211 = scmp.lt.s32.totalorder %s13, 1
        %s212 = scalar_select %p211, %s13, 1
        %s213 = smul.addr %s212, 9
        %s214 = smul.addr %s213, 8
        %s215 = scalar_lea.vmem %s0, %s214
      $region32: #{_lambda_.1} parent=27 // pred_fallthru
        _
      // Predicated region
      $region33: #{_lambda_.1} parent=27 // pred_check
        %p216 = pneg %p59
      $region34: #{_lambda_.1} parent=27 // pred_check_branch
        %218 = sbr.rel (%p216) target = $region36
      $region35: #{_lambda_.1} parent=27 // pred_region
        %p219 = scmp.lt.s32.totalorder %s13, 1
        %s220 = scalar_select %p219, %s13, 1
        %s221 = smul.addr %s220, 9
        %s222 = smul.addr %s221, 8
        %s223 = scalar_lea.vmem %s1, %s222
      $region36: #{_lambda_.1} parent=27 // pred_fallthru
        _
    $region28: #{_lambda_.1} parent=5 // pred_fallthru
      _
    %p224 = scmp.le.s32.totalorder 1, %s13
    %p225 = scmp.lt.s32.totalorder %s13, 3
    %p226 = pnand %p224, %p225
    %p227 = pneg %p226
    // Predicated region
    $region37: #{_lambda_.1} parent=5 // pred_check
      _
    $region38: #{_lambda_.1} parent=5 // pred_check_branch
      %229 = sbr.rel (%p226) target = $region40
    $region39: #{_lambda_.1} parent=5 // pred_region
      %s230 = ssub.s32 %s13, 1
      %p231 = scmp.lt.s32.totalorder %s18, 1
      %s232 = scalar_select %p231, %s18, 1
      %s233 = smul.addr %s232, 9
      %s234 = smul.addr %s233, 8
      %s235 = scalar_lea.vmem %s0, %s234
      %p236 = pneg %p39
      %p237 = pneg %p36
      %p238 = scmp.lt.s32.totalorder %s18, 1
      %s239 = scalar_select %p238, %s18, 1
      %s240 = smul.addr %s239, 9
      %s241 = smul.addr %s240, 8
      %s242 = scalar_lea.vmem %s1, %s241
      %p243 = pneg %p65
      %p244 = pneg %p62
      %p245 = pneg %p86
      %p246 = pneg %p83
      %p247 = pneg %p107
      %p248 = pneg %p104
      %p249 = pneg %p128
      %p250 = pneg %p125
      %p251 = pneg %p154
      %p252 = pneg %p151
      %p253 = scmp.lt.s32.totalorder %s18, 1
      %s254 = scalar_select %p253, %s18, 1
      %s255 = smul.addr %s254, 9
      %s256 = smul.addr %s255, 8
      %s257 = scalar_lea.vmem %s5, %s256
      %p258 = pneg %p180
      %p259 = pneg %p177
      %p260 = scmp.lt.s32.totalorder %s18, 1
      %s261 = scalar_select %p260, %s18, 1
      %s262 = smul.addr %s261, 9
      %s263 = smul.addr %s262, 8
      %s264 = scalar_lea.vmem %s6, %s263
      %p265 = scmp.lt.s32.totalorder %s18, 1
      %s266 = scalar_select %p265, %s18, 1
      %s267 = smul.addr %s266, 9
      %s268 = smul.addr %s267, 8
      %s269 = scalar_lea.vmem %s0, %s268
      %p270 = scmp.lt.s32.totalorder %s18, 1
      %s271 = scalar_select %p270, %s18, 1
      %s272 = smul.addr %s271, 9
      %s273 = smul.addr %s272, 8
      %s274 = scalar_lea.vmem %s1, %s273
      %p275 = scmp.lt.s32.totalorder %s18, 1
      %s276 = scalar_select %p275, %s18, 1
      %s277 = smul.addr %s276, 9
      %s278 = smul.addr %s277, 8
      %s279 = scalar_lea.vmem %s5, %s278
      %p280 = scmp.lt.s32.totalorder %s18, 1
      %s281 = scalar_select %p280, %s18, 1
      %s282 = smul.addr %s281, 9
      %s283 = smul.addr %s282, 8
      %s284 = scalar_lea.vmem %s6, %s283
      %v285 = vld [vmem:[%s2] sm:$0xff]
      %v286 = vld [vmem:[%s2 + $0x8] sm:$0xff]
      %v287 = vld [vmem:[%s2 + $0x10] sm:$0xff]
      %v288 = vld [vmem:[%s2 + $0x18] sm:$0xff]
      %v289 = vld [vmem:[%s2 + $0x20] sm:$0xff]
      %v290 = vld [vmem:[%s2 + $0x28] sm:$0xff]
      %v291 = vld [vmem:[%s2 + $0x30] sm:$0xff]
      %v292 = vld [vmem:[%s2 + $0x38] sm:$0xff]
      %v293 = vld [vmem:[%s2 + $0x40] sm:$0xff]
      %294 = vst [vmem:[#allocation2] sm:$0x1] 0.0
      %295 = vst [vmem:[#allocation2 + $0x49] sm:$0x1] 0.0
      %v296 = vld [vmem:[%s269] sm:$0xff]
      %v297 = vld [vmem:[%s269 + $0x8] sm:$0xff]
      %v298 = vld [vmem:[%s269 + $0x10] sm:$0xff]
      %v299 = vld [vmem:[%s269 + $0x18] sm:$0xff]
      %v300 = vld [vmem:[%s269 + $0x20] sm:$0xff]
      %v301 = vld [vmem:[%s269 + $0x28] sm:$0xff]
      %v302 = vld [vmem:[%s269 + $0x30] sm:$0xff]
      %v303 = vld [vmem:[%s269 + $0x38] sm:$0xff]
      %v304 = vld [vmem:[%s269 + $0x40] sm:$0xff]
      %306 = vset.pattern.permute.xlu0 0
      %307 = vperm.xlu0 %306, %v285
      %v308 = vpop.permute.xlu0 %307
      %311 = vset.pattern.permute.xlu0 0
      %312 = vperm.xlu0 %311, %v286
      %v313 = vpop.permute.xlu0 %312
      %316 = vset.pattern.permute.xlu0 0
      %317 = vperm.xlu0 %316, %v287
      %v318 = vpop.permute.xlu0 %317
      %321 = vset.pattern.permute.xlu0 0
      %322 = vperm.xlu0 %321, %v288
      %v323 = vpop.permute.xlu0 %322
      %326 = vset.pattern.permute.xlu0 0
      %327 = vperm.xlu0 %326, %v289
      %v328 = vpop.permute.xlu0 %327
      %331 = vset.pattern.permute.xlu0 0
      %332 = vperm.xlu0 %331, %v290
      %v333 = vpop.permute.xlu0 %332
      %336 = vset.pattern.permute.xlu0 0
      %337 = vperm.xlu0 %336, %v291
      %v338 = vpop.permute.xlu0 %337
      %341 = vset.pattern.permute.xlu0 0
      %342 = vperm.xlu0 %341, %v292
      %v343 = vpop.permute.xlu0 %342
      %346 = vset.pattern.permute.xlu0 0
      %347 = vperm.xlu0 %346, %v293
      %v348 = vpop.permute.xlu0 %347
      %v350 = vmul.f32 %v296, %v308
      %v351 = vmul.f32 %v297, %v313
      %v352 = vmul.f32 %v298, %v318
      %v353 = vmul.f32 %v299, %v323
      %v354 = vmul.f32 %v300, %v328
      %v355 = vmul.f32 %v301, %v333
      %v356 = vmul.f32 %v302, %v338
      %v357 = vmul.f32 %v303, %v343
      %v358 = vmul.f32 %v304, %v348
      %359 = vst [vmem:[#allocation2 + $0x1] sm:$0xff] %v350
      %360 = vst [vmem:[#allocation2 + $0x9] sm:$0xff] %v351
      %361 = vst [vmem:[#allocation2 + $0x11] sm:$0xff] %v352
      %362 = vst [vmem:[#allocation2 + $0x19] sm:$0xff] %v353
      %363 = vst [vmem:[#allocation2 + $0x21] sm:$0xff] %v354
      %364 = vst [vmem:[#allocation2 + $0x29] sm:$0xff] %v355
      %365 = vst [vmem:[#allocation2 + $0x31] sm:$0xff] %v356
      %366 = vst [vmem:[#allocation2 + $0x39] sm:$0xff] %v357
      %367 = vst [vmem:[#allocation2 + $0x41] sm:$0xff] %v358
      %v368 = vld [vmem:[#allocation2] sm:$0xff]
      %v369 = vld [vmem:[#allocation2 + $0x8] sm:$0xff]
      %v370 = vld [vmem:[#allocation2 + $0x10] sm:$0xff]
      %v371 = vld [vmem:[#allocation2 + $0x18] sm:$0xff]
      %v372 = vld [vmem:[#allocation2 + $0x20] sm:$0xff]
      %v373 = vld [vmem:[#allocation2 + $0x28] sm:$0xff]
      %v374 = vld [vmem:[#allocation2 + $0x30] sm:$0xff]
      %v375 = vld [vmem:[#allocation2 + $0x38] sm:$0xff]
      %v376 = vld [vmem:[#allocation2 + $0x40] sm:$0xff]
      %v377 = vpack.c.bf16 %v369, %v368
      %v378 = vpack.c.bf16 %v371, %v370
      %v379 = vpack.c.bf16 %v373, %v372
      %v380 = vpack.c.bf16 %v375, %v374
      %v381 = vpack.c.bf16 %v376, %v376
      %v382 = vld [vmem:[%s3] sm:$0xf]
      %v383 = vld [vmem:[%s3 + $0x4] sm:$0xf]
      %v384 = vld [vmem:[%s3 + $0x8] sm:$0xf]
      %v385 = vld [vmem:[%s3 + $0xc] sm:$0xf]
      %v386 = vld [vmem:[%s3 + $0x10] sm:$0xf]
      %v387 = vld [vmem:[%s3 + $0x14] sm:$0xf]
      %v388 = vld [vmem:[%s3 + $0x18] sm:$0xf]
      %v389 = vld [vmem:[%s3 + $0x1c] sm:$0xf]
      %v390 = vld [vmem:[%s3 + $0x20] sm:$0xf]
      %v391 = vld [vmem:[%s3 + $0x24] sm:$0xf]
      %v392 = vld [vmem:[%s3 + $0x28] sm:$0xf]
      %v393 = vld [vmem:[%s3 + $0x2c] sm:$0xf]
      %v394 = vld [vmem:[%s3 + $0x30] sm:$0xf]
      %v395 = vld [vmem:[%s3 + $0x34] sm:$0xf]
      %v396 = vld [vmem:[%s3 + $0x38] sm:$0xf]
      %v397 = vld [vmem:[%s3 + $0x3c] sm:$0xf]
      %v398 = vld [vmem:[%s4] sm:$0x1]
      %v400 = vperm.slane %v398, 0
      %v418 = vunpack.c.l.b16 %v382
      %v419 = vunpack.c.l.b16 %v383
      %v420 = vunpack.c.l.b16 %v384
      %v421 = vunpack.c.l.b16 %v385
      %v422 = vunpack.c.l.b16 %v386
      %v423 = vunpack.c.l.b16 %v387
      %v424 = vunpack.c.l.b16 %v388
      %v425 = vunpack.c.l.b16 %v389
      %v426 = vunpack.c.l.b16 %v390
      %v427 = vunpack.c.l.b16 %v391
      %v428 = vunpack.c.l.b16 %v392
      %v429 = vunpack.c.l.b16 %v393
      %v430 = vunpack.c.l.b16 %v394
      %v431 = vunpack.c.l.b16 %v395
      %v432 = vunpack.c.l.b16 %v396
      %v433 = vunpack.c.l.b16 %v397
      %v434 = vpack.c.b16 %v419, %v418
      %v435 = vpack.c.b16 %v421, %v420
      %v436 = vpack.c.b16 %v423, %v422
      %v437 = vpack.c.b16 %v425, %v424
      %v438 = vpack.c.b16 %v427, %v426
      %v439 = vpack.c.b16 %v429, %v428
      %v440 = vpack.c.b16 %v431, %v430
      %v441 = vpack.c.b16 %v433, %v432
      %450 = vmatpush.bf16.msra.mxu0 %v441
      %451 = vmatpush.bf16.msra.mxu0 %v440
      %452 = vmatpush.bf16.msra.mxu0 %v439
      %453 = vmatpush.bf16.msra.mxu0 %v438
      %454 = vmatpush.bf16.msra.mxu0 %v437
      %455 = vmatpush.bf16.msra.mxu0 %v436
      %456 = vmatpush.bf16.msra.mxu0 %v435
      %457 = vmatpush.bf16.msra.mxu0 %v434
      %458 = vmatmul.bf16.gmra.mxu0 %v377
      %v459 = vpop.f32.mrf.mxu0
      %v460 = vadd.f32 %v400, %v459
      %v461 = vpop.f32.mrf.mxu0
      %v462 = vadd.f32 %v400, %v461
      %463 = vmatmul.bf16.gmra.mxu0 %v378
      %v464 = vpop.f32.mrf.mxu0
      %v465 = vadd.f32 %v400, %v464
      %v466 = vpop.f32.mrf.mxu0
      %v467 = vadd.f32 %v400, %v466
      %468 = vmatmul.bf16.gmra.mxu0 %v379
      %v469 = vpop.f32.mrf.mxu0
      %v470 = vadd.f32 %v400, %v469
      %v471 = vpop.f32.mrf.mxu0
      %v472 = vadd.f32 %v400, %v471
      %473 = vmatmul.bf16.gmra.mxu0 %v380
      %v474 = vpop.f32.mrf.mxu0
      %v475 = vadd.f32 %v400, %v474
      %v476 = vpop.f32.mrf.mxu0
      %v477 = vadd.f32 %v400, %v476
      %478 = vmatmul.bf16.gmra.mxu0 %v381
      %v479 = vpop.f32.mrf.mxu0
      %v480 = vadd.f32 %v400, %v479
      %v481 = vpop.f32.mrf.mxu0
      %482 = vdwg.mxu0
      %v483 = vld [vmem:[#allocation2 + $0x1] sm:$0xff]
      %v484 = vld [vmem:[#allocation2 + $0x9] sm:$0xff]
      %v485 = vld [vmem:[#allocation2 + $0x11] sm:$0xff]
      %v486 = vld [vmem:[#allocation2 + $0x19] sm:$0xff]
      %v487 = vld [vmem:[#allocation2 + $0x21] sm:$0xff]
      %v488 = vld [vmem:[#allocation2 + $0x29] sm:$0xff]
      %v489 = vld [vmem:[#allocation2 + $0x31] sm:$0xff]
      %v490 = vld [vmem:[#allocation2 + $0x39] sm:$0xff]
      %v491 = vld [vmem:[#allocation2 + $0x41] sm:$0xff]
      %v492 = vpack.c.bf16 %v484, %v483
      %v493 = vpack.c.bf16 %v486, %v485
      %v494 = vpack.c.bf16 %v488, %v487
      %v495 = vpack.c.bf16 %v490, %v489
      %v496 = vpack.c.bf16 %v491, %v491
      %s497 = scalar_lea.vmem %s3, 64
      %v498 = vld [vmem:[%s497] sm:$0xf]
      %v499 = vld [vmem:[%s497 + $0x4] sm:$0xf]
      %v500 = vld [vmem:[%s497 + $0x8] sm:$0xf]
      %v501 = vld [vmem:[%s497 + $0xc] sm:$0xf]
      %v502 = vld [vmem:[%s497 + $0x10] sm:$0xf]
      %v503 = vld [vmem:[%s497 + $0x14] sm:$0xf]
      %v504 = vld [vmem:[%s497 + $0x18] sm:$0xf]
      %v505 = vld [vmem:[%s497 + $0x1c] sm:$0xf]
      %v506 = vld [vmem:[%s497 + $0x20] sm:$0xf]
      %v507 = vld [vmem:[%s497 + $0x24] sm:$0xf]
      %v508 = vld [vmem:[%s497 + $0x28] sm:$0xf]
      %v509 = vld [vmem:[%s497 + $0x2c] sm:$0xf]
      %v510 = vld [vmem:[%s497 + $0x30] sm:$0xf]
      %v511 = vld [vmem:[%s497 + $0x34] sm:$0xf]
      %v512 = vld [vmem:[%s497 + $0x38] sm:$0xf]
      %v513 = vld [vmem:[%s497 + $0x3c] sm:$0xf]
      %v530 = vunpack.c.l.b16 %v498
      %v531 = vunpack.c.l.b16 %v499
      %v532 = vunpack.c.l.b16 %v500
      %v533 = vunpack.c.l.b16 %v501
      %v534 = vunpack.c.l.b16 %v502
      %v535 = vunpack.c.l.b16 %v503
      %v536 = vunpack.c.l.b16 %v504
      %v537 = vunpack.c.l.b16 %v505
      %v538 = vunpack.c.l.b16 %v506
      %v539 = vunpack.c.l.b16 %v507
      %v540 = vunpack.c.l.b16 %v508
      %v541 = vunpack.c.l.b16 %v509
      %v542 = vunpack.c.l.b16 %v510
      %v543 = vunpack.c.l.b16 %v511
      %v544 = vunpack.c.l.b16 %v512
      %v545 = vunpack.c.l.b16 %v513
      %v546 = vpack.c.b16 %v531, %v530
      %v547 = vpack.c.b16 %v533, %v532
      %v548 = vpack.c.b16 %v535, %v534
      %v549 = vpack.c.b16 %v537, %v536
      %v550 = vpack.c.b16 %v539, %v538
      %v551 = vpack.c.b16 %v541, %v540
      %v552 = vpack.c.b16 %v543, %v542
      %v553 = vpack.c.b16 %v545, %v544
      %562 = vmatpush.bf16.msra.mxu0 %v553
      %563 = vmatpush.bf16.msra.mxu0 %v552
      %564 = vmatpush.bf16.msra.mxu0 %v551
      %565 = vmatpush.bf16.msra.mxu0 %v550
      %566 = vmatpush.bf16.msra.mxu0 %v549
      %567 = vmatpush.bf16.msra.mxu0 %v548
      %568 = vmatpush.bf16.msra.mxu0 %v547
      %569 = vmatpush.bf16.msra.mxu0 %v546
      %570 = vmatmul.bf16.gmra.mxu0 %v492
      %v571 = vpop.f32.mrf.mxu0
      %v572 = vadd.f32 0.0, %v571
      %v573 = vpop.f32.mrf.mxu0
      %v574 = vadd.f32 0.0, %v573
      %575 = vmatmul.bf16.gmra.mxu0 %v493
      %v576 = vpop.f32.mrf.mxu0
      %v577 = vadd.f32 0.0, %v576
      %v578 = vpop.f32.mrf.mxu0
      %v579 = vadd.f32 0.0, %v578
      %580 = vmatmul.bf16.gmra.mxu0 %v494
      %v581 = vpop.f32.mrf.mxu0
      %v582 = vadd.f32 0.0, %v581
      %v583 = vpop.f32.mrf.mxu0
      %v584 = vadd.f32 0.0, %v583
      %585 = vmatmul.bf16.gmra.mxu0 %v495
      %v586 = vpop.f32.mrf.mxu0
      %v587 = vadd.f32 0.0, %v586
      %v588 = vpop.f32.mrf.mxu0
      %v589 = vadd.f32 0.0, %v588
      %590 = vmatmul.bf16.gmra.mxu0 %v496
      %v591 = vpop.f32.mrf.mxu0
      %v592 = vadd.f32 0.0, %v591
      %v593 = vpop.f32.mrf.mxu0
      %594 = vdwg.mxu0
      %v595 = vadd.f32 %v460, %v572
      %v596 = vadd.f32 %v462, %v574
      %v597 = vadd.f32 %v465, %v577
      %v598 = vadd.f32 %v467, %v579
      %v599 = vadd.f32 %v470, %v582
      %v600 = vadd.f32 %v472, %v584
      %v601 = vadd.f32 %v475, %v587
      %v602 = vadd.f32 %v477, %v589
      %v603 = vadd.f32 %v480, %v592
      %v604 = vld [vmem:[#allocation2 + $0x2] sm:$0xff]
      %v605 = vld [vmem:[#allocation2 + $0xa] sm:$0xff]
      %v606 = vld [vmem:[#allocation2 + $0x12] sm:$0xff]
      %v607 = vld [vmem:[#allocation2 + $0x1a] sm:$0xff]
      %v608 = vld [vmem:[#allocation2 + $0x22] sm:$0xff]
      %v609 = vld [vmem:[#allocation2 + $0x2a] sm:$0xff]
      %v610 = vld [vmem:[#allocation2 + $0x32] sm:$0xff]
      %v611 = vld [vmem:[#allocation2 + $0x3a] sm:$0xff]
      %v612 = vld [vmem:[#allocation2 + $0x42] sm:$0xff]
      %v613 = vpack.c.bf16 %v605, %v604
      %v614 = vpack.c.bf16 %v607, %v606
      %v615 = vpack.c.bf16 %v609, %v608
      %v616 = vpack.c.bf16 %v611, %v610
      %v617 = vpack.c.bf16 %v612, %v612
      %s618 = scalar_lea.vmem %s3, 128
      %v619 = vld [vmem:[%s618] sm:$0xf]
      %v620 = vld [vmem:[%s618 + $0x4] sm:$0xf]
      %v621 = vld [vmem:[%s618 + $0x8] sm:$0xf]
      %v622 = vld [vmem:[%s618 + $0xc] sm:$0xf]
      %v623 = vld [vmem:[%s618 + $0x10] sm:$0xf]
      %v624 = vld [vmem:[%s618 + $0x14] sm:$0xf]
      %v625 = vld [vmem:[%s618 + $0x18] sm:$0xf]
      %v626 = vld [vmem:[%s618 + $0x1c] sm:$0xf]
      %v627 = vld [vmem:[%s618 + $0x20] sm:$0xf]
      %v628 = vld [vmem:[%s618 + $0x24] sm:$0xf]
      %v629 = vld [vmem:[%s618 + $0x28] sm:$0xf]
      %v630 = vld [vmem:[%s618 + $0x2c] sm:$0xf]
      %v631 = vld [vmem:[%s618 + $0x30] sm:$0xf]
      %v632 = vld [vmem:[%s618 + $0x34] sm:$0xf]
      %v633 = vld [vmem:[%s618 + $0x38] sm:$0xf]
      %v634 = vld [vmem:[%s618 + $0x3c] sm:$0xf]
      %v651 = vunpack.c.l.b16 %v619
      %v652 = vunpack.c.l.b16 %v620
      %v653 = vunpack.c.l.b16 %v621
      %v654 = vunpack.c.l.b16 %v622
      %v655 = vunpack.c.l.b16 %v623
      %v656 = vunpack.c.l.b16 %v624
      %v657 = vunpack.c.l.b16 %v625
      %v658 = vunpack.c.l.b16 %v626
      %v659 = vunpack.c.l.b16 %v627
      %v660 = vunpack.c.l.b16 %v628
      %v661 = vunpack.c.l.b16 %v629
      %v662 = vunpack.c.l.b16 %v630
      %v663 = vunpack.c.l.b16 %v631
      %v664 = vunpack.c.l.b16 %v632
      %v665 = vunpack.c.l.b16 %v633
      %v666 = vunpack.c.l.b16 %v634
      %v667 = vpack.c.b16 %v652, %v651
      %v668 = vpack.c.b16 %v654, %v653
      %v669 = vpack.c.b16 %v656, %v655
      %v670 = vpack.c.b16 %v658, %v657
      %v671 = vpack.c.b16 %v660, %v659
      %v672 = vpack.c.b16 %v662, %v661
      %v673 = vpack.c.b16 %v664, %v663
      %v674 = vpack.c.b16 %v666, %v665
      %683 = vmatpush.bf16.msra.mxu0 %v674
      %684 = vmatpush.bf16.msra.mxu0 %v673
      %685 = vmatpush.bf16.msra.mxu0 %v672
      %686 = vmatpush.bf16.msra.mxu0 %v671
      %687 = vmatpush.bf16.msra.mxu0 %v670
      %688 = vmatpush.bf16.msra.mxu0 %v669
      %689 = vmatpush.bf16.msra.mxu0 %v668
      %690 = vmatpush.bf16.msra.mxu0 %v667
      %691 = vmatmul.bf16.gmra.mxu0 %v613
      %v692 = vpop.f32.mrf.mxu0
      %v693 = vadd.f32 0.0, %v692
      %v694 = vpop.f32.mrf.mxu0
      %v695 = vadd.f32 0.0, %v694
      %696 = vmatmul.bf16.gmra.mxu0 %v614
      %v697 = vpop.f32.mrf.mxu0
      %v698 = vadd.f32 0.0, %v697
      %v699 = vpop.f32.mrf.mxu0
      %v700 = vadd.f32 0.0, %v699
      %701 = vmatmul.bf16.gmra.mxu0 %v615
      %v702 = vpop.f32.mrf.mxu0
      %v703 = vadd.f32 0.0, %v702
      %v704 = vpop.f32.mrf.mxu0
      %v705 = vadd.f32 0.0, %v704
      %706 = vmatmul.bf16.gmra.mxu0 %v616
      %v707 = vpop.f32.mrf.mxu0
      %v708 = vadd.f32 0.0, %v707
      %v709 = vpop.f32.mrf.mxu0
      %v710 = vadd.f32 0.0, %v709
      %711 = vmatmul.bf16.gmra.mxu0 %v617
      %v712 = vpop.f32.mrf.mxu0
      %v713 = vadd.f32 0.0, %v712
      %v714 = vpop.f32.mrf.mxu0
      %715 = vdwg.mxu0
      %v716 = vadd.f32 %v595, %v693
      %v717 = vadd.f32 %v596, %v695
      %v718 = vadd.f32 %v597, %v698
      %v719 = vadd.f32 %v598, %v700
      %v720 = vadd.f32 %v599, %v703
      %v721 = vadd.f32 %v600, %v705
      %v722 = vadd.f32 %v601, %v708
      %v723 = vadd.f32 %v602, %v710
      %v724 = vadd.f32 %v603, %v713
      %v725 = vmax.f32 %v716, 0.0
      %v726 = vmax.f32 %v717, 0.0
      %v727 = vmax.f32 %v718, 0.0
      %v728 = vmax.f32 %v719, 0.0
      %v729 = vmax.f32 %v720, 0.0
      %v730 = vmax.f32 %v721, 0.0
      %v731 = vmax.f32 %v722, 0.0
      %v732 = vmax.f32 %v723, 0.0
      %v733 = vmax.f32 %v724, 0.0
      %v734 = vmul.f32 %v725, %v308
      %v735 = vmul.f32 %v726, %v313
      %v736 = vmul.f32 %v727, %v318
      %v737 = vmul.f32 %v728, %v323
      %v738 = vmul.f32 %v729, %v328
      %v739 = vmul.f32 %v730, %v333
      %v740 = vmul.f32 %v731, %v338
      %v741 = vmul.f32 %v732, %v343
      %v742 = vmul.f32 %v733, %v348
      %743 = vst [vmem:[#allocation2 + $0x1] sm:$0xff] %v734
      %744 = vst [vmem:[#allocation2 + $0x9] sm:$0xff] %v735
      %745 = vst [vmem:[#allocation2 + $0x11] sm:$0xff] %v736
      %746 = vst [vmem:[#allocation2 + $0x19] sm:$0xff] %v737
      %747 = vst [vmem:[#allocation2 + $0x21] sm:$0xff] %v738
      %748 = vst [vmem:[#allocation2 + $0x29] sm:$0xff] %v739
      %749 = vst [vmem:[#allocation2 + $0x31] sm:$0xff] %v740
      %750 = vst [vmem:[#allocation2 + $0x39] sm:$0xff] %v741
      %751 = vst [vmem:[#allocation2 + $0x41] sm:$0xff] %v742
      %v752 = vld [vmem:[#allocation2] sm:$0xff]
      %v753 = vld [vmem:[#allocation2 + $0x8] sm:$0xff]
      %v754 = vld [vmem:[#allocation2 + $0x10] sm:$0xff]
      %v755 = vld [vmem:[#allocation2 + $0x18] sm:$0xff]
      %v756 = vld [vmem:[#allocation2 + $0x20] sm:$0xff]
      %v757 = vld [vmem:[#allocation2 + $0x28] sm:$0xff]
      %v758 = vld [vmem:[#allocation2 + $0x30] sm:$0xff]
      %v759 = vld [vmem:[#allocation2 + $0x38] sm:$0xff]
      %v760 = vld [vmem:[#allocation2 + $0x40] sm:$0xff]
      %v761 = vpack.c.bf16 %v753, %v752
      %v762 = vpack.c.bf16 %v755, %v754
      %v763 = vpack.c.bf16 %v757, %v756
      %v764 = vpack.c.bf16 %v759, %v758
      %v765 = vpack.c.bf16 %v760, %v760
      %s766 = scalar_lea.vmem %s3, 192
      %v767 = vld [vmem:[%s766] sm:$0xf]
      %v768 = vld [vmem:[%s766 + $0x4] sm:$0xf]
      %v769 = vld [vmem:[%s766 + $0x8] sm:$0xf]
      %v770 = vld [vmem:[%s766 + $0xc] sm:$0xf]
      %v771 = vld [vmem:[%s766 + $0x10] sm:$0xf]
      %v772 = vld [vmem:[%s766 + $0x14] sm:$0xf]
      %v773 = vld [vmem:[%s766 + $0x18] sm:$0xf]
      %v774 = vld [vmem:[%s766 + $0x1c] sm:$0xf]
      %v775 = vld [vmem:[%s766 + $0x20] sm:$0xf]
      %v776 = vld [vmem:[%s766 + $0x24] sm:$0xf]
      %v777 = vld [vmem:[%s766 + $0x28] sm:$0xf]
      %v778 = vld [vmem:[%s766 + $0x2c] sm:$0xf]
      %v779 = vld [vmem:[%s766 + $0x30] sm:$0xf]
      %v780 = vld [vmem:[%s766 + $0x34] sm:$0xf]
      %v781 = vld [vmem:[%s766 + $0x38] sm:$0xf]
      %v782 = vld [vmem:[%s766 + $0x3c] sm:$0xf]
      %s783 = scalar_lea.vmem %s4, 1
      %v784 = vld [vmem:[%s783] sm:$0x1]
      %v786 = vperm.slane %v784, 0
      %v804 = vunpack.c.l.b16 %v767
      %v805 = vunpack.c.l.b16 %v768
      %v806 = vunpack.c.l.b16 %v769
      %v807 = vunpack.c.l.b16 %v770
      %v808 = vunpack.c.l.b16 %v771
      %v809 = vunpack.c.l.b16 %v772
      %v810 = vunpack.c.l.b16 %v773
      %v811 = vunpack.c.l.b16 %v774
      %v812 = vunpack.c.l.b16 %v775
      %v813 = vunpack.c.l.b16 %v776
      %v814 = vunpack.c.l.b16 %v777
      %v815 = vunpack.c.l.b16 %v778
      %v816 = vunpack.c.l.b16 %v779
      %v817 = vunpack.c.l.b16 %v780
      %v818 = vunpack.c.l.b16 %v781
      %v819 = vunpack.c.l.b16 %v782
      %v820 = vpack.c.b16 %v805, %v804
      %v821 = vpack.c.b16 %v807, %v806
      %v822 = vpack.c.b16 %v809, %v808
      %v823 = vpack.c.b16 %v811, %v810
      %v824 = vpack.c.b16 %v813, %v812
      %v825 = vpack.c.b16 %v815, %v814
      %v826 = vpack.c.b16 %v817, %v816
      %v827 = vpack.c.b16 %v819, %v818
      %836 = vmatpush.bf16.msra.mxu0 %v827
      %837 = vmatpush.bf16.msra.mxu0 %v826
      %838 = vmatpush.bf16.msra.mxu0 %v825
      %839 = vmatpush.bf16.msra.mxu0 %v824
      %840 = vmatpush.bf16.msra.mxu0 %v823
      %841 = vmatpush.bf16.msra.mxu0 %v822
      %842 = vmatpush.bf16.msra.mxu0 %v821
      %843 = vmatpush.bf16.msra.mxu0 %v820
      %844 = vmatmul.bf16.gmra.mxu0 %v761
      %v845 = vpop.f32.mrf.mxu0
      %v846 = vadd.f32 %v786, %v845
      %v847 = vpop.f32.mrf.mxu0
      %v848 = vadd.f32 %v786, %v847
      %849 = vmatmul.bf16.gmra.mxu0 %v762
      %v850 = vpop.f32.mrf.mxu0
      %v851 = vadd.f32 %v786, %v850
      %v852 = vpop.f32.mrf.mxu0
      %v853 = vadd.f32 %v786, %v852
      %854 = vmatmul.bf16.gmra.mxu0 %v763
      %v855 = vpop.f32.mrf.mxu0
      %v856 = vadd.f32 %v786, %v855
      %v857 = vpop.f32.mrf.mxu0
      %v858 = vadd.f32 %v786, %v857
      %859 = vmatmul.bf16.gmra.mxu0 %v764
      %v860 = vpop.f32.mrf.mxu0
      %v861 = vadd.f32 %v786, %v860
      %v862 = vpop.f32.mrf.mxu0
      %v863 = vadd.f32 %v786, %v862
      %864 = vmatmul.bf16.gmra.mxu0 %v765
      %v865 = vpop.f32.mrf.mxu0
      %v866 = vadd.f32 %v786, %v865
      %v867 = vpop.f32.mrf.mxu0
      %868 = vdwg.mxu0
      %v869 = vld [vmem:[#allocation2 + $0x1] sm:$0xff]
      %v870 = vld [vmem:[#allocation2 + $0x9] sm:$0xff]
      %v871 = vld [vmem:[#allocation2 + $0x11] sm:$0xff]
      %v872 = vld [vmem:[#allocation2 + $0x19] sm:$0xff]
      %v873 = vld [vmem:[#allocation2 + $0x21] sm:$0xff]
      %v874 = vld [vmem:[#allocation2 + $0x29] sm:$0xff]
      %v875 = vld [vmem:[#allocation2 + $0x31] sm:$0xff]
      %v876 = vld [vmem:[#allocation2 + $0x39] sm:$0xff]
      %v877 = vld [vmem:[#allocation2 + $0x41] sm:$0xff]
      %v878 = vpack.c.bf16 %v870, %v869
      %v879 = vpack.c.bf16 %v872, %v871
      %v880 = vpack.c.bf16 %v874, %v873
      %v881 = vpack.c.bf16 %v876, %v875
      %v882 = vpack.c.bf16 %v877, %v877
      %s883 = scalar_lea.vmem %s3, 256
      %v884 = vld [vmem:[%s883] sm:$0xf]
      %v885 = vld [vmem:[%s883 + $0x4] sm:$0xf]
      %v886 = vld [vmem:[%s883 + $0x8] sm:$0xf]
      %v887 = vld [vmem:[%s883 + $0xc] sm:$0xf]
      %v888 = vld [vmem:[%s883 + $0x10] sm:$0xf]
      %v889 = vld [vmem:[%s883 + $0x14] sm:$0xf]
      %v890 = vld [vmem:[%s883 + $0x18] sm:$0xf]
      %v891 = vld [vmem:[%s883 + $0x1c] sm:$0xf]
      %v892 = vld [vmem:[%s883 + $0x20] sm:$0xf]
      %v893 = vld [vmem:[%s883 + $0x24] sm:$0xf]
      %v894 = vld [vmem:[%s883 + $0x28] sm:$0xf]
      %v895 = vld [vmem:[%s883 + $0x2c] sm:$0xf]
      %v896 = vld [vmem:[%s883 + $0x30] sm:$0xf]
      %v897 = vld [vmem:[%s883 + $0x34] sm:$0xf]
      %v898 = vld [vmem:[%s883 + $0x38] sm:$0xf]
      %v899 = vld [vmem:[%s883 + $0x3c] sm:$0xf]
      %v916 = vunpack.c.l.b16 %v884
      %v917 = vunpack.c.l.b16 %v885
      %v918 = vunpack.c.l.b16 %v886
      %v919 = vunpack.c.l.b16 %v887
      %v920 = vunpack.c.l.b16 %v888
      %v921 = vunpack.c.l.b16 %v889
      %v922 = vunpack.c.l.b16 %v890
      %v923 = vunpack.c.l.b16 %v891
      %v924 = vunpack.c.l.b16 %v892
      %v925 = vunpack.c.l.b16 %v893
      %v926 = vunpack.c.l.b16 %v894
      %v927 = vunpack.c.l.b16 %v895
      %v928 = vunpack.c.l.b16 %v896
      %v929 = vunpack.c.l.b16 %v897
      %v930 = vunpack.c.l.b16 %v898
      %v931 = vunpack.c.l.b16 %v899
      %v932 = vpack.c.b16 %v917, %v916
      %v933 = vpack.c.b16 %v919, %v918
      %v934 = vpack.c.b16 %v921, %v920
      %v935 = vpack.c.b16 %v923, %v922
      %v936 = vpack.c.b16 %v925, %v924
      %v937 = vpack.c.b16 %v927, %v926
      %v938 = vpack.c.b16 %v929, %v928
      %v939 = vpack.c.b16 %v931, %v930
      %948 = vmatpush.bf16.msra.mxu0 %v939
      %949 = vmatpush.bf16.msra.mxu0 %v938
      %950 = vmatpush.bf16.msra.mxu0 %v937
      %951 = vmatpush.bf16.msra.mxu0 %v936
      %952 = vmatpush.bf16.msra.mxu0 %v935
      %953 = vmatpush.bf16.msra.mxu0 %v934
      %954 = vmatpush.bf16.msra.mxu0 %v933
      %955 = vmatpush.bf16.msra.mxu0 %v932
      %956 = vmatmul.bf16.gmra.mxu0 %v878
      %v957 = vpop.f32.mrf.mxu0
      %v958 = vadd.f32 0.0, %v957
      %v959 = vpop.f32.mrf.mxu0
      %v960 = vadd.f32 0.0, %v959
      %961 = vmatmul.bf16.gmra.mxu0 %v879
      %v962 = vpop.f32.mrf.mxu0
      %v963 = vadd.f32 0.0, %v962
      %v964 = vpop.f32.mrf.mxu0
      %v965 = vadd.f32 0.0, %v964
      %966 = vmatmul.bf16.gmra.mxu0 %v880
      %v967 = vpop.f32.mrf.mxu0
      %v968 = vadd.f32 0.0, %v967
      %v969 = vpop.f32.mrf.mxu0
      %v970 = vadd.f32 0.0, %v969
      %971 = vmatmul.bf16.gmra.mxu0 %v881
      %v972 = vpop.f32.mrf.mxu0
      %v973 = vadd.f32 0.0, %v972
      %v974 = vpop.f32.mrf.mxu0
      %v975 = vadd.f32 0.0, %v974
      %976 = vmatmul.bf16.gmra.mxu0 %v882
      %v977 = vpop.f32.mrf.mxu0
      %v978 = vadd.f32 0.0, %v977
      %v979 = vpop.f32.mrf.mxu0
      %980 = vdwg.mxu0
      %v981 = vadd.f32 %v846, %v958
      %v982 = vadd.f32 %v848, %v960
      %v983 = vadd.f32 %v851, %v963
      %v984 = vadd.f32 %v853, %v965
      %v985 = vadd.f32 %v856, %v968
      %v986 = vadd.f32 %v858, %v970
      %v987 = vadd.f32 %v861, %v973
      %v988 = vadd.f32 %v863, %v975
      %v989 = vadd.f32 %v866, %v978
      %v990 = vld [vmem:[#allocation2 + $0x2] sm:$0xff]
      %v991 = vld [vmem:[#allocation2 + $0xa] sm:$0xff]
      %v992 = vld [vmem:[#allocation2 + $0x12] sm:$0xff]
      %v993 = vld [vmem:[#allocation2 + $0x1a] sm:$0xff]
      %v994 = vld [vmem:[#allocation2 + $0x22] sm:$0xff]
      %v995 = vld [vmem:[#allocation2 + $0x2a] sm:$0xff]
      %v996 = vld [vmem:[#allocation2 + $0x32] sm:$0xff]
      %v997 = vld [vmem:[#allocation2 + $0x3a] sm:$0xff]
      %v998 = vld [vmem:[#allocation2 + $0x42] sm:$0xff]
      %v999 = vpack.c.bf16 %v991, %v990
      %v1000 = vpack.c.bf16 %v993, %v992
      %v1001 = vpack.c.bf16 %v995, %v994
      %v1002 = vpack.c.bf16 %v997, %v996
      %v1003 = vpack.c.bf16 %v998, %v998
      %s1004 = scalar_lea.vmem %s3, 320
      %v1005 = vld [vmem:[%s1004] sm:$0xf]
      %v1006 = vld [vmem:[%s1004 + $0x4] sm:$0xf]
      %v1007 = vld [vmem:[%s1004 + $0x8] sm:$0xf]
      %v1008 = vld [vmem:[%s1004 + $0xc] sm:$0xf]
      %v1009 = vld [vmem:[%s1004 + $0x10] sm:$0xf]
      %v1010 = vld [vmem:[%s1004 + $0x14] sm:$0xf]
      %v1011 = vld [vmem:[%s1004 + $0x18] sm:$0xf]
      %v1012 = vld [vmem:[%s1004 + $0x1c] sm:$0xf]
      %v1013 = vld [vmem:[%s1004 + $0x20] sm:$0xf]
      %v1014 = vld [vmem:[%s1004 + $0x24] sm:$0xf]
      %v1015 = vld [vmem:[%s1004 + $0x28] sm:$0xf]
      %v1016 = vld [vmem:[%s1004 + $0x2c] sm:$0xf]
      %v1017 = vld [vmem:[%s1004 + $0x30] sm:$0xf]
      %v1018 = vld [vmem:[%s1004 + $0x34] sm:$0xf]
      %v1019 = vld [vmem:[%s1004 + $0x38] sm:$0xf]
      %v1020 = vld [vmem:[%s1004 + $0x3c] sm:$0xf]
      %v1037 = vunpack.c.l.b16 %v1005
      %v1038 = vunpack.c.l.b16 %v1006
      %v1039 = vunpack.c.l.b16 %v1007
      %v1040 = vunpack.c.l.b16 %v1008
      %v1041 = vunpack.c.l.b16 %v1009
      %v1042 = vunpack.c.l.b16 %v1010
      %v1043 = vunpack.c.l.b16 %v1011
      %v1044 = vunpack.c.l.b16 %v1012
      %v1045 = vunpack.c.l.b16 %v1013
      %v1046 = vunpack.c.l.b16 %v1014
      %v1047 = vunpack.c.l.b16 %v1015
      %v1048 = vunpack.c.l.b16 %v1016
      %v1049 = vunpack.c.l.b16 %v1017
      %v1050 = vunpack.c.l.b16 %v1018
      %v1051 = vunpack.c.l.b16 %v1019
      %v1052 = vunpack.c.l.b16 %v1020
      %v1053 = vpack.c.b16 %v1038, %v1037
      %v1054 = vpack.c.b16 %v1040, %v1039
      %v1055 = vpack.c.b16 %v1042, %v1041
      %v1056 = vpack.c.b16 %v1044, %v1043
      %v1057 = vpack.c.b16 %v1046, %v1045
      %v1058 = vpack.c.b16 %v1048, %v1047
      %v1059 = vpack.c.b16 %v1050, %v1049
      %v1060 = vpack.c.b16 %v1052, %v1051
      %1069 = vmatpush.bf16.msra.mxu0 %v1060
      %1070 = vmatpush.bf16.msra.mxu0 %v1059
      %1071 = vmatpush.bf16.msra.mxu0 %v1058
      %1072 = vmatpush.bf16.msra.mxu0 %v1057
      %1073 = vmatpush.bf16.msra.mxu0 %v1056
      %1074 = vmatpush.bf16.msra.mxu0 %v1055
      %1075 = vmatpush.bf16.msra.mxu0 %v1054
      %1076 = vmatpush.bf16.msra.mxu0 %v1053
      %1077 = vmatmul.bf16.gmra.mxu0 %v999
      %v1078 = vpop.f32.mrf.mxu0
      %v1079 = vadd.f32 0.0, %v1078
      %v1080 = vpop.f32.mrf.mxu0
      %v1081 = vadd.f32 0.0, %v1080
      %1082 = vmatmul.bf16.gmra.mxu0 %v1000
      %v1083 = vpop.f32.mrf.mxu0
      %v1084 = vadd.f32 0.0, %v1083
      %v1085 = vpop.f32.mrf.mxu0
      %v1086 = vadd.f32 0.0, %v1085
      %1087 = vmatmul.bf16.gmra.mxu0 %v1001
      %v1088 = vpop.f32.mrf.mxu0
      %v1089 = vadd.f32 0.0, %v1088
      %v1090 = vpop.f32.mrf.mxu0
      %v1091 = vadd.f32 0.0, %v1090
      %1092 = vmatmul.bf16.gmra.mxu0 %v1002
      %v1093 = vpop.f32.mrf.mxu0
      %v1094 = vadd.f32 0.0, %v1093
      %v1095 = vpop.f32.mrf.mxu0
      %v1096 = vadd.f32 0.0, %v1095
      %1097 = vmatmul.bf16.gmra.mxu0 %v1003
      %v1098 = vpop.f32.mrf.mxu0
      %v1099 = vadd.f32 0.0, %v1098
      %v1100 = vpop.f32.mrf.mxu0
      %1101 = vdwg.mxu0
      %v1102 = vadd.f32 %v981, %v1079
      %v1103 = vadd.f32 %v982, %v1081
      %v1104 = vadd.f32 %v983, %v1084
      %v1105 = vadd.f32 %v984, %v1086
      %v1106 = vadd.f32 %v985, %v1089
      %v1107 = vadd.f32 %v986, %v1091
      %v1108 = vadd.f32 %v987, %v1094
      %v1109 = vadd.f32 %v988, %v1096
      %v1110 = vadd.f32 %v989, %v1099
      %v1111 = vmax.f32 %v1102, 0.0
      %v1112 = vmax.f32 %v1103, 0.0
      %v1113 = vmax.f32 %v1104, 0.0
      %v1114 = vmax.f32 %v1105, 0.0
      %v1115 = vmax.f32 %v1106, 0.0
      %v1116 = vmax.f32 %v1107, 0.0
      %v1117 = vmax.f32 %v1108, 0.0
      %v1118 = vmax.f32 %v1109, 0.0
      %v1119 = vmax.f32 %v1110, 0.0
      %v1120 = vadd.f32 %v725, %v1111
      %v1121 = vadd.f32 %v726, %v1112
      %v1122 = vadd.f32 %v727, %v1113
      %v1123 = vadd.f32 %v728, %v1114
      %v1124 = vadd.f32 %v729, %v1115
      %v1125 = vadd.f32 %v730, %v1116
      %v1126 = vadd.f32 %v731, %v1117
      %v1127 = vadd.f32 %v732, %v1118
      %v1128 = vadd.f32 %v733, %v1119
      %v1129 = vmul.f32 %v1120, %v308
      %v1130 = vmul.f32 %v1121, %v313
      %v1131 = vmul.f32 %v1122, %v318
      %v1132 = vmul.f32 %v1123, %v323
      %v1133 = vmul.f32 %v1124, %v328
      %v1134 = vmul.f32 %v1125, %v333
      %v1135 = vmul.f32 %v1126, %v338
      %v1136 = vmul.f32 %v1127, %v343
      %v1137 = vmul.f32 %v1128, %v348
      %1138 = vst [vmem:[#allocation2 + $0x1] sm:$0xff] %v1129
      %1139 = vst [vmem:[#allocation2 + $0x9] sm:$0xff] %v1130
      %1140 = vst [vmem:[#allocation2 + $0x11] sm:$0xff] %v1131
      %1141 = vst [vmem:[#allocation2 + $0x19] sm:$0xff] %v1132
      %1142 = vst [vmem:[#allocation2 + $0x21] sm:$0xff] %v1133
      %1143 = vst [vmem:[#allocation2 + $0x29] sm:$0xff] %v1134
      %1144 = vst [vmem:[#allocation2 + $0x31] sm:$0xff] %v1135
      %1145 = vst [vmem:[#allocation2 + $0x39] sm:$0xff] %v1136
      %1146 = vst [vmem:[#allocation2 + $0x41] sm:$0xff] %v1137
      %v1147 = vld [vmem:[#allocation2] sm:$0xff]
      %v1148 = vld [vmem:[#allocation2 + $0x8] sm:$0xff]
      %v1149 = vld [vmem:[#allocation2 + $0x10] sm:$0xff]
      %v1150 = vld [vmem:[#allocation2 + $0x18] sm:$0xff]
      %v1151 = vld [vmem:[#allocation2 + $0x20] sm:$0xff]
      %v1152 = vld [vmem:[#allocation2 + $0x28] sm:$0xff]
      %v1153 = vld [vmem:[#allocation2 + $0x30] sm:$0xff]
      %v1154 = vld [vmem:[#allocation2 + $0x38] sm:$0xff]
      %v1155 = vld [vmem:[#allocation2 + $0x40] sm:$0xff]
      %v1156 = vpack.c.bf16 %v1148, %v1147
      %v1157 = vpack.c.bf16 %v1150, %v1149
      %v1158 = vpack.c.bf16 %v1152, %v1151
      %v1159 = vpack.c.bf16 %v1154, %v1153
      %v1160 = vpack.c.bf16 %v1155, %v1155
      %s1161 = scalar_lea.vmem %s3, 384
      %v1162 = vld [vmem:[%s1161] sm:$0xf]
      %v1163 = vld [vmem:[%s1161 + $0x4] sm:$0xf]
      %v1164 = vld [vmem:[%s1161 + $0x8] sm:$0xf]
      %v1165 = vld [vmem:[%s1161 + $0xc] sm:$0xf]
      %v1166 = vld [vmem:[%s1161 + $0x10] sm:$0xf]
      %v1167 = vld [vmem:[%s1161 + $0x14] sm:$0xf]
      %v1168 = vld [vmem:[%s1161 + $0x18] sm:$0xf]
      %v1169 = vld [vmem:[%s1161 + $0x1c] sm:$0xf]
      %v1170 = vld [vmem:[%s1161 + $0x20] sm:$0xf]
      %v1171 = vld [vmem:[%s1161 + $0x24] sm:$0xf]
      %v1172 = vld [vmem:[%s1161 + $0x28] sm:$0xf]
      %v1173 = vld [vmem:[%s1161 + $0x2c] sm:$0xf]
      %v1174 = vld [vmem:[%s1161 + $0x30] sm:$0xf]
      %v1175 = vld [vmem:[%s1161 + $0x34] sm:$0xf]
      %v1176 = vld [vmem:[%s1161 + $0x38] sm:$0xf]
      %v1177 = vld [vmem:[%s1161 + $0x3c] sm:$0xf]
      %s1178 = scalar_lea.vmem %s4, 2
      %v1179 = vld [vmem:[%s1178] sm:$0x1]
      %v1181 = vperm.slane %v1179, 0
      %v1199 = vunpack.c.l.b16 %v1162
      %v1200 = vunpack.c.l.b16 %v1163
      %v1201 = vunpack.c.l.b16 %v1164
      %v1202 = vunpack.c.l.b16 %v1165
      %v1203 = vunpack.c.l.b16 %v1166
      %v1204 = vunpack.c.l.b16 %v1167
      %v1205 = vunpack.c.l.b16 %v1168
      %v1206 = vunpack.c.l.b16 %v1169
      %v1207 = vunpack.c.l.b16 %v1170
      %v1208 = vunpack.c.l.b16 %v1171
      %v1209 = vunpack.c.l.b16 %v1172
      %v1210 = vunpack.c.l.b16 %v1173
      %v1211 = vunpack.c.l.b16 %v1174
      %v1212 = vunpack.c.l.b16 %v1175
      %v1213 = vunpack.c.l.b16 %v1176
      %v1214 = vunpack.c.l.b16 %v1177
      %v1215 = vpack.c.b16 %v1200, %v1199
      %v1216 = vpack.c.b16 %v1202, %v1201
      %v1217 = vpack.c.b16 %v1204, %v1203
      %v1218 = vpack.c.b16 %v1206, %v1205
      %v1219 = vpack.c.b16 %v1208, %v1207
      %v1220 = vpack.c.b16 %v1210, %v1209
      %v1221 = vpack.c.b16 %v1212, %v1211
      %v1222 = vpack.c.b16 %v1214, %v1213
      %1231 = vmatpush.bf16.msra.mxu0 %v1222
      %1232 = vmatpush.bf16.msra.mxu0 %v1221
      %1233 = vmatpush.bf16.msra.mxu0 %v1220
      %1234 = vmatpush.bf16.msra.mxu0 %v1219
      %1235 = vmatpush.bf16.msra.mxu0 %v1218
      %1236 = vmatpush.bf16.msra.mxu0 %v1217
      %1237 = vmatpush.bf16.msra.mxu0 %v1216
      %1238 = vmatpush.bf16.msra.mxu0 %v1215
      %1239 = vmatmul.bf16.gmra.mxu0 %v1156
      %v1240 = vpop.f32.mrf.mxu0
      %v1241 = vadd.f32 %v1181, %v1240
      %v1242 = vpop.f32.mrf.mxu0
      %v1243 = vadd.f32 %v1181, %v1242
      %1244 = vmatmul.bf16.gmra.mxu0 %v1157
      %v1245 = vpop.f32.mrf.mxu0
      %v1246 = vadd.f32 %v1181, %v1245
      %v1247 = vpop.f32.mrf.mxu0
      %v1248 = vadd.f32 %v1181, %v1247
      %1249 = vmatmul.bf16.gmra.mxu0 %v1158
      %v1250 = vpop.f32.mrf.mxu0
      %v1251 = vadd.f32 %v1181, %v1250
      %v1252 = vpop.f32.mrf.mxu0
      %v1253 = vadd.f32 %v1181, %v1252
      %1254 = vmatmul.bf16.gmra.mxu0 %v1159
      %v1255 = vpop.f32.mrf.mxu0
      %v1256 = vadd.f32 %v1181, %v1255
      %v1257 = vpop.f32.mrf.mxu0
      %v1258 = vadd.f32 %v1181, %v1257
      %1259 = vmatmul.bf16.gmra.mxu0 %v1160
      %v1260 = vpop.f32.mrf.mxu0
      %v1261 = vadd.f32 %v1181, %v1260
      %v1262 = vpop.f32.mrf.mxu0
      %1263 = vdwg.mxu0
      %v1264 = vld [vmem:[#allocation2 + $0x1] sm:$0xff]
      %v1265 = vld [vmem:[#allocation2 + $0x9] sm:$0xff]
      %v1266 = vld [vmem:[#allocation2 + $0x11] sm:$0xff]
      %v1267 = vld [vmem:[#allocation2 + $0x19] sm:$0xff]
      %v1268 = vld [vmem:[#allocation2 + $0x21] sm:$0xff]
      %v1269 = vld [vmem:[#allocation2 + $0x29] sm:$0xff]
      %v1270 = vld [vmem:[#allocation2 + $0x31] sm:$0xff]
      %v1271 = vld [vmem:[#allocation2 + $0x39] sm:$0xff]
      %v1272 = vld [vmem:[#allocation2 + $0x41] sm:$0xff]
      %v1273 = vpack.c.bf16 %v1265, %v1264
      %v1274 = vpack.c.bf16 %v1267, %v1266
      %v1275 = vpack.c.bf16 %v1269, %v1268
      %v1276 = vpack.c.bf16 %v1271, %v1270
      %v1277 = vpack.c.bf16 %v1272, %v1272
      %s1278 = scalar_lea.vmem %s3, 448
      %v1279 = vld [vmem:[%s1278] sm:$0xf]
      %v1280 = vld [vmem:[%s1278 + $0x4] sm:$0xf]
      %v1281 = vld [vmem:[%s1278 + $0x8] sm:$0xf]
      %v1282 = vld [vmem:[%s1278 + $0xc] sm:$0xf]
      %v1283 = vld [vmem:[%s1278 + $0x10] sm:$0xf]
      %v1284 = vld [vmem:[%s1278 + $0x14] sm:$0xf]
      %v1285 = vld [vmem:[%s1278 + $0x18] sm:$0xf]
      %v1286 = vld [vmem:[%s1278 + $0x1c] sm:$0xf]
      %v1287 = vld [vmem:[%s1278 + $0x20] sm:$0xf]
      %v1288 = vld [vmem:[%s1278 + $0x24] sm:$0xf]
      %v1289 = vld [vmem:[%s1278 + $0x28] sm:$0xf]
      %v1290 = vld [vmem:[%s1278 + $0x2c] sm:$0xf]
      %v1291 = vld [vmem:[%s1278 + $0x30] sm:$0xf]
      %v1292 = vld [vmem:[%s1278 + $0x34] sm:$0xf]
      %v1293 = vld [vmem:[%s1278 + $0x38] sm:$0xf]
      %v1294 = vld [vmem:[%s1278 + $0x3c] sm:$0xf]
      %v1311 = vunpack.c.l.b16 %v1279
      %v1312 = vunpack.c.l.b16 %v1280
      %v1313 = vunpack.c.l.b16 %v1281
      %v1314 = vunpack.c.l.b16 %v1282
      %v1315 = vunpack.c.l.b16 %v1283
      %v1316 = vunpack.c.l.b16 %v1284
      %v1317 = vunpack.c.l.b16 %v1285
      %v1318 = vunpack.c.l.b16 %v1286
      %v1319 = vunpack.c.l.b16 %v1287
      %v1320 = vunpack.c.l.b16 %v1288
      %v1321 = vunpack.c.l.b16 %v1289
      %v1322 = vunpack.c.l.b16 %v1290
      %v1323 = vunpack.c.l.b16 %v1291
      %v1324 = vunpack.c.l.b16 %v1292
      %v1325 = vunpack.c.l.b16 %v1293
      %v1326 = vunpack.c.l.b16 %v1294
      %v1327 = vpack.c.b16 %v1312, %v1311
      %v1328 = vpack.c.b16 %v1314, %v1313
      %v1329 = vpack.c.b16 %v1316, %v1315
      %v1330 = vpack.c.b16 %v1318, %v1317
      %v1331 = vpack.c.b16 %v1320, %v1319
      %v1332 = vpack.c.b16 %v1322, %v1321
      %v1333 = vpack.c.b16 %v1324, %v1323
      %v1334 = vpack.c.b16 %v1326, %v1325
      %1343 = vmatpush.bf16.msra.mxu0 %v1334
      %1344 = vmatpush.bf16.msra.mxu0 %v1333
      %1345 = vmatpush.bf16.msra.mxu0 %v1332
      %1346 = vmatpush.bf16.msra.mxu0 %v1331
      %1347 = vmatpush.bf16.msra.mxu0 %v1330
      %1348 = vmatpush.bf16.msra.mxu0 %v1329
      %1349 = vmatpush.bf16.msra.mxu0 %v1328
      %1350 = vmatpush.bf16.msra.mxu0 %v1327
      %1351 = vmatmul.bf16.gmra.mxu0 %v1273
      %v1352 = vpop.f32.mrf.mxu0
      %v1353 = vadd.f32 0.0, %v1352
      %v1354 = vpop.f32.mrf.mxu0
      %v1355 = vadd.f32 0.0, %v1354
      %1356 = vmatmul.bf16.gmra.mxu0 %v1274
      %v1357 = vpop.f32.mrf.mxu0
      %v1358 = vadd.f32 0.0, %v1357
      %v1359 = vpop.f32.mrf.mxu0
      %v1360 = vadd.f32 0.0, %v1359
      %1361 = vmatmul.bf16.gmra.mxu0 %v1275
      %v1362 = vpop.f32.mrf.mxu0
      %v1363 = vadd.f32 0.0, %v1362
      %v1364 = vpop.f32.mrf.mxu0
      %v1365 = vadd.f32 0.0, %v1364
      %1366 = vmatmul.bf16.gmra.mxu0 %v1276
      %v1367 = vpop.f32.mrf.mxu0
      %v1368 = vadd.f32 0.0, %v1367
      %v1369 = vpop.f32.mrf.mxu0
      %v1370 = vadd.f32 0.0, %v1369
      %1371 = vmatmul.bf16.gmra.mxu0 %v1277
      %v1372 = vpop.f32.mrf.mxu0
      %v1373 = vadd.f32 0.0, %v1372
      %v1374 = vpop.f32.mrf.mxu0
      %1375 = vdwg.mxu0
      %v1376 = vadd.f32 %v1241, %v1353
      %v1377 = vadd.f32 %v1243, %v1355
      %v1378 = vadd.f32 %v1246, %v1358
      %v1379 = vadd.f32 %v1248, %v1360
      %v1380 = vadd.f32 %v1251, %v1363
      %v1381 = vadd.f32 %v1253, %v1365
      %v1382 = vadd.f32 %v1256, %v1368
      %v1383 = vadd.f32 %v1258, %v1370
      %v1384 = vadd.f32 %v1261, %v1373
      %v1385 = vld [vmem:[#allocation2 + $0x2] sm:$0xff]
      %v1386 = vld [vmem:[#allocation2 + $0xa] sm:$0xff]
      %v1387 = vld [vmem:[#allocation2 + $0x12] sm:$0xff]
      %v1388 = vld [vmem:[#allocation2 + $0x1a] sm:$0xff]
      %v1389 = vld [vmem:[#allocation2 + $0x22] sm:$0xff]
      %v1390 = vld [vmem:[#allocation2 + $0x2a] sm:$0xff]
      %v1391 = vld [vmem:[#allocation2 + $0x32] sm:$0xff]
      %v1392 = vld [vmem:[#allocation2 + $0x3a] sm:$0xff]
      %v1393 = vld [vmem:[#allocation2 + $0x42] sm:$0xff]
      %v1394 = vpack.c.bf16 %v1386, %v1385
      %v1395 = vpack.c.bf16 %v1388, %v1387
      %v1396 = vpack.c.bf16 %v1390, %v1389
      %v1397 = vpack.c.bf16 %v1392, %v1391
      %v1398 = vpack.c.bf16 %v1393, %v1393
      %s1399 = scalar_lea.vmem %s3, 512
      %v1400 = vld [vmem:[%s1399] sm:$0xf]
      %v1401 = vld [vmem:[%s1399 + $0x4] sm:$0xf]
      %v1402 = vld [vmem:[%s1399 + $0x8] sm:$0xf]
      %v1403 = vld [vmem:[%s1399 + $0xc] sm:$0xf]
      %v1404 = vld [vmem:[%s1399 + $0x10] sm:$0xf]
      %v1405 = vld [vmem:[%s1399 + $0x14] sm:$0xf]
      %v1406 = vld [vmem:[%s1399 + $0x18] sm:$0xf]
      %v1407 = vld [vmem:[%s1399 + $0x1c] sm:$0xf]
      %v1408 = vld [vmem:[%s1399 + $0x20] sm:$0xf]
      %v1409 = vld [vmem:[%s1399 + $0x24] sm:$0xf]
      %v1410 = vld [vmem:[%s1399 + $0x28] sm:$0xf]
      %v1411 = vld [vmem:[%s1399 + $0x2c] sm:$0xf]
      %v1412 = vld [vmem:[%s1399 + $0x30] sm:$0xf]
      %v1413 = vld [vmem:[%s1399 + $0x34] sm:$0xf]
      %v1414 = vld [vmem:[%s1399 + $0x38] sm:$0xf]
      %v1415 = vld [vmem:[%s1399 + $0x3c] sm:$0xf]
      %v1432 = vunpack.c.l.b16 %v1400
      %v1433 = vunpack.c.l.b16 %v1401
      %v1434 = vunpack.c.l.b16 %v1402
      %v1435 = vunpack.c.l.b16 %v1403
      %v1436 = vunpack.c.l.b16 %v1404
      %v1437 = vunpack.c.l.b16 %v1405
      %v1438 = vunpack.c.l.b16 %v1406
      %v1439 = vunpack.c.l.b16 %v1407
      %v1440 = vunpack.c.l.b16 %v1408
      %v1441 = vunpack.c.l.b16 %v1409
      %v1442 = vunpack.c.l.b16 %v1410
      %v1443 = vunpack.c.l.b16 %v1411
      %v1444 = vunpack.c.l.b16 %v1412
      %v1445 = vunpack.c.l.b16 %v1413
      %v1446 = vunpack.c.l.b16 %v1414
      %v1447 = vunpack.c.l.b16 %v1415
      %v1448 = vpack.c.b16 %v1433, %v1432
      %v1449 = vpack.c.b16 %v1435, %v1434
      %v1450 = vpack.c.b16 %v1437, %v1436
      %v1451 = vpack.c.b16 %v1439, %v1438
      %v1452 = vpack.c.b16 %v1441, %v1440
      %v1453 = vpack.c.b16 %v1443, %v1442
      %v1454 = vpack.c.b16 %v1445, %v1444
      %v1455 = vpack.c.b16 %v1447, %v1446
      %1464 = vmatpush.bf16.msra.mxu0 %v1455
      %1465 = vmatpush.bf16.msra.mxu0 %v1454
      %1466 = vmatpush.bf16.msra.mxu0 %v1453
      %1467 = vmatpush.bf16.msra.mxu0 %v1452
      %1468 = vmatpush.bf16.msra.mxu0 %v1451
      %1469 = vmatpush.bf16.msra.mxu0 %v1450
      %1470 = vmatpush.bf16.msra.mxu0 %v1449
      %1471 = vmatpush.bf16.msra.mxu0 %v1448
      %1472 = vmatmul.bf16.gmra.mxu0 %v1394
      %v1473 = vpop.f32.mrf.mxu0
      %v1474 = vadd.f32 0.0, %v1473
      %v1475 = vpop.f32.mrf.mxu0
      %v1476 = vadd.f32 0.0, %v1475
      %1477 = vmatmul.bf16.gmra.mxu0 %v1395
      %v1478 = vpop.f32.mrf.mxu0
      %v1479 = vadd.f32 0.0, %v1478
      %v1480 = vpop.f32.mrf.mxu0
      %v1481 = vadd.f32 0.0, %v1480
      %1482 = vmatmul.bf16.gmra.mxu0 %v1396
      %v1483 = vpop.f32.mrf.mxu0
      %v1484 = vadd.f32 0.0, %v1483
      %v1485 = vpop.f32.mrf.mxu0
      %v1486 = vadd.f32 0.0, %v1485
      %1487 = vmatmul.bf16.gmra.mxu0 %v1397
      %v1488 = vpop.f32.mrf.mxu0
      %v1489 = vadd.f32 0.0, %v1488
      %v1490 = vpop.f32.mrf.mxu0
      %v1491 = vadd.f32 0.0, %v1490
      %1492 = vmatmul.bf16.gmra.mxu0 %v1398
      %v1493 = vpop.f32.mrf.mxu0
      %v1494 = vadd.f32 0.0, %v1493
      %v1495 = vpop.f32.mrf.mxu0
      %1496 = vdwg.mxu0
      %v1497 = vadd.f32 %v1376, %v1474
      %v1498 = vadd.f32 %v1377, %v1476
      %v1499 = vadd.f32 %v1378, %v1479
      %v1500 = vadd.f32 %v1379, %v1481
      %v1501 = vadd.f32 %v1380, %v1484
      %v1502 = vadd.f32 %v1381, %v1486
      %v1503 = vadd.f32 %v1382, %v1489
      %v1504 = vadd.f32 %v1383, %v1491
      %v1505 = vadd.f32 %v1384, %v1494
      %v1506 = vmul.f32 %v1497, %v308
      %v1507 = vmul.f32 %v1498, %v313
      %v1508 = vmul.f32 %v1499, %v318
      %v1509 = vmul.f32 %v1500, %v323
      %v1510 = vmul.f32 %v1501, %v328
      %v1511 = vmul.f32 %v1502, %v333
      %v1512 = vmul.f32 %v1503, %v338
      %v1513 = vmul.f32 %v1504, %v343
      %v1514 = vmul.f32 %v1505, %v348
      %1515 = vst [vmem:[%s279] sm:$0xff] %v1506
      %1516 = vst [vmem:[%s279 + $0x8] sm:$0xff] %v1507
      %1517 = vst [vmem:[%s279 + $0x10] sm:$0xff] %v1508
      %1518 = vst [vmem:[%s279 + $0x18] sm:$0xff] %v1509
      %1519 = vst [vmem:[%s279 + $0x20] sm:$0xff] %v1510
      %1520 = vst [vmem:[%s279 + $0x28] sm:$0xff] %v1511
      %1521 = vst [vmem:[%s279 + $0x30] sm:$0xff] %v1512
      %1522 = vst [vmem:[%s279 + $0x38] sm:$0xff] %v1513
      %1523 = vst [vmem:[%s279 + $0x40] sm:$0xff] %v1514
      %v1524 = vlaneseq
      %v1525 = vand.u32 %v1524, 127
      %vm1526 = vcmp.lt.s32.totalorder %v1525, 64
      %v1527 = vsel %vm1526, %v1506, 0.0
      %v1528 = vsel %vm1526, %v1507, 0.0
      %v1529 = vsel %vm1526, %v1508, 0.0
      %v1530 = vsel %vm1526, %v1509, 0.0
      %v1531 = vsel %vm1526, %v1510, 0.0
      %v1532 = vsel %vm1526, %v1511, 0.0
      %v1533 = vsel %vm1526, %v1512, 0.0
      %v1534 = vsel %vm1526, %v1513, 0.0
      %v1535 = vsel %vm1526, %v1514, 0.0
      %v1536 = vsel %vm1526, 0.0, %v1506
      %v1537 = vsel %vm1526, 0.0, %v1507
      %v1538 = vsel %vm1526, 0.0, %v1508
      %v1539 = vsel %vm1526, 0.0, %v1509
      %v1540 = vsel %vm1526, 0.0, %v1510
      %v1541 = vsel %vm1526, 0.0, %v1511
      %v1542 = vsel %vm1526, 0.0, %v1512
      %v1543 = vsel %vm1526, 0.0, %v1513
      %v1544 = vsel %vm1526, 0.0, %v1514
      %v1545 = vmul.f32 %v1536, 0.5
      %v1546 = vmul.f32 %v1537, 0.5
      %v1547 = vmul.f32 %v1538, 0.5
      %v1548 = vmul.f32 %v1539, 0.5
      %v1549 = vmul.f32 %v1540, 0.5
      %v1550 = vmul.f32 %v1541, 0.5
      %v1551 = vmul.f32 %v1542, 0.5
      %v1552 = vmul.f32 %v1543, 0.5
      %v1553 = vmul.f32 %v1544, 0.5
      %v1554 = vmul.f32 %v1545, 1.442695
      %v1555 = vpow.pop %v1554
      %v1556 = vmul.f32 %v1546, 1.442695
      %v1557 = vpow.pop %v1556
      %v1558 = vmul.f32 %v1547, 1.442695
      %v1559 = vpow.pop %v1558
      %v1560 = vmul.f32 %v1548, 1.442695
      %v1561 = vpow.pop %v1560
      %v1562 = vmul.f32 %v1549, 1.442695
      %v1563 = vpow.pop %v1562
      %v1564 = vmul.f32 %v1550, 1.442695
      %v1565 = vpow.pop %v1564
      %v1566 = vmul.f32 %v1551, 1.442695
      %v1567 = vpow.pop %v1566
      %v1568 = vmul.f32 %v1552, 1.442695
      %v1569 = vpow.pop %v1568
      %v1570 = vmul.f32 %v1553, 1.442695
      %v1571 = vpow.pop %v1570
      %v1572 = vld [vmem:[%s274] sm:$0xff]
      %v1573 = vld [vmem:[%s274 + $0x8] sm:$0xff]
      %v1574 = vld [vmem:[%s274 + $0x10] sm:$0xff]
      %v1575 = vld [vmem:[%s274 + $0x18] sm:$0xff]
      %v1576 = vld [vmem:[%s274 + $0x20] sm:$0xff]
      %v1577 = vld [vmem:[%s274 + $0x28] sm:$0xff]
      %v1578 = vld [vmem:[%s274 + $0x30] sm:$0xff]
      %v1579 = vld [vmem:[%s274 + $0x38] sm:$0xff]
      %v1580 = vld [vmem:[%s274 + $0x40] sm:$0xff]
      %v1581 = vmul.f32 %v1572, %v1555
      %v1582 = vmul.f32 %v1573, %v1557
      %v1583 = vmul.f32 %v1574, %v1559
      %v1584 = vmul.f32 %v1575, %v1561
      %v1585 = vmul.f32 %v1576, %v1563
      %v1586 = vmul.f32 %v1577, %v1565
      %v1587 = vmul.f32 %v1578, %v1567
      %v1588 = vmul.f32 %v1579, %v1569
      %v1589 = vmul.f32 %v1580, %v1571
      %v1590 = vadd.f32 %v1527, %v1581
      %v1591 = vadd.f32 %v1528, %v1582
      %v1592 = vadd.f32 %v1529, %v1583
      %v1593 = vadd.f32 %v1530, %v1584
      %v1594 = vadd.f32 %v1531, %v1585
      %v1595 = vadd.f32 %v1532, %v1586
      %v1596 = vadd.f32 %v1533, %v1587
      %v1597 = vadd.f32 %v1534, %v1588
      %v1598 = vadd.f32 %v1535, %v1589
      %v1599 = vmul.f32 %v1590, %v308
      %v1600 = vmul.f32 %v1591, %v313
      %v1601 = vmul.f32 %v1592, %v318
      %v1602 = vmul.f32 %v1593, %v323
      %v1603 = vmul.f32 %v1594, %v328
      %v1604 = vmul.f32 %v1595, %v333
      %v1605 = vmul.f32 %v1596, %v338
      %v1606 = vmul.f32 %v1597, %v343
      %v1607 = vmul.f32 %v1598, %v348
      %1608 = vst [vmem:[#allocation2 + $0x1] sm:$0xff] %v1599
      %1609 = vst [vmem:[#allocation2 + $0x9] sm:$0xff] %v1600
      %1610 = vst [vmem:[#allocation2 + $0x11] sm:$0xff] %v1601
      %1611 = vst [vmem:[#allocation2 + $0x19] sm:$0xff] %v1602
      %1612 = vst [vmem:[#allocation2 + $0x21] sm:$0xff] %v1603
      %1613 = vst [vmem:[#allocation2 + $0x29] sm:$0xff] %v1604
      %1614 = vst [vmem:[#allocation2 + $0x31] sm:$0xff] %v1605
      %1615 = vst [vmem:[#allocation2 + $0x39] sm:$0xff] %v1606
      %1616 = vst [vmem:[#allocation2 + $0x41] sm:$0xff] %v1607
      %v1617 = vld [vmem:[#allocation2] sm:$0xff]
      %v1618 = vld [vmem:[#allocation2 + $0x8] sm:$0xff]
      %v1619 = vld [vmem:[#allocation2 + $0x10] sm:$0xff]
      %v1620 = vld [vmem:[#allocation2 + $0x18] sm:$0xff]
      %v1621 = vld [vmem:[#allocation2 + $0x20] sm:$0xff]
      %v1622 = vld [vmem:[#allocation2 + $0x28] sm:$0xff]
      %v1623 = vld [vmem:[#allocation2 + $0x30] sm:$0xff]
      %v1624 = vld [vmem:[#allocation2 + $0x38] sm:$0xff]
      %v1625 = vld [vmem:[#allocation2 + $0x40] sm:$0xff]
      %v1626 = vpack.c.bf16 %v1618, %v1617
      %v1627 = vpack.c.bf16 %v1620, %v1619
      %v1628 = vpack.c.bf16 %v1622, %v1621
      %v1629 = vpack.c.bf16 %v1624, %v1623
      %v1630 = vpack.c.bf16 %v1625, %v1625
      %s1631 = scalar_lea.vmem %s3, 576
      %v1632 = vld [vmem:[%s1631] sm:$0xf]
      %v1633 = vld [vmem:[%s1631 + $0x4] sm:$0xf]
      %v1634 = vld [vmem:[%s1631 + $0x8] sm:$0xf]
      %v1635 = vld [vmem:[%s1631 + $0xc] sm:$0xf]
      %v1636 = vld [vmem:[%s1631 + $0x10] sm:$0xf]
      %v1637 = vld [vmem:[%s1631 + $0x14] sm:$0xf]
      %v1638 = vld [vmem:[%s1631 + $0x18] sm:$0xf]
      %v1639 = vld [vmem:[%s1631 + $0x1c] sm:$0xf]
      %v1640 = vld [vmem:[%s1631 + $0x20] sm:$0xf]
      %v1641 = vld [vmem:[%s1631 + $0x24] sm:$0xf]
      %v1642 = vld [vmem:[%s1631 + $0x28] sm:$0xf]
      %v1643 = vld [vmem:[%s1631 + $0x2c] sm:$0xf]
      %v1644 = vld [vmem:[%s1631 + $0x30] sm:$0xf]
      %v1645 = vld [vmem:[%s1631 + $0x34] sm:$0xf]
      %v1646 = vld [vmem:[%s1631 + $0x38] sm:$0xf]
      %v1647 = vld [vmem:[%s1631 + $0x3c] sm:$0xf]
      %s1648 = scalar_lea.vmem %s4, 3
      %v1649 = vld [vmem:[%s1648] sm:$0x1]
      %v1651 = vperm.slane %v1649, 0
      %v1669 = vunpack.c.l.b16 %v1632
      %v1670 = vunpack.c.l.b16 %v1633
      %v1671 = vunpack.c.l.b16 %v1634
      %v1672 = vunpack.c.l.b16 %v1635
      %v1673 = vunpack.c.l.b16 %v1636
      %v1674 = vunpack.c.l.b16 %v1637
      %v1675 = vunpack.c.l.b16 %v1638
      %v1676 = vunpack.c.l.b16 %v1639
      %v1677 = vunpack.c.l.b16 %v1640
      %v1678 = vunpack.c.l.b16 %v1641
      %v1679 = vunpack.c.l.b16 %v1642
      %v1680 = vunpack.c.l.b16 %v1643
      %v1681 = vunpack.c.l.b16 %v1644
      %v1682 = vunpack.c.l.b16 %v1645
      %v1683 = vunpack.c.l.b16 %v1646
      %v1684 = vunpack.c.l.b16 %v1647
      %v1685 = vpack.c.b16 %v1670, %v1669
      %v1686 = vpack.c.b16 %v1672, %v1671
      %v1687 = vpack.c.b16 %v1674, %v1673
      %v1688 = vpack.c.b16 %v1676, %v1675
      %v1689 = vpack.c.b16 %v1678, %v1677
      %v1690 = vpack.c.b16 %v1680, %v1679
      %v1691 = vpack.c.b16 %v1682, %v1681
      %v1692 = vpack.c.b16 %v1684, %v1683
      %1701 = vmatpush.bf16.msra.mxu0 %v1692
      %1702 = vmatpush.bf16.msra.mxu0 %v1691
      %1703 = vmatpush.bf16.msra.mxu0 %v1690
      %1704 = vmatpush.bf16.msra.mxu0 %v1689
      %1705 = vmatpush.bf16.msra.mxu0 %v1688
      %1706 = vmatpush.bf16.msra.mxu0 %v1687
      %1707 = vmatpush.bf16.msra.mxu0 %v1686
      %1708 = vmatpush.bf16.msra.mxu0 %v1685
      %1709 = vmatmul.bf16.gmra.mxu0 %v1626
      %v1710 = vpop.f32.mrf.mxu0
      %v1711 = vadd.f32 %v1651, %v1710
      %v1712 = vpop.f32.mrf.mxu0
      %v1713 = vadd.f32 %v1651, %v1712
      %1714 = vmatmul.bf16.gmra.mxu0 %v1627
      %v1715 = vpop.f32.mrf.mxu0
      %v1716 = vadd.f32 %v1651, %v1715
      %v1717 = vpop.f32.mrf.mxu0
      %v1718 = vadd.f32 %v1651, %v1717
      %1719 = vmatmul.bf16.gmra.mxu0 %v1628
      %v1720 = vpop.f32.mrf.mxu0
      %v1721 = vadd.f32 %v1651, %v1720
      %v1722 = vpop.f32.mrf.mxu0
      %v1723 = vadd.f32 %v1651, %v1722
      %1724 = vmatmul.bf16.gmra.mxu0 %v1629
      %v1725 = vpop.f32.mrf.mxu0
      %v1726 = vadd.f32 %v1651, %v1725
      %v1727 = vpop.f32.mrf.mxu0
      %v1728 = vadd.f32 %v1651, %v1727
      %1729 = vmatmul.bf16.gmra.mxu0 %v1630
      %v1730 = vpop.f32.mrf.mxu0
      %v1731 = vadd.f32 %v1651, %v1730
      %v1732 = vpop.f32.mrf.mxu0
      %1733 = vdwg.mxu0
      %v1734 = vld [vmem:[#allocation2 + $0x1] sm:$0xff]
      %v1735 = vld [vmem:[#allocation2 + $0x9] sm:$0xff]
      %v1736 = vld [vmem:[#allocation2 + $0x11] sm:$0xff]
      %v1737 = vld [vmem:[#allocation2 + $0x19] sm:$0xff]
      %v1738 = vld [vmem:[#allocation2 + $0x21] sm:$0xff]
      %v1739 = vld [vmem:[#allocation2 + $0x29] sm:$0xff]
      %v1740 = vld [vmem:[#allocation2 + $0x31] sm:$0xff]
      %v1741 = vld [vmem:[#allocation2 + $0x39] sm:$0xff]
      %v1742 = vld [vmem:[#allocation2 + $0x41] sm:$0xff]
      %v1743 = vpack.c.bf16 %v1735, %v1734
      %v1744 = vpack.c.bf16 %v1737, %v1736
      %v1745 = vpack.c.bf16 %v1739, %v1738
      %v1746 = vpack.c.bf16 %v1741, %v1740
      %v1747 = vpack.c.bf16 %v1742, %v1742
      %s1748 = scalar_lea.vmem %s3, 640
      %v1749 = vld [vmem:[%s1748] sm:$0xf]
      %v1750 = vld [vmem:[%s1748 + $0x4] sm:$0xf]
      %v1751 = vld [vmem:[%s1748 + $0x8] sm:$0xf]
      %v1752 = vld [vmem:[%s1748 + $0xc] sm:$0xf]
      %v1753 = vld [vmem:[%s1748 + $0x10] sm:$0xf]
      %v1754 = vld [vmem:[%s1748 + $0x14] sm:$0xf]
      %v1755 = vld [vmem:[%s1748 + $0x18] sm:$0xf]
      %v1756 = vld [vmem:[%s1748 + $0x1c] sm:$0xf]
      %v1757 = vld [vmem:[%s1748 + $0x20] sm:$0xf]
      %v1758 = vld [vmem:[%s1748 + $0x24] sm:$0xf]
      %v1759 = vld [vmem:[%s1748 + $0x28] sm:$0xf]
      %v1760 = vld [vmem:[%s1748 + $0x2c] sm:$0xf]
      %v1761 = vld [vmem:[%s1748 + $0x30] sm:$0xf]
      %v1762 = vld [vmem:[%s1748 + $0x34] sm:$0xf]
      %v1763 = vld [vmem:[%s1748 + $0x38] sm:$0xf]
      %v1764 = vld [vmem:[%s1748 + $0x3c] sm:$0xf]
      %v1781 = vunpack.c.l.b16 %v1749
      %v1782 = vunpack.c.l.b16 %v1750
      %v1783 = vunpack.c.l.b16 %v1751
      %v1784 = vunpack.c.l.b16 %v1752
      %v1785 = vunpack.c.l.b16 %v1753
      %v1786 = vunpack.c.l.b16 %v1754
      %v1787 = vunpack.c.l.b16 %v1755
      %v1788 = vunpack.c.l.b16 %v1756
      %v1789 = vunpack.c.l.b16 %v1757
      %v1790 = vunpack.c.l.b16 %v1758
      %v1791 = vunpack.c.l.b16 %v1759
      %v1792 = vunpack.c.l.b16 %v1760
      %v1793 = vunpack.c.l.b16 %v1761
      %v1794 = vunpack.c.l.b16 %v1762
      %v1795 = vunpack.c.l.b16 %v1763
      %v1796 = vunpack.c.l.b16 %v1764
      %v1797 = vpack.c.b16 %v1782, %v1781
      %v1798 = vpack.c.b16 %v1784, %v1783
      %v1799 = vpack.c.b16 %v1786, %v1785
      %v1800 = vpack.c.b16 %v1788, %v1787
      %v1801 = vpack.c.b16 %v1790, %v1789
      %v1802 = vpack.c.b16 %v1792, %v1791
      %v1803 = vpack.c.b16 %v1794, %v1793
      %v1804 = vpack.c.b16 %v1796, %v1795
      %1813 = vmatpush.bf16.msra.mxu0 %v1804
      %1814 = vmatpush.bf16.msra.mxu0 %v1803
      %1815 = vmatpush.bf16.msra.mxu0 %v1802
      %1816 = vmatpush.bf16.msra.mxu0 %v1801
      %1817 = vmatpush.bf16.msra.mxu0 %v1800
      %1818 = vmatpush.bf16.msra.mxu0 %v1799
      %1819 = vmatpush.bf16.msra.mxu0 %v1798
      %1820 = vmatpush.bf16.msra.mxu0 %v1797
      %1821 = vmatmul.bf16.gmra.mxu0 %v1743
      %v1822 = vpop.f32.mrf.mxu0
      %v1823 = vadd.f32 0.0, %v1822
      %v1824 = vpop.f32.mrf.mxu0
      %v1825 = vadd.f32 0.0, %v1824
      %1826 = vmatmul.bf16.gmra.mxu0 %v1744
      %v1827 = vpop.f32.mrf.mxu0
      %v1828 = vadd.f32 0.0, %v1827
      %v1829 = vpop.f32.mrf.mxu0
      %v1830 = vadd.f32 0.0, %v1829
      %1831 = vmatmul.bf16.gmra.mxu0 %v1745
      %v1832 = vpop.f32.mrf.mxu0
      %v1833 = vadd.f32 0.0, %v1832
      %v1834 = vpop.f32.mrf.mxu0
      %v1835 = vadd.f32 0.0, %v1834
      %1836 = vmatmul.bf16.gmra.mxu0 %v1746
      %v1837 = vpop.f32.mrf.mxu0
      %v1838 = vadd.f32 0.0, %v1837
      %v1839 = vpop.f32.mrf.mxu0
      %v1840 = vadd.f32 0.0, %v1839
      %1841 = vmatmul.bf16.gmra.mxu0 %v1747
      %v1842 = vpop.f32.mrf.mxu0
      %v1843 = vadd.f32 0.0, %v1842
      %v1844 = vpop.f32.mrf.mxu0
      %1845 = vdwg.mxu0
      %v1846 = vadd.f32 %v1711, %v1823
      %v1847 = vadd.f32 %v1713, %v1825
      %v1848 = vadd.f32 %v1716, %v1828
      %v1849 = vadd.f32 %v1718, %v1830
      %v1850 = vadd.f32 %v1721, %v1833
      %v1851 = vadd.f32 %v1723, %v1835
      %v1852 = vadd.f32 %v1726, %v1838
      %v1853 = vadd.f32 %v1728, %v1840
      %v1854 = vadd.f32 %v1731, %v1843
      %v1855 = vld [vmem:[#allocation2 + $0x2] sm:$0xff]
      %v1856 = vld [vmem:[#allocation2 + $0xa] sm:$0xff]
      %v1857 = vld [vmem:[#allocation2 + $0x12] sm:$0xff]
      %v1858 = vld [vmem:[#allocation2 + $0x1a] sm:$0xff]
      %v1859 = vld [vmem:[#allocation2 + $0x22] sm:$0xff]
      %v1860 = vld [vmem:[#allocation2 + $0x2a] sm:$0xff]
      %v1861 = vld [vmem:[#allocation2 + $0x32] sm:$0xff]
      %v1862 = vld [vmem:[#allocation2 + $0x3a] sm:$0xff]
      %v1863 = vld [vmem:[#allocation2 + $0x42] sm:$0xff]
      %v1864 = vpack.c.bf16 %v1856, %v1855
      %v1865 = vpack.c.bf16 %v1858, %v1857
      %v1866 = vpack.c.bf16 %v1860, %v1859
      %v1867 = vpack.c.bf16 %v1862, %v1861
      %v1868 = vpack.c.bf16 %v1863, %v1863
      %s1869 = scalar_lea.vmem %s3, 704
      %v1870 = vld [vmem:[%s1869] sm:$0xf]
      %v1871 = vld [vmem:[%s1869 + $0x4] sm:$0xf]
      %v1872 = vld [vmem:[%s1869 + $0x8] sm:$0xf]
      %v1873 = vld [vmem:[%s1869 + $0xc] sm:$0xf]
      %v1874 = vld [vmem:[%s1869 + $0x10] sm:$0xf]
      %v1875 = vld [vmem:[%s1869 + $0x14] sm:$0xf]
      %v1876 = vld [vmem:[%s1869 + $0x18] sm:$0xf]
      %v1877 = vld [vmem:[%s1869 + $0x1c] sm:$0xf]
      %v1878 = vld [vmem:[%s1869 + $0x20] sm:$0xf]
      %v1879 = vld [vmem:[%s1869 + $0x24] sm:$0xf]
      %v1880 = vld [vmem:[%s1869 + $0x28] sm:$0xf]
      %v1881 = vld [vmem:[%s1869 + $0x2c] sm:$0xf]
      %v1882 = vld [vmem:[%s1869 + $0x30] sm:$0xf]
      %v1883 = vld [vmem:[%s1869 + $0x34] sm:$0xf]
      %v1884 = vld [vmem:[%s1869 + $0x38] sm:$0xf]
      %v1885 = vld [vmem:[%s1869 + $0x3c] sm:$0xf]
      %v1902 = vunpack.c.l.b16 %v1870
      %v1903 = vunpack.c.l.b16 %v1871
      %v1904 = vunpack.c.l.b16 %v1872
      %v1905 = vunpack.c.l.b16 %v1873
      %v1906 = vunpack.c.l.b16 %v1874
      %v1907 = vunpack.c.l.b16 %v1875
      %v1908 = vunpack.c.l.b16 %v1876
      %v1909 = vunpack.c.l.b16 %v1877
      %v1910 = vunpack.c.l.b16 %v1878
      %v1911 = vunpack.c.l.b16 %v1879
      %v1912 = vunpack.c.l.b16 %v1880
      %v1913 = vunpack.c.l.b16 %v1881
      %v1914 = vunpack.c.l.b16 %v1882
      %v1915 = vunpack.c.l.b16 %v1883
      %v1916 = vunpack.c.l.b16 %v1884
      %v1917 = vunpack.c.l.b16 %v1885
      %v1918 = vpack.c.b16 %v1903, %v1902
      %v1919 = vpack.c.b16 %v1905, %v1904
      %v1920 = vpack.c.b16 %v1907, %v1906
      %v1921 = vpack.c.b16 %v1909, %v1908
      %v1922 = vpack.c.b16 %v1911, %v1910
      %v1923 = vpack.c.b16 %v1913, %v1912
      %v1924 = vpack.c.b16 %v1915, %v1914
      %v1925 = vpack.c.b16 %v1917, %v1916
      %1934 = vmatpush.bf16.msra.mxu0 %v1925
      %1935 = vmatpush.bf16.msra.mxu0 %v1924
      %1936 = vmatpush.bf16.msra.mxu0 %v1923
      %1937 = vmatpush.bf16.msra.mxu0 %v1922
      %1938 = vmatpush.bf16.msra.mxu0 %v1921
      %1939 = vmatpush.bf16.msra.mxu0 %v1920
      %1940 = vmatpush.bf16.msra.mxu0 %v1919
      %1941 = vmatpush.bf16.msra.mxu0 %v1918
      %1942 = vmatmul.bf16.gmra.mxu0 %v1864
      %v1943 = vpop.f32.mrf.mxu0
      %v1944 = vadd.f32 0.0, %v1943
      %v1945 = vpop.f32.mrf.mxu0
      %v1946 = vadd.f32 0.0, %v1945
      %1947 = vmatmul.bf16.gmra.mxu0 %v1865
      %v1948 = vpop.f32.mrf.mxu0
      %v1949 = vadd.f32 0.0, %v1948
      %v1950 = vpop.f32.mrf.mxu0
      %v1951 = vadd.f32 0.0, %v1950
      %1952 = vmatmul.bf16.gmra.mxu0 %v1866
      %v1953 = vpop.f32.mrf.mxu0
      %v1954 = vadd.f32 0.0, %v1953
      %v1955 = vpop.f32.mrf.mxu0
      %v1956 = vadd.f32 0.0, %v1955
      %1957 = vmatmul.bf16.gmra.mxu0 %v1867
      %v1958 = vpop.f32.mrf.mxu0
      %v1959 = vadd.f32 0.0, %v1958
      %v1960 = vpop.f32.mrf.mxu0
      %v1961 = vadd.f32 0.0, %v1960
      %1962 = vmatmul.bf16.gmra.mxu0 %v1868
      %v1963 = vpop.f32.mrf.mxu0
      %v1964 = vadd.f32 0.0, %v1963
      %v1965 = vpop.f32.mrf.mxu0
      %1966 = vdwg.mxu0
      %v1967 = vadd.f32 %v1846, %v1944
      %v1968 = vadd.f32 %v1847, %v1946
      %v1969 = vadd.f32 %v1848, %v1949
      %v1970 = vadd.f32 %v1849, %v1951
      %v1971 = vadd.f32 %v1850, %v1954
      %v1972 = vadd.f32 %v1851, %v1956
      %v1973 = vadd.f32 %v1852, %v1959
      %v1974 = vadd.f32 %v1853, %v1961
      %v1975 = vadd.f32 %v1854, %v1964
      %v1976 = vmax.f32 %v1967, 0.0
      %v1977 = vmax.f32 %v1968, 0.0
      %v1978 = vmax.f32 %v1969, 0.0
      %v1979 = vmax.f32 %v1970, 0.0
      %v1980 = vmax.f32 %v1971, 0.0
      %v1981 = vmax.f32 %v1972, 0.0
      %v1982 = vmax.f32 %v1973, 0.0
      %v1983 = vmax.f32 %v1974, 0.0
      %v1984 = vmax.f32 %v1975, 0.0
      %v1985 = vmul.f32 %v1976, %v308
      %v1986 = vmul.f32 %v1977, %v313
      %v1987 = vmul.f32 %v1978, %v318
      %v1988 = vmul.f32 %v1979, %v323
      %v1989 = vmul.f32 %v1980, %v328
      %v1990 = vmul.f32 %v1981, %v333
      %v1991 = vmul.f32 %v1982, %v338
      %v1992 = vmul.f32 %v1983, %v343
      %v1993 = vmul.f32 %v1984, %v348
      %1994 = vst [vmem:[#allocation2 + $0x1] sm:$0xff] %v1985
      %1995 = vst [vmem:[#allocation2 + $0x9] sm:$0xff] %v1986
      %1996 = vst [vmem:[#allocation2 + $0x11] sm:$0xff] %v1987
      %1997 = vst [vmem:[#allocation2 + $0x19] sm:$0xff] %v1988
      %1998 = vst [vmem:[#allocation2 + $0x21] sm:$0xff] %v1989
      %1999 = vst [vmem:[#allocation2 + $0x29] sm:$0xff] %v1990
      %2000 = vst [vmem:[#allocation2 + $0x31] sm:$0xff] %v1991
      %2001 = vst [vmem:[#allocation2 + $0x39] sm:$0xff] %v1992
      %2002 = vst [vmem:[#allocation2 + $0x41] sm:$0xff] %v1993
      %v2003 = vld [vmem:[#allocation2] sm:$0xff]
      %v2004 = vld [vmem:[#allocation2 + $0x8] sm:$0xff]
      %v2005 = vld [vmem:[#allocation2 + $0x10] sm:$0xff]
      %v2006 = vld [vmem:[#allocation2 + $0x18] sm:$0xff]
      %v2007 = vld [vmem:[#allocation2 + $0x20] sm:$0xff]
      %v2008 = vld [vmem:[#allocation2 + $0x28] sm:$0xff]
      %v2009 = vld [vmem:[#allocation2 + $0x30] sm:$0xff]
      %v2010 = vld [vmem:[#allocation2 + $0x38] sm:$0xff]
      %v2011 = vld [vmem:[#allocation2 + $0x40] sm:$0xff]
      %v2012 = vpack.c.bf16 %v2004, %v2003
      %v2013 = vpack.c.bf16 %v2006, %v2005
      %v2014 = vpack.c.bf16 %v2008, %v2007
      %v2015 = vpack.c.bf16 %v2010, %v2009
      %v2016 = vpack.c.bf16 %v2011, %v2011
      %s2017 = scalar_lea.vmem %s3, 768
      %v2018 = vld [vmem:[%s2017] sm:$0xf]
      %v2019 = vld [vmem:[%s2017 + $0x4] sm:$0xf]
      %v2020 = vld [vmem:[%s2017 + $0x8] sm:$0xf]
      %v2021 = vld [vmem:[%s2017 + $0xc] sm:$0xf]
      %v2022 = vld [vmem:[%s2017 + $0x10] sm:$0xf]
      %v2023 = vld [vmem:[%s2017 + $0x14] sm:$0xf]
      %v2024 = vld [vmem:[%s2017 + $0x18] sm:$0xf]
      %v2025 = vld [vmem:[%s2017 + $0x1c] sm:$0xf]
      %v2026 = vld [vmem:[%s2017 + $0x20] sm:$0xf]
      %v2027 = vld [vmem:[%s2017 + $0x24] sm:$0xf]
      %v2028 = vld [vmem:[%s2017 + $0x28] sm:$0xf]
      %v2029 = vld [vmem:[%s2017 + $0x2c] sm:$0xf]
      %v2030 = vld [vmem:[%s2017 + $0x30] sm:$0xf]
      %v2031 = vld [vmem:[%s2017 + $0x34] sm:$0xf]
      %v2032 = vld [vmem:[%s2017 + $0x38] sm:$0xf]
      %v2033 = vld [vmem:[%s2017 + $0x3c] sm:$0xf]
      %s2034 = scalar_lea.vmem %s4, 4
      %v2035 = vld [vmem:[%s2034] sm:$0x1]
      %v2037 = vperm.slane %v2035, 0
      %v2055 = vunpack.c.l.b16 %v2018
      %v2056 = vunpack.c.l.b16 %v2019
      %v2057 = vunpack.c.l.b16 %v2020
      %v2058 = vunpack.c.l.b16 %v2021
      %v2059 = vunpack.c.l.b16 %v2022
      %v2060 = vunpack.c.l.b16 %v2023
      %v2061 = vunpack.c.l.b16 %v2024
      %v2062 = vunpack.c.l.b16 %v2025
      %v2063 = vunpack.c.l.b16 %v2026
      %v2064 = vunpack.c.l.b16 %v2027
      %v2065 = vunpack.c.l.b16 %v2028
      %v2066 = vunpack.c.l.b16 %v2029
      %v2067 = vunpack.c.l.b16 %v2030
      %v2068 = vunpack.c.l.b16 %v2031
      %v2069 = vunpack.c.l.b16 %v2032
      %v2070 = vunpack.c.l.b16 %v2033
      %v2071 = vpack.c.b16 %v2056, %v2055
      %v2072 = vpack.c.b16 %v2058, %v2057
      %v2073 = vpack.c.b16 %v2060, %v2059
      %v2074 = vpack.c.b16 %v2062, %v2061
      %v2075 = vpack.c.b16 %v2064, %v2063
      %v2076 = vpack.c.b16 %v2066, %v2065
      %v2077 = vpack.c.b16 %v2068, %v2067
      %v2078 = vpack.c.b16 %v2070, %v2069
      %2087 = vmatpush.bf16.msra.mxu0 %v2078
      %2088 = vmatpush.bf16.msra.mxu0 %v2077
      %2089 = vmatpush.bf16.msra.mxu0 %v2076
      %2090 = vmatpush.bf16.msra.mxu0 %v2075
      %2091 = vmatpush.bf16.msra.mxu0 %v2074
      %2092 = vmatpush.bf16.msra.mxu0 %v2073
      %2093 = vmatpush.bf16.msra.mxu0 %v2072
      %2094 = vmatpush.bf16.msra.mxu0 %v2071
      %2095 = vmatmul.bf16.gmra.mxu0 %v2012
      %v2096 = vpop.f32.mrf.mxu0
      %v2097 = vadd.f32 %v2037, %v2096
      %v2098 = vpop.f32.mrf.mxu0
      %v2099 = vadd.f32 %v2037, %v2098
      %2100 = vmatmul.bf16.gmra.mxu0 %v2013
      %v2101 = vpop.f32.mrf.mxu0
      %v2102 = vadd.f32 %v2037, %v2101
      %v2103 = vpop.f32.mrf.mxu0
      %v2104 = vadd.f32 %v2037, %v2103
      %2105 = vmatmul.bf16.gmra.mxu0 %v2014
      %v2106 = vpop.f32.mrf.mxu0
      %v2107 = vadd.f32 %v2037, %v2106
      %v2108 = vpop.f32.mrf.mxu0
      %v2109 = vadd.f32 %v2037, %v2108
      %2110 = vmatmul.bf16.gmra.mxu0 %v2015
      %v2111 = vpop.f32.mrf.mxu0
      %v2112 = vadd.f32 %v2037, %v2111
      %v2113 = vpop.f32.mrf.mxu0
      %v2114 = vadd.f32 %v2037, %v2113
      %2115 = vmatmul.bf16.gmra.mxu0 %v2016
      %v2116 = vpop.f32.mrf.mxu0
      %v2117 = vadd.f32 %v2037, %v2116
      %v2118 = vpop.f32.mrf.mxu0
      %2119 = vdwg.mxu0
      %v2120 = vld [vmem:[#allocation2 + $0x1] sm:$0xff]
      %v2121 = vld [vmem:[#allocation2 + $0x9] sm:$0xff]
      %v2122 = vld [vmem:[#allocation2 + $0x11] sm:$0xff]
      %v2123 = vld [vmem:[#allocation2 + $0x19] sm:$0xff]
      %v2124 = vld [vmem:[#allocation2 + $0x21] sm:$0xff]
      %v2125 = vld [vmem:[#allocation2 + $0x29] sm:$0xff]
      %v2126 = vld [vmem:[#allocation2 + $0x31] sm:$0xff]
      %v2127 = vld [vmem:[#allocation2 + $0x39] sm:$0xff]
      %v2128 = vld [vmem:[#allocation2 + $0x41] sm:$0xff]
      %v2129 = vpack.c.bf16 %v2121, %v2120
      %v2130 = vpack.c.bf16 %v2123, %v2122
      %v2131 = vpack.c.bf16 %v2125, %v2124
      %v2132 = vpack.c.bf16 %v2127, %v2126
      %v2133 = vpack.c.bf16 %v2128, %v2128
      %s2134 = scalar_lea.vmem %s3, 832
      %v2135 = vld [vmem:[%s2134] sm:$0xf]
      %v2136 = vld [vmem:[%s2134 + $0x4] sm:$0xf]
      %v2137 = vld [vmem:[%s2134 + $0x8] sm:$0xf]
      %v2138 = vld [vmem:[%s2134 + $0xc] sm:$0xf]
      %v2139 = vld [vmem:[%s2134 + $0x10] sm:$0xf]
      %v2140 = vld [vmem:[%s2134 + $0x14] sm:$0xf]
      %v2141 = vld [vmem:[%s2134 + $0x18] sm:$0xf]
      %v2142 = vld [vmem:[%s2134 + $0x1c] sm:$0xf]
      %v2143 = vld [vmem:[%s2134 + $0x20] sm:$0xf]
      %v2144 = vld [vmem:[%s2134 + $0x24] sm:$0xf]
      %v2145 = vld [vmem:[%s2134 + $0x28] sm:$0xf]
      %v2146 = vld [vmem:[%s2134 + $0x2c] sm:$0xf]
      %v2147 = vld [vmem:[%s2134 + $0x30] sm:$0xf]
      %v2148 = vld [vmem:[%s2134 + $0x34] sm:$0xf]
      %v2149 = vld [vmem:[%s2134 + $0x38] sm:$0xf]
      %v2150 = vld [vmem:[%s2134 + $0x3c] sm:$0xf]
      %v2167 = vunpack.c.l.b16 %v2135
      %v2168 = vunpack.c.l.b16 %v2136
      %v2169 = vunpack.c.l.b16 %v2137
      %v2170 = vunpack.c.l.b16 %v2138
      %v2171 = vunpack.c.l.b16 %v2139
      %v2172 = vunpack.c.l.b16 %v2140
      %v2173 = vunpack.c.l.b16 %v2141
      %v2174 = vunpack.c.l.b16 %v2142
      %v2175 = vunpack.c.l.b16 %v2143
      %v2176 = vunpack.c.l.b16 %v2144
      %v2177 = vunpack.c.l.b16 %v2145
      %v2178 = vunpack.c.l.b16 %v2146
      %v2179 = vunpack.c.l.b16 %v2147
      %v2180 = vunpack.c.l.b16 %v2148
      %v2181 = vunpack.c.l.b16 %v2149
      %v2182 = vunpack.c.l.b16 %v2150
      %v2183 = vpack.c.b16 %v2168, %v2167
      %v2184 = vpack.c.b16 %v2170, %v2169
      %v2185 = vpack.c.b16 %v2172, %v2171
      %v2186 = vpack.c.b16 %v2174, %v2173
      %v2187 = vpack.c.b16 %v2176, %v2175
      %v2188 = vpack.c.b16 %v2178, %v2177
      %v2189 = vpack.c.b16 %v2180, %v2179
      %v2190 = vpack.c.b16 %v2182, %v2181
      %2199 = vmatpush.bf16.msra.mxu0 %v2190
      %2200 = vmatpush.bf16.msra.mxu0 %v2189
      %2201 = vmatpush.bf16.msra.mxu0 %v2188
      %2202 = vmatpush.bf16.msra.mxu0 %v2187
      %2203 = vmatpush.bf16.msra.mxu0 %v2186
      %2204 = vmatpush.bf16.msra.mxu0 %v2185
      %2205 = vmatpush.bf16.msra.mxu0 %v2184
      %2206 = vmatpush.bf16.msra.mxu0 %v2183
      %2207 = vmatmul.bf16.gmra.mxu0 %v2129
      %v2208 = vpop.f32.mrf.mxu0
      %v2209 = vadd.f32 0.0, %v2208
      %v2210 = vpop.f32.mrf.mxu0
      %v2211 = vadd.f32 0.0, %v2210
      %2212 = vmatmul.bf16.gmra.mxu0 %v2130
      %v2213 = vpop.f32.mrf.mxu0
      %v2214 = vadd.f32 0.0, %v2213
      %v2215 = vpop.f32.mrf.mxu0
      %v2216 = vadd.f32 0.0, %v2215
      %2217 = vmatmul.bf16.gmra.mxu0 %v2131
      %v2218 = vpop.f32.mrf.mxu0
      %v2219 = vadd.f32 0.0, %v2218
      %v2220 = vpop.f32.mrf.mxu0
      %v2221 = vadd.f32 0.0, %v2220
      %2222 = vmatmul.bf16.gmra.mxu0 %v2132
      %v2223 = vpop.f32.mrf.mxu0
      %v2224 = vadd.f32 0.0, %v2223
      %v2225 = vpop.f32.mrf.mxu0
      %v2226 = vadd.f32 0.0, %v2225
      %2227 = vmatmul.bf16.gmra.mxu0 %v2133
      %v2228 = vpop.f32.mrf.mxu0
      %v2229 = vadd.f32 0.0, %v2228
      %v2230 = vpop.f32.mrf.mxu0
      %2231 = vdwg.mxu0
      %v2232 = vadd.f32 %v2097, %v2209
      %v2233 = vadd.f32 %v2099, %v2211
      %v2234 = vadd.f32 %v2102, %v2214
      %v2235 = vadd.f32 %v2104, %v2216
      %v2236 = vadd.f32 %v2107, %v2219
      %v2237 = vadd.f32 %v2109, %v2221
      %v2238 = vadd.f32 %v2112, %v2224
      %v2239 = vadd.f32 %v2114, %v2226
      %v2240 = vadd.f32 %v2117, %v2229
      %v2241 = vld [vmem:[#allocation2 + $0x2] sm:$0xff]
      %v2242 = vld [vmem:[#allocation2 + $0xa] sm:$0xff]
      %v2243 = vld [vmem:[#allocation2 + $0x12] sm:$0xff]
      %v2244 = vld [vmem:[#allocation2 + $0x1a] sm:$0xff]
      %v2245 = vld [vmem:[#allocation2 + $0x22] sm:$0xff]
      %v2246 = vld [vmem:[#allocation2 + $0x2a] sm:$0xff]
      %v2247 = vld [vmem:[#allocation2 + $0x32] sm:$0xff]
      %v2248 = vld [vmem:[#allocation2 + $0x3a] sm:$0xff]
      %v2249 = vld [vmem:[#allocation2 + $0x42] sm:$0xff]
      %v2250 = vpack.c.bf16 %v2242, %v2241
      %v2251 = vpack.c.bf16 %v2244, %v2243
      %v2252 = vpack.c.bf16 %v2246, %v2245
      %v2253 = vpack.c.bf16 %v2248, %v2247
      %v2254 = vpack.c.bf16 %v2249, %v2249
      %s2255 = scalar_lea.vmem %s3, 896
      %v2256 = vld [vmem:[%s2255] sm:$0xf]
      %v2257 = vld [vmem:[%s2255 + $0x4] sm:$0xf]
      %v2258 = vld [vmem:[%s2255 + $0x8] sm:$0xf]
      %v2259 = vld [vmem:[%s2255 + $0xc] sm:$0xf]
      %v2260 = vld [vmem:[%s2255 + $0x10] sm:$0xf]
      %v2261 = vld [vmem:[%s2255 + $0x14] sm:$0xf]
      %v2262 = vld [vmem:[%s2255 + $0x18] sm:$0xf]
      %v2263 = vld [vmem:[%s2255 + $0x1c] sm:$0xf]
      %v2264 = vld [vmem:[%s2255 + $0x20] sm:$0xf]
      %v2265 = vld [vmem:[%s2255 + $0x24] sm:$0xf]
      %v2266 = vld [vmem:[%s2255 + $0x28] sm:$0xf]
      %v2267 = vld [vmem:[%s2255 + $0x2c] sm:$0xf]
      %v2268 = vld [vmem:[%s2255 + $0x30] sm:$0xf]
      %v2269 = vld [vmem:[%s2255 + $0x34] sm:$0xf]
      %v2270 = vld [vmem:[%s2255 + $0x38] sm:$0xf]
      %v2271 = vld [vmem:[%s2255 + $0x3c] sm:$0xf]
      %v2288 = vunpack.c.l.b16 %v2256
      %v2289 = vunpack.c.l.b16 %v2257
      %v2290 = vunpack.c.l.b16 %v2258
      %v2291 = vunpack.c.l.b16 %v2259
      %v2292 = vunpack.c.l.b16 %v2260
      %v2293 = vunpack.c.l.b16 %v2261
      %v2294 = vunpack.c.l.b16 %v2262
      %v2295 = vunpack.c.l.b16 %v2263
      %v2296 = vunpack.c.l.b16 %v2264
      %v2297 = vunpack.c.l.b16 %v2265
      %v2298 = vunpack.c.l.b16 %v2266
      %v2299 = vunpack.c.l.b16 %v2267
      %v2300 = vunpack.c.l.b16 %v2268
      %v2301 = vunpack.c.l.b16 %v2269
      %v2302 = vunpack.c.l.b16 %v2270
      %v2303 = vunpack.c.l.b16 %v2271
      %v2304 = vpack.c.b16 %v2289, %v2288
      %v2305 = vpack.c.b16 %v2291, %v2290
      %v2306 = vpack.c.b16 %v2293, %v2292
      %v2307 = vpack.c.b16 %v2295, %v2294
      %v2308 = vpack.c.b16 %v2297, %v2296
      %v2309 = vpack.c.b16 %v2299, %v2298
      %v2310 = vpack.c.b16 %v2301, %v2300
      %v2311 = vpack.c.b16 %v2303, %v2302
      %2320 = vmatpush.bf16.msra.mxu0 %v2311
      %2321 = vmatpush.bf16.msra.mxu0 %v2310
      %2322 = vmatpush.bf16.msra.mxu0 %v2309
      %2323 = vmatpush.bf16.msra.mxu0 %v2308
      %2324 = vmatpush.bf16.msra.mxu0 %v2307
      %2325 = vmatpush.bf16.msra.mxu0 %v2306
      %2326 = vmatpush.bf16.msra.mxu0 %v2305
      %2327 = vmatpush.bf16.msra.mxu0 %v2304
      %2328 = vmatmul.bf16.gmra.mxu0 %v2250
      %v2329 = vpop.f32.mrf.mxu0
      %v2330 = vadd.f32 0.0, %v2329
      %v2331 = vpop.f32.mrf.mxu0
      %v2332 = vadd.f32 0.0, %v2331
      %2333 = vmatmul.bf16.gmra.mxu0 %v2251
      %v2334 = vpop.f32.mrf.mxu0
      %v2335 = vadd.f32 0.0, %v2334
      %v2336 = vpop.f32.mrf.mxu0
      %v2337 = vadd.f32 0.0, %v2336
      %2338 = vmatmul.bf16.gmra.mxu0 %v2252
      %v2339 = vpop.f32.mrf.mxu0
      %v2340 = vadd.f32 0.0, %v2339
      %v2341 = vpop.f32.mrf.mxu0
      %v2342 = vadd.f32 0.0, %v2341
      %2343 = vmatmul.bf16.gmra.mxu0 %v2253
      %v2344 = vpop.f32.mrf.mxu0
      %v2345 = vadd.f32 0.0, %v2344
      %v2346 = vpop.f32.mrf.mxu0
      %v2347 = vadd.f32 0.0, %v2346
      %2348 = vmatmul.bf16.gmra.mxu0 %v2254
      %v2349 = vpop.f32.mrf.mxu0
      %v2350 = vadd.f32 0.0, %v2349
      %v2351 = vpop.f32.mrf.mxu0
      %2352 = vdwg.mxu0
      %v2353 = vadd.f32 %v2232, %v2330
      %v2354 = vadd.f32 %v2233, %v2332
      %v2355 = vadd.f32 %v2234, %v2335
      %v2356 = vadd.f32 %v2235, %v2337
      %v2357 = vadd.f32 %v2236, %v2340
      %v2358 = vadd.f32 %v2237, %v2342
      %v2359 = vadd.f32 %v2238, %v2345
      %v2360 = vadd.f32 %v2239, %v2347
      %v2361 = vadd.f32 %v2240, %v2350
      %v2362 = vmax.f32 %v2353, 0.0
      %v2363 = vmax.f32 %v2354, 0.0
      %v2364 = vmax.f32 %v2355, 0.0
      %v2365 = vmax.f32 %v2356, 0.0
      %v2366 = vmax.f32 %v2357, 0.0
      %v2367 = vmax.f32 %v2358, 0.0
      %v2368 = vmax.f32 %v2359, 0.0
      %v2369 = vmax.f32 %v2360, 0.0
      %v2370 = vmax.f32 %v2361, 0.0
      %v2371 = vadd.f32 %v1976, %v2362
      %v2372 = vadd.f32 %v1977, %v2363
      %v2373 = vadd.f32 %v1978, %v2364
      %v2374 = vadd.f32 %v1979, %v2365
      %v2375 = vadd.f32 %v1980, %v2366
      %v2376 = vadd.f32 %v1981, %v2367
      %v2377 = vadd.f32 %v1982, %v2368
      %v2378 = vadd.f32 %v1983, %v2369
      %v2379 = vadd.f32 %v1984, %v2370
      %v2380 = vmul.f32 %v2371, %v308
      %v2381 = vmul.f32 %v2372, %v313
      %v2382 = vmul.f32 %v2373, %v318
      %v2383 = vmul.f32 %v2374, %v323
      %v2384 = vmul.f32 %v2375, %v328
      %v2385 = vmul.f32 %v2376, %v333
      %v2386 = vmul.f32 %v2377, %v338
      %v2387 = vmul.f32 %v2378, %v343
      %v2388 = vmul.f32 %v2379, %v348
      %2389 = vst [vmem:[#allocation2 + $0x1] sm:$0xff] %v2380
      %2390 = vst [vmem:[#allocation2 + $0x9] sm:$0xff] %v2381
      %2391 = vst [vmem:[#allocation2 + $0x11] sm:$0xff] %v2382
      %2392 = vst [vmem:[#allocation2 + $0x19] sm:$0xff] %v2383
      %2393 = vst [vmem:[#allocation2 + $0x21] sm:$0xff] %v2384
      %2394 = vst [vmem:[#allocation2 + $0x29] sm:$0xff] %v2385
      %2395 = vst [vmem:[#allocation2 + $0x31] sm:$0xff] %v2386
      %2396 = vst [vmem:[#allocation2 + $0x39] sm:$0xff] %v2387
      %2397 = vst [vmem:[#allocation2 + $0x41] sm:$0xff] %v2388
      %v2398 = vld [vmem:[#allocation2] sm:$0xff]
      %v2399 = vld [vmem:[#allocation2 + $0x8] sm:$0xff]
      %v2400 = vld [vmem:[#allocation2 + $0x10] sm:$0xff]
      %v2401 = vld [vmem:[#allocation2 + $0x18] sm:$0xff]
      %v2402 = vld [vmem:[#allocation2 + $0x20] sm:$0xff]
      %v2403 = vld [vmem:[#allocation2 + $0x28] sm:$0xff]
      %v2404 = vld [vmem:[#allocation2 + $0x30] sm:$0xff]
      %v2405 = vld [vmem:[#allocation2 + $0x38] sm:$0xff]
      %v2406 = vld [vmem:[#allocation2 + $0x40] sm:$0xff]
      %v2407 = vpack.c.bf16 %v2399, %v2398
      %v2408 = vpack.c.bf16 %v2401, %v2400
      %v2409 = vpack.c.bf16 %v2403, %v2402
      %v2410 = vpack.c.bf16 %v2405, %v2404
      %v2411 = vpack.c.bf16 %v2406, %v2406
      %s2412 = scalar_lea.vmem %s3, 960
      %v2413 = vld [vmem:[%s2412] sm:$0xf]
      %v2414 = vld [vmem:[%s2412 + $0x4] sm:$0xf]
      %v2415 = vld [vmem:[%s2412 + $0x8] sm:$0xf]
      %v2416 = vld [vmem:[%s2412 + $0xc] sm:$0xf]
      %v2417 = vld [vmem:[%s2412 + $0x10] sm:$0xf]
      %v2418 = vld [vmem:[%s2412 + $0x14] sm:$0xf]
      %v2419 = vld [vmem:[%s2412 + $0x18] sm:$0xf]
      %v2420 = vld [vmem:[%s2412 + $0x1c] sm:$0xf]
      %v2421 = vld [vmem:[%s2412 + $0x20] sm:$0xf]
      %v2422 = vld [vmem:[%s2412 + $0x24] sm:$0xf]
      %v2423 = vld [vmem:[%s2412 + $0x28] sm:$0xf]
      %v2424 = vld [vmem:[%s2412 + $0x2c] sm:$0xf]
      %v2425 = vld [vmem:[%s2412 + $0x30] sm:$0xf]
      %v2426 = vld [vmem:[%s2412 + $0x34] sm:$0xf]
      %v2427 = vld [vmem:[%s2412 + $0x38] sm:$0xf]
      %v2428 = vld [vmem:[%s2412 + $0x3c] sm:$0xf]
      %s2429 = scalar_lea.vmem %s4, 5
      %v2430 = vld [vmem:[%s2429] sm:$0x1]
      %v2432 = vperm.slane %v2430, 0
      %v2450 = vunpack.c.l.b16 %v2413
      %v2451 = vunpack.c.l.b16 %v2414
      %v2452 = vunpack.c.l.b16 %v2415
      %v2453 = vunpack.c.l.b16 %v2416
      %v2454 = vunpack.c.l.b16 %v2417
      %v2455 = vunpack.c.l.b16 %v2418
      %v2456 = vunpack.c.l.b16 %v2419
      %v2457 = vunpack.c.l.b16 %v2420
      %v2458 = vunpack.c.l.b16 %v2421
      %v2459 = vunpack.c.l.b16 %v2422
      %v2460 = vunpack.c.l.b16 %v2423
      %v2461 = vunpack.c.l.b16 %v2424
      %v2462 = vunpack.c.l.b16 %v2425
      %v2463 = vunpack.c.l.b16 %v2426
      %v2464 = vunpack.c.l.b16 %v2427
      %v2465 = vunpack.c.l.b16 %v2428
      %v2466 = vpack.c.b16 %v2451, %v2450
      %v2467 = vpack.c.b16 %v2453, %v2452
      %v2468 = vpack.c.b16 %v2455, %v2454
      %v2469 = vpack.c.b16 %v2457, %v2456
      %v2470 = vpack.c.b16 %v2459, %v2458
      %v2471 = vpack.c.b16 %v2461, %v2460
      %v2472 = vpack.c.b16 %v2463, %v2462
      %v2473 = vpack.c.b16 %v2465, %v2464
      %2482 = vmatpush.bf16.msra.mxu0 %v2473
      %2483 = vmatpush.bf16.msra.mxu0 %v2472
      %2484 = vmatpush.bf16.msra.mxu0 %v2471
      %2485 = vmatpush.bf16.msra.mxu0 %v2470
      %2486 = vmatpush.bf16.msra.mxu0 %v2469
      %2487 = vmatpush.bf16.msra.mxu0 %v2468
      %2488 = vmatpush.bf16.msra.mxu0 %v2467
      %2489 = vmatpush.bf16.msra.mxu0 %v2466
      %2490 = vmatmul.bf16.gmra.mxu0 %v2407
      %v2491 = vpop.f32.mrf.mxu0
      %v2492 = vadd.f32 %v2432, %v2491
      %v2493 = vpop.f32.mrf.mxu0
      %v2494 = vadd.f32 %v2432, %v2493
      %2495 = vmatmul.bf16.gmra.mxu0 %v2408
      %v2496 = vpop.f32.mrf.mxu0
      %v2497 = vadd.f32 %v2432, %v2496
      %v2498 = vpop.f32.mrf.mxu0
      %v2499 = vadd.f32 %v2432, %v2498
      %2500 = vmatmul.bf16.gmra.mxu0 %v2409
      %v2501 = vpop.f32.mrf.mxu0
      %v2502 = vadd.f32 %v2432, %v2501
      %v2503 = vpop.f32.mrf.mxu0
      %v2504 = vadd.f32 %v2432, %v2503
      %2505 = vmatmul.bf16.gmra.mxu0 %v2410
      %v2506 = vpop.f32.mrf.mxu0
      %v2507 = vadd.f32 %v2432, %v2506
      %v2508 = vpop.f32.mrf.mxu0
      %v2509 = vadd.f32 %v2432, %v2508
      %2510 = vmatmul.bf16.gmra.mxu0 %v2411
      %v2511 = vpop.f32.mrf.mxu0
      %v2512 = vadd.f32 %v2432, %v2511
      %v2513 = vpop.f32.mrf.mxu0
      %2514 = vdwg.mxu0
      %v2515 = vld [vmem:[#allocation2 + $0x1] sm:$0xff]
      %v2516 = vld [vmem:[#allocation2 + $0x9] sm:$0xff]
      %v2517 = vld [vmem:[#allocation2 + $0x11] sm:$0xff]
      %v2518 = vld [vmem:[#allocation2 + $0x19] sm:$0xff]
      %v2519 = vld [vmem:[#allocation2 + $0x21] sm:$0xff]
      %v2520 = vld [vmem:[#allocation2 + $0x29] sm:$0xff]
      %v2521 = vld [vmem:[#allocation2 + $0x31] sm:$0xff]
      %v2522 = vld [vmem:[#allocation2 + $0x39] sm:$0xff]
      %v2523 = vld [vmem:[#allocation2 + $0x41] sm:$0xff]
      %v2524 = vpack.c.bf16 %v2516, %v2515
      %v2525 = vpack.c.bf16 %v2518, %v2517
      %v2526 = vpack.c.bf16 %v2520, %v2519
      %v2527 = vpack.c.bf16 %v2522, %v2521
      %v2528 = vpack.c.bf16 %v2523, %v2523
      %s2529 = scalar_lea.vmem %s3, 1024
      %v2530 = vld [vmem:[%s2529] sm:$0xf]
      %v2531 = vld [vmem:[%s2529 + $0x4] sm:$0xf]
      %v2532 = vld [vmem:[%s2529 + $0x8] sm:$0xf]
      %v2533 = vld [vmem:[%s2529 + $0xc] sm:$0xf]
      %v2534 = vld [vmem:[%s2529 + $0x10] sm:$0xf]
      %v2535 = vld [vmem:[%s2529 + $0x14] sm:$0xf]
      %v2536 = vld [vmem:[%s2529 + $0x18] sm:$0xf]
      %v2537 = vld [vmem:[%s2529 + $0x1c] sm:$0xf]
      %v2538 = vld [vmem:[%s2529 + $0x20] sm:$0xf]
      %v2539 = vld [vmem:[%s2529 + $0x24] sm:$0xf]
      %v2540 = vld [vmem:[%s2529 + $0x28] sm:$0xf]
      %v2541 = vld [vmem:[%s2529 + $0x2c] sm:$0xf]
      %v2542 = vld [vmem:[%s2529 + $0x30] sm:$0xf]
      %v2543 = vld [vmem:[%s2529 + $0x34] sm:$0xf]
      %v2544 = vld [vmem:[%s2529 + $0x38] sm:$0xf]
      %v2545 = vld [vmem:[%s2529 + $0x3c] sm:$0xf]
      %v2562 = vunpack.c.l.b16 %v2530
      %v2563 = vunpack.c.l.b16 %v2531
      %v2564 = vunpack.c.l.b16 %v2532
      %v2565 = vunpack.c.l.b16 %v2533
      %v2566 = vunpack.c.l.b16 %v2534
      %v2567 = vunpack.c.l.b16 %v2535
      %v2568 = vunpack.c.l.b16 %v2536
      %v2569 = vunpack.c.l.b16 %v2537
      %v2570 = vunpack.c.l.b16 %v2538
      %v2571 = vunpack.c.l.b16 %v2539
      %v2572 = vunpack.c.l.b16 %v2540
      %v2573 = vunpack.c.l.b16 %v2541
      %v2574 = vunpack.c.l.b16 %v2542
      %v2575 = vunpack.c.l.b16 %v2543
      %v2576 = vunpack.c.l.b16 %v2544
      %v2577 = vunpack.c.l.b16 %v2545
      %v2578 = vpack.c.b16 %v2563, %v2562
      %v2579 = vpack.c.b16 %v2565, %v2564
      %v2580 = vpack.c.b16 %v2567, %v2566
      %v2581 = vpack.c.b16 %v2569, %v2568
      %v2582 = vpack.c.b16 %v2571, %v2570
      %v2583 = vpack.c.b16 %v2573, %v2572
      %v2584 = vpack.c.b16 %v2575, %v2574
      %v2585 = vpack.c.b16 %v2577, %v2576
      %2594 = vmatpush.bf16.msra.mxu0 %v2585
      %2595 = vmatpush.bf16.msra.mxu0 %v2584
      %2596 = vmatpush.bf16.msra.mxu0 %v2583
      %2597 = vmatpush.bf16.msra.mxu0 %v2582
      %2598 = vmatpush.bf16.msra.mxu0 %v2581
      %2599 = vmatpush.bf16.msra.mxu0 %v2580
      %2600 = vmatpush.bf16.msra.mxu0 %v2579
      %2601 = vmatpush.bf16.msra.mxu0 %v2578
      %2602 = vmatmul.bf16.gmra.mxu0 %v2524
      %v2603 = vpop.f32.mrf.mxu0
      %v2604 = vadd.f32 0.0, %v2603
      %v2605 = vpop.f32.mrf.mxu0
      %v2606 = vadd.f32 0.0, %v2605
      %2607 = vmatmul.bf16.gmra.mxu0 %v2525
      %v2608 = vpop.f32.mrf.mxu0
      %v2609 = vadd.f32 0.0, %v2608
      %v2610 = vpop.f32.mrf.mxu0
      %v2611 = vadd.f32 0.0, %v2610
      %2612 = vmatmul.bf16.gmra.mxu0 %v2526
      %v2613 = vpop.f32.mrf.mxu0
      %v2614 = vadd.f32 0.0, %v2613
      %v2615 = vpop.f32.mrf.mxu0
      %v2616 = vadd.f32 0.0, %v2615
      %2617 = vmatmul.bf16.gmra.mxu0 %v2527
      %v2618 = vpop.f32.mrf.mxu0
      %v2619 = vadd.f32 0.0, %v2618
      %v2620 = vpop.f32.mrf.mxu0
      %v2621 = vadd.f32 0.0, %v2620
      %2622 = vmatmul.bf16.gmra.mxu0 %v2528
      %v2623 = vpop.f32.mrf.mxu0
      %v2624 = vadd.f32 0.0, %v2623
      %v2625 = vpop.f32.mrf.mxu0
      %2626 = vdwg.mxu0
      %v2627 = vadd.f32 %v2492, %v2604
      %v2628 = vadd.f32 %v2494, %v2606
      %v2629 = vadd.f32 %v2497, %v2609
      %v2630 = vadd.f32 %v2499, %v2611
      %v2631 = vadd.f32 %v2502, %v2614
      %v2632 = vadd.f32 %v2504, %v2616
      %v2633 = vadd.f32 %v2507, %v2619
      %v2634 = vadd.f32 %v2509, %v2621
      %v2635 = vadd.f32 %v2512, %v2624
      %v2636 = vld [vmem:[#allocation2 + $0x2] sm:$0xff]
      %v2637 = vld [vmem:[#allocation2 + $0xa] sm:$0xff]
      %v2638 = vld [vmem:[#allocation2 + $0x12] sm:$0xff]
      %v2639 = vld [vmem:[#allocation2 + $0x1a] sm:$0xff]
      %v2640 = vld [vmem:[#allocation2 + $0x22] sm:$0xff]
      %v2641 = vld [vmem:[#allocation2 + $0x2a] sm:$0xff]
      %v2642 = vld [vmem:[#allocation2 + $0x32] sm:$0xff]
      %v2643 = vld [vmem:[#allocation2 + $0x3a] sm:$0xff]
      %v2644 = vld [vmem:[#allocation2 + $0x42] sm:$0xff]
      %v2645 = vpack.c.bf16 %v2637, %v2636
      %v2646 = vpack.c.bf16 %v2639, %v2638
      %v2647 = vpack.c.bf16 %v2641, %v2640
      %v2648 = vpack.c.bf16 %v2643, %v2642
      %v2649 = vpack.c.bf16 %v2644, %v2644
      %s2650 = scalar_lea.vmem %s3, 1088
      %v2651 = vld [vmem:[%s2650] sm:$0xf]
      %v2652 = vld [vmem:[%s2650 + $0x4] sm:$0xf]
      %v2653 = vld [vmem:[%s2650 + $0x8] sm:$0xf]
      %v2654 = vld [vmem:[%s2650 + $0xc] sm:$0xf]
      %v2655 = vld [vmem:[%s2650 + $0x10] sm:$0xf]
      %v2656 = vld [vmem:[%s2650 + $0x14] sm:$0xf]
      %v2657 = vld [vmem:[%s2650 + $0x18] sm:$0xf]
      %v2658 = vld [vmem:[%s2650 + $0x1c] sm:$0xf]
      %v2659 = vld [vmem:[%s2650 + $0x20] sm:$0xf]
      %v2660 = vld [vmem:[%s2650 + $0x24] sm:$0xf]
      %v2661 = vld [vmem:[%s2650 + $0x28] sm:$0xf]
      %v2662 = vld [vmem:[%s2650 + $0x2c] sm:$0xf]
      %v2663 = vld [vmem:[%s2650 + $0x30] sm:$0xf]
      %v2664 = vld [vmem:[%s2650 + $0x34] sm:$0xf]
      %v2665 = vld [vmem:[%s2650 + $0x38] sm:$0xf]
      %v2666 = vld [vmem:[%s2650 + $0x3c] sm:$0xf]
      %v2683 = vunpack.c.l.b16 %v2651
      %v2684 = vunpack.c.l.b16 %v2652
      %v2685 = vunpack.c.l.b16 %v2653
      %v2686 = vunpack.c.l.b16 %v2654
      %v2687 = vunpack.c.l.b16 %v2655
      %v2688 = vunpack.c.l.b16 %v2656
      %v2689 = vunpack.c.l.b16 %v2657
      %v2690 = vunpack.c.l.b16 %v2658
      %v2691 = vunpack.c.l.b16 %v2659
      %v2692 = vunpack.c.l.b16 %v2660
      %v2693 = vunpack.c.l.b16 %v2661
      %v2694 = vunpack.c.l.b16 %v2662
      %v2695 = vunpack.c.l.b16 %v2663
      %v2696 = vunpack.c.l.b16 %v2664
      %v2697 = vunpack.c.l.b16 %v2665
      %v2698 = vunpack.c.l.b16 %v2666
      %v2699 = vpack.c.b16 %v2684, %v2683
      %v2700 = vpack.c.b16 %v2686, %v2685
      %v2701 = vpack.c.b16 %v2688, %v2687
      %v2702 = vpack.c.b16 %v2690, %v2689
      %v2703 = vpack.c.b16 %v2692, %v2691
      %v2704 = vpack.c.b16 %v2694, %v2693
      %v2705 = vpack.c.b16 %v2696, %v2695
      %v2706 = vpack.c.b16 %v2698, %v2697
      %2715 = vmatpush.bf16.msra.mxu0 %v2706
      %2716 = vmatpush.bf16.msra.mxu0 %v2705
      %2717 = vmatpush.bf16.msra.mxu0 %v2704
      %2718 = vmatpush.bf16.msra.mxu0 %v2703
      %2719 = vmatpush.bf16.msra.mxu0 %v2702
      %2720 = vmatpush.bf16.msra.mxu0 %v2701
      %2721 = vmatpush.bf16.msra.mxu0 %v2700
      %2722 = vmatpush.bf16.msra.mxu0 %v2699
      %2723 = vmatmul.bf16.gmra.mxu0 %v2645
      %v2724 = vpop.f32.mrf.mxu0
      %v2725 = vadd.f32 0.0, %v2724
      %v2726 = vpop.f32.mrf.mxu0
      %v2727 = vadd.f32 0.0, %v2726
      %2728 = vmatmul.bf16.gmra.mxu0 %v2646
      %v2729 = vpop.f32.mrf.mxu0
      %v2730 = vadd.f32 0.0, %v2729
      %v2731 = vpop.f32.mrf.mxu0
      %v2732 = vadd.f32 0.0, %v2731
      %2733 = vmatmul.bf16.gmra.mxu0 %v2647
      %v2734 = vpop.f32.mrf.mxu0
      %v2735 = vadd.f32 0.0, %v2734
      %v2736 = vpop.f32.mrf.mxu0
      %v2737 = vadd.f32 0.0, %v2736
      %2738 = vmatmul.bf16.gmra.mxu0 %v2648
      %v2739 = vpop.f32.mrf.mxu0
      %v2740 = vadd.f32 0.0, %v2739
      %v2741 = vpop.f32.mrf.mxu0
      %v2742 = vadd.f32 0.0, %v2741
      %2743 = vmatmul.bf16.gmra.mxu0 %v2649
      %v2744 = vpop.f32.mrf.mxu0
      %v2745 = vadd.f32 0.0, %v2744
      %v2746 = vpop.f32.mrf.mxu0
      %2747 = vdwg.mxu0
      %v2748 = vadd.f32 %v2627, %v2725
      %v2749 = vadd.f32 %v2628, %v2727
      %v2750 = vadd.f32 %v2629, %v2730
      %v2751 = vadd.f32 %v2630, %v2732
      %v2752 = vadd.f32 %v2631, %v2735
      %v2753 = vadd.f32 %v2632, %v2737
      %v2754 = vadd.f32 %v2633, %v2740
      %v2755 = vadd.f32 %v2634, %v2742
      %v2756 = vadd.f32 %v2635, %v2745
      %2757 = vst [vmem:[%s284] sm:$0xff] %v2748
      %2758 = vst [vmem:[%s284 + $0x8] sm:$0xff] %v2749
      %2759 = vst [vmem:[%s284 + $0x10] sm:$0xff] %v2750
      %2760 = vst [vmem:[%s284 + $0x18] sm:$0xff] %v2751
      %2761 = vst [vmem:[%s284 + $0x20] sm:$0xff] %v2752
      %2762 = vst [vmem:[%s284 + $0x28] sm:$0xff] %v2753
      %2763 = vst [vmem:[%s284 + $0x30] sm:$0xff] %v2754
      %2764 = vst [vmem:[%s284 + $0x38] sm:$0xff] %v2755
      %2765 = vst [vmem:[%s284 + $0x40] sm:$0xff] %v2756
      %p2766 = scmp.lt.s32.totalorder %s18, 1
      %s2767 = scalar_select %p2766, %s18, 1
      %s2768 = smul.addr %s2767, 9
      %s2769 = smul.addr %s2768, 8
      %s2770 = scalar_lea.vmem %s5, %s2769
      %p2771 = scmp.lt.s32.totalorder %s18, 1
      %s2772 = scalar_select %p2771, %s18, 1
      %s2773 = smul.addr %s2772, 9
      %s2774 = smul.addr %s2773, 8
      %s2775 = scalar_lea.vmem %s6, %s2774
      // Predicated region
      $region41: #{_lambda_.1} parent=39 // pred_check
        %p2776 = pneg %p151
      $region42: #{_lambda_.1} parent=39 // pred_check_branch
        %2778 = sbr.rel (%p2776) target = $region44
      $region43: #{_lambda_.1} parent=39 // pred_region
        _
      $region44: #{_lambda_.1} parent=39 // pred_fallthru
        _
      // Predicated region
      $region45: #{_lambda_.1} parent=39 // pred_check
        %p2779 = pneg %p177
      $region46: #{_lambda_.1} parent=39 // pred_check_branch
        %2781 = sbr.rel (%p2779) target = $region48
      $region47: #{_lambda_.1} parent=39 // pred_region
        _
      $region48: #{_lambda_.1} parent=39 // pred_fallthru
        _
    $region40: #{_lambda_.1} parent=5 // pred_fallthru
      _
    %p2782 = scmp.le.s32.totalorder 2, %s13
    // Predicated region
    $region49: #{_lambda_.1} parent=5 // pred_check
      %p2783 = pneg %p2782
    $region50: #{_lambda_.1} parent=5 // pred_check_branch
      %2785 = sbr.rel (%p2783) target = $region52
    $region51: #{_lambda_.1} parent=5 // pred_region
      %s2786 = ssub.s32 %s13, 2
      // Predicated region
      $region53: #{_lambda_.1} parent=51 // pred_check
        %p2787 = pneg %p157
      $region54: #{_lambda_.1} parent=51 // pred_check_branch
        %2789 = sbr.rel (%p2787) target = $region56
      $region55: #{_lambda_.1} parent=51 // pred_region
        %p2790 = scmp.lt.s32.totalorder %s19, 1
        %s2791 = scalar_select %p2790, %s19, 1
        %s2792 = smul.addr %s2791, 9
        %s2793 = smul.addr %s2792, 8
        %s2794 = scalar_lea.vmem %s5, %s2793
      $region56: #{_lambda_.1} parent=51 // pred_fallthru
        _
      // Predicated region
      $region57: #{_lambda_.1} parent=51 // pred_check
        %p2795 = pneg %p183
      $region58: #{_lambda_.1} parent=51 // pred_check_branch
        %2797 = sbr.rel (%p2795) target = $region60
      $region59: #{_lambda_.1} parent=51 // pred_region
        %p2798 = scmp.lt.s32.totalorder %s19, 1
        %s2799 = scalar_select %p2798, %s19, 1
        %s2800 = smul.addr %s2799, 9
        %s2801 = smul.addr %s2800, 8
        %s2802 = scalar_lea.vmem %s6, %s2801
      $region60: #{_lambda_.1} parent=51 // pred_fallthru
        _
    $region52: #{_lambda_.1} parent=5 // pred_fallthru
      _
  $region6: #{_lambda_.1} parent=0 // loop_footer
    %s17 = sadd.s32 1, %s13
  $region7: #{_lambda_.1} parent=0 // loop_footer_branch
    %12 = sbr.rel target = $region3
  $region8: #{_lambda_.1} parent=0 // loop_exit
    _

</llo_original>
